<compile_context>
chip_gen: v6e
topology: v6e:2x2x1
jax: 0.10.0
libtpu: 0.0.40
codegen_flags: <defaults>
</compile_context>

<pallas_src>
import functools

import jax
import jax.numpy as jnp
from jax.experimental import pallas as pl
from jax.experimental.pallas import tpu as pltpu


def _add_relu_conv1x1_kernel(a_ref, b_ref, w_ref, o_ref, *, mxu_dtype):
    # a_ref, b_ref: (1, C_in, tm); w_ref: (C_out, C_in); o_ref: (1, C_out, tm)
    # Every output column depends only on its own input column, so garbage in
    # the padded tail columns of the last tile is harmless (masked on store).
    x = jnp.maximum(a_ref[0] + b_ref[0], 0.0)              # (C_in, tm)
    xm = x.astype(mxu_dtype)
    wm = w_ref[...].astype(mxu_dtype)
    o_ref[0] = jnp.dot(
        wm, xm, preferred_element_type=jnp.float32
    ).astype(o_ref.dtype)                                   # (C_out, tm)


def add_relu_conv1x1(x26, x18, weight, *, tm=1664, mxu_dtype=jnp.bfloat16,
                     core_parallel=None):
    """out = Conv1x1(relu(x26 + x18)).

    x26, x18: NCHW (float32 or bfloat16); weight: (C_out, C_in, 1, 1), no bias.
    mxu_dtype: dtype of the matmul operands (accumulation is always f32).
               Use jnp.float32 for exact fp32 semantics.
    core_parallel: shard the M grid axis across TensorCores (default: only v7x).
    """
    n, c_in, h, w = x26.shape
    c_out = weight.shape[0]
    m = h * w

    # Free, contiguous reshapes (no HBM-traffic transposes).
    a = x26.reshape(n, c_in, m)
    b = x18.reshape(n, c_in, m)
    w2 = weight.reshape(c_out, c_in)

    # Lane (last) dim of every block must be a multiple of 128; don't exceed
    # the 128-rounded M. With M=3136 and tm=1664 we get 2 balanced steps
    # (1664 / 1472 valid columns) — no degenerate 64-column tail tile.
    m_pad = pl.cdiv(m, 128) * 128
    tm = max(128, (min(tm, m_pad) // 128) * 128)
    grid = (n, pl.cdiv(m, tm))

    in_bytes = jnp.dtype(x26.dtype).itemsize
    out_bytes = jnp.dtype(x26.dtype).itemsize
    w_bytes = jnp.dtype(weight.dtype).itemsize
    cost = pl.CostEstimate(
        flops=2 * n * m * c_in * c_out,
        transcendentals=0,
        bytes_accessed=(2 * n * c_in * m * in_bytes
                        + n * c_out * m * out_bytes
                        + c_in * c_out * w_bytes),
    )

    kernel = functools.partial(_add_relu_conv1x1_kernel, mxu_dtype=mxu_dtype)

    if core_parallel is None:
        # Only v7x has 2 TensorCores per chip; elsewhere keep plain "parallel".
        core_parallel = "v7" in jax.devices()[0].device_kind.lower()

    def build(dim_semantics):
        return pl.pallas_call(
            kernel,
            out_shape=jax.ShapeDtypeStruct((n, c_out, m), x26.dtype),
            grid_spec=pltpu.PrefetchScalarGridSpec(
                num_scalar_prefetch=0,
                grid=grid,
                in_specs=[
                    pl.BlockSpec((1, c_in, tm), lambda bi, mi: (bi, 0, mi)),
                    pl.BlockSpec((1, c_in, tm), lambda bi, mi: (bi, 0, mi)),
                    pl.BlockSpec((c_out, c_in), lambda bi, mi: (0, 0)),
                ],
                out_specs=pl.BlockSpec((1, c_out, tm), lambda bi, mi: (bi, 0, mi)),
            ),
            compiler_params=pltpu.CompilerParams(
                dimension_semantics=dim_semantics,
            ),
            cost_estimate=cost,
        )

    if core_parallel:
        try:
            out = build((pltpu.PARALLEL, pltpu.CORE_PARALLEL))(a, b, w2)
        except Exception:
            # Fall back to single-core semantics if CORE_PARALLEL is rejected.
            out = build(("parallel", "parallel"))(a, b, w2)
    else:
        out = build(("parallel", "parallel"))(a, b, w2)

    return out.reshape(n, c_out, h, w)


if __name__ == "__main__":
    key = jax.random.PRNGKey(0)
    k1, k2, k3 = jax.random.split(key, 3)

    # Shapes implied by the module's forward: [1, 256, 56, 56], conv 256->64.
    N, C_IN, H, W = 1, 256, 56, 56
    C_OUT = 64

    x26 = jax.random.normal(k1, (N, C_IN, H, W), dtype=jnp.float32)
    x18 = jax.random.normal(k2, (N, C_IN, H, W), dtype=jnp.float32)
    # Deterministic Conv2d weight init (kaiming-uniform-like bound), bias=False.
    bound = 1.0 / jnp.sqrt(jnp.float32(C_IN))
    weight = jax.random.uniform(
        k3, (C_OUT, C_IN, 1, 1), dtype=jnp.float32, minval=-bound, maxval=bound
    )

    # Plain-JAX fp32 reference of the same math.
    ref = jnp.einsum(
        "nchw,oc->nohw", jnp.maximum(x26 + x18, 0.0), weight[:, :, 0, 0]
    )

    # 1) Default config: f32 I/O, bf16 MXU operands, f32 accumulation.
    y = jax.block_until_ready(add_relu_conv1x1(x26, x18, weight))
    assert y.shape == (N, C_OUT, H, W)
    assert jnp.allclose(y, ref, atol=2e-2, rtol=2e-2)

    # 2) Exact-precision variant (f32 MXU operands) — matches the fp32 module.
    y32 = jax.block_until_ready(
        add_relu_conv1x1(x26, x18, weight, mxu_dtype=jnp.float32)
    )
    assert jnp.allclose(y32, ref, atol=1e-4, rtol=1e-4)

    # 3) Bandwidth-optimal variant: bf16 I/O halves HBM traffic (use when the
    #    surrounding graph can supply/consume bf16 activations).
    y_bf16 = jax.block_until_ready(
        add_relu_conv1x1(
            x26.astype(jnp.bfloat16),
            x18.astype(jnp.bfloat16),
            weight.astype(jnp.bfloat16),
        )
    )
    assert y_bf16.dtype == jnp.bfloat16
    assert jnp.allclose(y_bf16.astype(jnp.float32), ref, atol=5e-2, rtol=5e-2)

    print("KERNEL_OK")
</pallas_src>

<mosaic_0001>
module attributes {stable_mosaic.version = 11 : i64} {
  func.func @_add_relu_conv1x1_kernel(%arg0: i32, %arg1: i32, %arg2: memref<1x256x1664xf32, #tpu.memory_space<vmem>>, %arg3: memref<1x256x1664xf32, #tpu.memory_space<vmem>>, %arg4: memref<64x256xf32, #tpu.memory_space<vmem>>, %arg5: memref<1x64x1664xf32, #tpu.memory_space<vmem>>) attributes {dimension_semantics = [#tpu.dimension_semantics<parallel>, #tpu.dimension_semantics<parallel>], iteration_bounds = array<i64: 1, 2>, scalar_prefetch = 0 : i64, scratch_operands = 0 : i64, tpu.core_type = #tpu.core_type<tc>, window_params = [{transform_indices = @transform_0, window_bounds = array<i64: 1, 256, 1664>}, {transform_indices = @transform_1, window_bounds = array<i64: 1, 256, 1664>}, {pipeline_mode = #tpu.pipeline_mode<synchronous>, transform_indices = @transform_2, window_bounds = array<i64: 64, 256>}, {transform_indices = @transform_3, window_bounds = array<i64: 1, 64, 1664>}]} {
    %c0 = arith.constant 0 : index
    %c0_0 = arith.constant 0 : index
    %c0_1 = arith.constant 0 : index
    %0 = vector.load %arg2[%c0, %c0_0, %c0_1] : memref<1x256x1664xf32, #tpu.memory_space<vmem>>, vector<1x256x1664xf32>
    %1 = vector.shape_cast %0 : vector<1x256x1664xf32> to vector<256x1664xf32>
    %c0_2 = arith.constant 0 : index
    %c0_3 = arith.constant 0 : index
    %c0_4 = arith.constant 0 : index
    %2 = vector.load %arg3[%c0_2, %c0_3, %c0_4] : memref<1x256x1664xf32, #tpu.memory_space<vmem>>, vector<1x256x1664xf32>
    %3 = vector.shape_cast %2 : vector<1x256x1664xf32> to vector<256x1664xf32>
    %4 = arith.addf %1, %3 : vector<256x1664xf32>
    %cst = arith.constant 0.000000e+00 : f32
    %5 = vector.broadcast %cst : f32 to vector<256x1664xf32>
    %6 = arith.maximumf %4, %5 : vector<256x1664xf32>
    %7 = arith.truncf %6 : vector<256x1664xf32> to vector<256x1664xbf16>
    %c0_5 = arith.constant 0 : index
    %c0_6 = arith.constant 0 : index
    %8 = vector.load %arg4[%c0_5, %c0_6] : memref<64x256xf32, #tpu.memory_space<vmem>>, vector<64x256xf32>
    %9 = arith.truncf %8 : vector<64x256xf32> to vector<64x256xbf16>
    %cst_7 = arith.constant dense<0.000000e+00> : vector<64x1664xf32>
    %10 = tpu.matmul %9, %7, %cst_7 {dimension_numbers = #tpu.dot_dimension_numbers<[1], [0], [0], [1], [0, 0, 1, 1], [], []>} : vector<64x256xbf16>, vector<256x1664xbf16>, vector<64x1664xf32> -> vector<64x1664xf32>
    %c0_8 = arith.constant 0 : index
    %c0_9 = arith.constant 0 : index
    %c0_10 = arith.constant 0 : index
    %11 = vector.load %arg5[%c0_8, %c0_9, %c0_10] : memref<1x64x1664xf32, #tpu.memory_space<vmem>>, vector<1x64x1664xf32>
    %12 = vector.shape_cast %11 : vector<1x64x1664xf32> to vector<64x1664xf32>
    %13 = vector.shape_cast %10 : vector<64x1664xf32> to vector<1x64x1664xf32>
    tpu.vector_store %arg5[%c0_8, %c0_9, %c0_10], %13 {strides = array<i32>} : memref<1x64x1664xf32, #tpu.memory_space<vmem>>, vector<1x64x1664xf32>,
    return
  }
  func.func @transform_0(%arg0: i32, %arg1: i32) -> (i32, i32, i32) {
    %c0_i32 = arith.constant 0 : i32
    %c0_i32_0 = arith.constant 0 : i32
    return %arg0, %c0_i32, %arg1 : i32, i32, i32
  }
  func.func @transform_1(%arg0: i32, %arg1: i32) -> (i32, i32, i32) {
    %c0_i32 = arith.constant 0 : i32
    %c0_i32_0 = arith.constant 0 : i32
    return %arg0, %c0_i32, %arg1 : i32, i32, i32
  }
  func.func @transform_2(%arg0: i32, %arg1: i32) -> (i32, i32) {
    %c0_i32 = arith.constant 0 : i32
    %c0_i32_0 = arith.constant 0 : i32
    %c0_i32_1 = arith.constant 0 : i32
    return %c0_i32, %c0_i32_0 : i32, i32
  }
  func.func @transform_3(%arg0: i32, %arg1: i32) -> (i32, i32, i32) {
    %c0_i32 = arith.constant 0 : i32
    %c0_i32_0 = arith.constant 0 : i32
    return %arg0, %c0_i32, %arg1 : i32, i32, i32
  }
}

</mosaic_0001>

<llo_original>
// kernel: tpu_custom_call.1
$region0: #{tpu_custom_call.1}
  #allocation0 [shape = 'u32[]', space=smem, size = 0x4, offset = 0x4, fixed_abs, tag = 'smem constant byte address 0x4 - core index']
  #allocation1 [shape = 'u32[144,128]{1,0:T(1,128)}', space=vmem, size = 0x12000, scoped, tag = 'internal scratch']
  %s0 = inlined_call_operand.vmem [shape: f32[1,256,3136], index: 0, kind: input, shape index: {}]
  %s1 = inlined_call_operand.vmem [shape: f32[1,256,3136], index: 1, kind: input, shape index: {}]
  %s2 = inlined_call_operand.vmem [shape: f32[64,256], index: 2, kind: input, shape index: {}]
  %s3 = inlined_call_operand.hbm [shape: f32[1,64,3136], index: 3, kind: output, shape index: {}]
  %s4 = sld [smem:[#allocation0]]
  $region177: #{tpu_custom_call.1} parent=0
    _
  %s6 = ssub.s32 1, %s4
  %s7 = scalar_select 0, %s6, %s4
  $region1: #{tpu_custom_call.1} parent=0
    #allocation2 [shape = 'u8[3407872]{0}', space=vmem, size = 0x340000, scoped, tag = 'input window, operand 0']
    #allocation3 [shape = 'u8[3407872]{0}', space=vmem, size = 0x340000, scoped, tag = 'input window, operand 1']
    #allocation4 [shape = 'u8[851968]{0}', space=vmem, size = 0xd0000, scoped, tag = 'output window, operand 0']
    #allocation5 [shape = 's32[2]{0}', space=sflag, size = 0x8, scoped, tag = 'scoped memory for tpu_custom_call.1']
    %8 = vsyncpa [#allocation5], 0
    %s9 = scalar_lea.sflag [#allocation5], 1
    %10 = vsyncpa %s9, 0
    loop: start=0, step=1, limit=4
    $region2: #{tpu_custom_call.1} parent=1 // loop_pre_header
      _
    $region3: #{tpu_custom_call.1} parent=1 // loop_header
      %s12 = sphi 0, %s16
      %p13 = scmp.ge.s32.totalorder %s12, 4
      %s19 = sphi 0, %s31
      %s20 = sphi 0, %s27
      %s21 = sphi 0, %s19
      %s22 = sphi 0, %s20
      %s23 = sphi 0, %s21
      %s24 = sphi 0, %s22
      %s36 = sphi 0, %s38
      %s39 = sphi 0, %s36
      %s40 = sphi 0, %s39
      %s56 = sphi 0, %s40
      %s64 = sphi 0, %s66
      %s67 = sphi 0, %s64
      %s68 = sphi 0, %s67
      %s84 = sphi 0, %s68
      %s88 = sphi 0, %s88
      %s90 = sphi 0, %s88
      %s91 = sphi 0, %s90
      %s105 = sphi 0, %s91
      %s113 = sphi 0, %s115
      %s116 = sphi 0, %s113
      %s117 = sphi 0, %s116
      %s133 = sphi 0, %s117
    $region4: #{tpu_custom_call.1} parent=1 // loop_header_branch
      %15 = sbr.rel (%p13) target = $region8
    $region5: #{tpu_custom_call.1} parent=1 // loop_body
      %s17 = ssub.s32 %s12, 1
      %s18 = ssub.s32 %s12, 2
      %s25 = sadd.s32 1, %s20
      %p26 = scmp.ge.s32.totalorder %s25, 2
      %s27 = scalar_select %p26, 0, %s25
      %s28 = sadd.s32 1, %s19
      %s29 = scalar_select %p26, %s28, %s19
      %p30 = scmp.ge.s32.totalorder %s29, 1
      %s31 = scalar_select %p30, 0, %s29
      %s32 = ssub.s32 %s19, %s31
      %s33 = ssub.s32 %s20, %s27
      %s34 = sor.u32 %s32, %s33
      %p35 = scmp.eq.s32.totalorder %s34, 0
      %s37 = sadd.s32 %s36, 1
      %s38 = scalar_select %p35, %s36, %s37
      %p41 = pneg %p35
      %p42 = scmp.eq.s32.totalorder %s12, 1
      %p43 = por %p41, %p42
      %p44 = scmp.ne.s32.totalorder %s36, %s39
      %p45 = scmp.eq.s32.totalorder %s12, 0
      %p46 = por %p44, %p45
      %p47 = scmp.ne.s32.totalorder %s36, %s39
      %p48 = scmp.eq.s32.totalorder %s17, 1
      %p49 = por %p47, %p48
      %p50 = scmp.ne.s32.totalorder %s39, %s40
      %p51 = scmp.eq.s32.totalorder %s17, 0
      %p52 = por %p50, %p51
      %p53 = scmp.ne.s32.totalorder %s39, %s40
      %p54 = scmp.eq.s32.totalorder %s18, 1
      %p55 = por %p53, %p54
      %p57 = scmp.ne.s32.totalorder %s40, %s56
      %p58 = scmp.eq.s32.totalorder %s18, 0
      %p59 = por %p57, %p58
      %s60 = ssub.s32 %s19, %s31
      %s61 = ssub.s32 %s20, %s27
      %s62 = sor.u32 %s60, %s61
      %p63 = scmp.eq.s32.totalorder %s62, 0
      %s65 = sadd.s32 %s64, 1
      %s66 = scalar_select %p63, %s64, %s65
      %p69 = pneg %p63
      %p70 = scmp.eq.s32.totalorder %s12, 1
      %p71 = por %p69, %p70
      %p72 = scmp.ne.s32.totalorder %s64, %s67
      %p73 = scmp.eq.s32.totalorder %s12, 0
      %p74 = por %p72, %p73
      %p75 = scmp.ne.s32.totalorder %s64, %s67
      %p76 = scmp.eq.s32.totalorder %s17, 1
      %p77 = por %p75, %p76
      %p78 = scmp.ne.s32.totalorder %s67, %s68
      %p79 = scmp.eq.s32.totalorder %s17, 0
      %p80 = por %p78, %p79
      %p81 = scmp.ne.s32.totalorder %s67, %s68
      %p82 = scmp.eq.s32.totalorder %s18, 1
      %p83 = por %p81, %p82
      %p85 = scmp.ne.s32.totalorder %s68, %s84
      %p86 = scmp.eq.s32.totalorder %s18, 0
      %p87 = por %p85, %p86
      %s89 = sadd.s32 %s88, 1
      %p92 = scmp.eq.s32.totalorder %s12, 1
      %p93 = scmp.ne.s32.totalorder %s88, %s90
      %p94 = scmp.eq.s32.totalorder %s12, 0
      %p95 = por %p93, %p94
      %p96 = scmp.ne.s32.totalorder %s88, %s90
      %p97 = scmp.eq.s32.totalorder %s17, 1
      %p98 = por %p96, %p97
      %p99 = scmp.ne.s32.totalorder %s90, %s91
      %p100 = scmp.eq.s32.totalorder %s17, 0
      %p101 = por %p99, %p100
      %p102 = scmp.ne.s32.totalorder %s90, %s91
      %p103 = scmp.eq.s32.totalorder %s18, 1
      %p104 = por %p102, %p103
      %p106 = scmp.ne.s32.totalorder %s91, %s105
      %p107 = scmp.eq.s32.totalorder %s18, 0
      %p108 = por %p106, %p107
      %s109 = ssub.s32 %s19, %s31
      %s110 = ssub.s32 %s20, %s27
      %s111 = sor.u32 %s109, %s110
      %p112 = scmp.eq.s32.totalorder %s111, 0
      %s114 = sadd.s32 %s113, 1
      %s115 = scalar_select %p112, %s113, %s114
      %p118 = pneg %p112
      %p119 = scmp.eq.s32.totalorder %s12, 1
      %p120 = por %p118, %p119
      %p121 = scmp.ne.s32.totalorder %s113, %s116
      %p122 = scmp.eq.s32.totalorder %s12, 0
      %p123 = por %p121, %p122
      %p124 = scmp.ne.s32.totalorder %s113, %s116
      %p125 = scmp.eq.s32.totalorder %s17, 1
      %p126 = por %p124, %p125
      %p127 = scmp.ne.s32.totalorder %s116, %s117
      %p128 = scmp.eq.s32.totalorder %s17, 0
      %p129 = por %p127, %p128
      %p130 = scmp.ne.s32.totalorder %s116, %s117
      %p131 = scmp.eq.s32.totalorder %s18, 1
      %p132 = por %p130, %p131
      %p134 = scmp.ne.s32.totalorder %s117, %s133
      %p135 = scmp.eq.s32.totalorder %s18, 0
      %p136 = por %p134, %p135
      %p137 = scmp.le.s32.totalorder 1, %s12
      %p138 = scmp.lt.s32.totalorder %s12, 3
      %p139 = pnand %p137, %p138
      %p140 = pneg %p139
      // Predicated region
      $region9: #{tpu_custom_call.1} parent=5 // pred_check
        _
      $region10: #{tpu_custom_call.1} parent=5 // pred_check_branch
        %142 = sbr.rel (%p139) target = $region12
      $region11: #{tpu_custom_call.1} parent=5 // pred_region
        %s143 = ssub.s32 %s12, 1
        // Predicated region
        $region13: #{tpu_custom_call.1} parent=11 // pred_check
          %p144 = pneg %p101
        $region14: #{tpu_custom_call.1} parent=11 // pred_check_branch
          %146 = sbr.rel (%p144) target = $region16
        $region15: #{tpu_custom_call.1} parent=11 // pred_region
          _
        $region16: #{tpu_custom_call.1} parent=11 // pred_fallthru
          _
      $region12: #{tpu_custom_call.1} parent=5 // pred_fallthru
        _
      %p147 = scmp.lt.s32.totalorder %s12, 2
      // Predicated region
      $region17: #{tpu_custom_call.1} parent=5 // pred_check
        %p148 = pneg %p147
      $region18: #{tpu_custom_call.1} parent=5 // pred_check_branch
        %150 = sbr.rel (%p148) target = $region20
      $region19: #{tpu_custom_call.1} parent=5 // pred_region
        // Predicated region
        $region21: #{tpu_custom_call.1} parent=19 // pred_check
          %p151 = pneg %p46
        $region22: #{tpu_custom_call.1} parent=19 // pred_check_branch
          %153 = sbr.rel (%p151) target = $region24
        $region23: #{tpu_custom_call.1} parent=19 // pred_region
          %s154 = sand.u32 %s36, 1
          %s155 = sand.u32 %s36, 1
          %s156 = smul.addr %s155, 3328
          %s157 = scalar_lea.vmem [#allocation2], %s156
          %s158 = smul.u32 13, %s20
          %s159 = ssub.s32 25, %s158
          %p160 = scmp.lt.s32.totalorder %s159, 13
          %s161 = scalar_select %p160, %s159, 13
          %s162 = smul.u32 4096, %s161
          %p163 = scmp.ne.s32.totalorder 0, %s162
          %s164 = smul.addr %s19, 800
          %s165 = sadd.s32 %s158, %s164
          %s166 = smul.addr %s165, 8
          %s167 = scalar_lea.vmem %s0, %s166
          %s168 = smul.u32 %s161, 8
          // Predicated region
          $region25: #{tpu_custom_call.1} parent=23 // pred_check
            %p169 = pneg %p163
          $region26: #{tpu_custom_call.1} parent=23 // pred_check_branch
            %171 = sbr.rel (%p169) target = $region28
          $region27: #{tpu_custom_call.1} parent=23 // pred_region
            %p172 = scmp.lt.u32.totalorder %s168, 8
            %p173 = pneg %p172
            // Predicated region
            $region29: #{tpu_custom_call.1} parent=27 // pred_check
              _
            $region30: #{tpu_custom_call.1} parent=27 // pred_check_branch
              %175 = sbr.rel (%p172) target = $region32
            $region31: #{tpu_custom_call.1} parent=27 // pred_region
              %s253 = sand.u32 %s168, 7
              %p254 = scmp.eq.s32.totalorder %s253, 0
              // Predicated region
              $region44: #{tpu_custom_call.1} parent=31 // pred_check
                %p255 = pneg %p254
              $region45: #{tpu_custom_call.1} parent=31 // pred_check_branch
                %257 = sbr.rel (%p255) target = $region47
              $region46: #{tpu_custom_call.1} parent=31 // pred_region
                %s258 = sshrl.u32 %s168, 3
                %s259 = sshrl.u32 %s258, 1
                // While loop
                $region48: #{tpu_custom_call.1} parent=46 // loop_pre_header
                  _
                $region49: #{tpu_custom_call.1} parent=46 // loop_header
                  %s263 = sphi 0, %s265
                  %p264 = scmp.ge.s32.totalorder %s263, %s259
                  %s268 = sphi 0, %s401
                  %s269 = sphi %s167, %s404
                  %s270 = sphi %s157, %s405
                $region50: #{tpu_custom_call.1} parent=46 // loop_header_branch
                  %267 = sbr.rel (%p264) target = $region54
                $region51: #{tpu_custom_call.1} parent=46 // loop_body
                  %v271 = vld [vmem:[%s269] sm:$0xff]
                  %272 = vst [vmem:[%s270] sm:$0xff] %v271
                  %v273 = vld [vmem:[%s269 + $0x8] sm:$0xff]
                  %274 = vst [vmem:[%s270 + $0x8] sm:$0xff] %v273
                  %v275 = vld [vmem:[%s269 + $0xc8] sm:$0xff]
                  %276 = vst [vmem:[%s270 + $0x68] sm:$0xff] %v275
                  %v277 = vld [vmem:[%s269 + $0xd0] sm:$0xff]
                  %278 = vst [vmem:[%s270 + $0x70] sm:$0xff] %v277
                  %v279 = vld [vmem:[%s269 + $0x190] sm:$0xff]
                  %280 = vst [vmem:[%s270 + $0xd0] sm:$0xff] %v279
                  %v281 = vld [vmem:[%s269 + $0x198] sm:$0xff]
                  %282 = vst [vmem:[%s270 + $0xd8] sm:$0xff] %v281
                  %v283 = vld [vmem:[%s269 + $0x258] sm:$0xff]
                  %284 = vst [vmem:[%s270 + $0x138] sm:$0xff] %v283
                  %v285 = vld [vmem:[%s269 + $0x260] sm:$0xff]
                  %286 = vst [vmem:[%s270 + $0x140] sm:$0xff] %v285
                  %v287 = vld [vmem:[%s269 + $0x320] sm:$0xff]
                  %288 = vst [vmem:[%s270 + $0x1a0] sm:$0xff] %v287
                  %v289 = vld [vmem:[%s269 + $0x328] sm:$0xff]
                  %290 = vst [vmem:[%s270 + $0x1a8] sm:$0xff] %v289
                  %v291 = vld [vmem:[%s269 + $0x3e8] sm:$0xff]
                  %292 = vst [vmem:[%s270 + $0x208] sm:$0xff] %v291
                  %v293 = vld [vmem:[%s269 + $0x3f0] sm:$0xff]
                  %294 = vst [vmem:[%s270 + $0x210] sm:$0xff] %v293
                  %v295 = vld [vmem:[%s269 + $0x4b0] sm:$0xff]
                  %296 = vst [vmem:[%s270 + $0x270] sm:$0xff] %v295
                  %v297 = vld [vmem:[%s269 + $0x4b8] sm:$0xff]
                  %298 = vst [vmem:[%s270 + $0x278] sm:$0xff] %v297
                  %v299 = vld [vmem:[%s269 + $0x578] sm:$0xff]
                  %300 = vst [vmem:[%s270 + $0x2d8] sm:$0xff] %v299
                  %v301 = vld [vmem:[%s269 + $0x580] sm:$0xff]
                  %302 = vst [vmem:[%s270 + $0x2e0] sm:$0xff] %v301
                  %v303 = vld [vmem:[%s269 + $0x640] sm:$0xff]
                  %304 = vst [vmem:[%s270 + $0x340] sm:$0xff] %v303
                  %v305 = vld [vmem:[%s269 + $0x648] sm:$0xff]
                  %306 = vst [vmem:[%s270 + $0x348] sm:$0xff] %v305
                  %v307 = vld [vmem:[%s269 + $0x708] sm:$0xff]
                  %308 = vst [vmem:[%s270 + $0x3a8] sm:$0xff] %v307
                  %v309 = vld [vmem:[%s269 + $0x710] sm:$0xff]
                  %310 = vst [vmem:[%s270 + $0x3b0] sm:$0xff] %v309
                  %v311 = vld [vmem:[%s269 + $0x7d0] sm:$0xff]
                  %312 = vst [vmem:[%s270 + $0x410] sm:$0xff] %v311
                  %v313 = vld [vmem:[%s269 + $0x7d8] sm:$0xff]
                  %314 = vst [vmem:[%s270 + $0x418] sm:$0xff] %v313
                  %v315 = vld [vmem:[%s269 + $0x898] sm:$0xff]
                  %316 = vst [vmem:[%s270 + $0x478] sm:$0xff] %v315
                  %v317 = vld [vmem:[%s269 + $0x8a0] sm:$0xff]
                  %318 = vst [vmem:[%s270 + $0x480] sm:$0xff] %v317
                  %v319 = vld [vmem:[%s269 + $0x960] sm:$0xff]
                  %320 = vst [vmem:[%s270 + $0x4e0] sm:$0xff] %v319
                  %v321 = vld [vmem:[%s269 + $0x968] sm:$0xff]
                  %322 = vst [vmem:[%s270 + $0x4e8] sm:$0xff] %v321
                  %v323 = vld [vmem:[%s269 + $0xa28] sm:$0xff]
                  %324 = vst [vmem:[%s270 + $0x548] sm:$0xff] %v323
                  %v325 = vld [vmem:[%s269 + $0xa30] sm:$0xff]
                  %326 = vst [vmem:[%s270 + $0x550] sm:$0xff] %v325
                  %v327 = vld [vmem:[%s269 + $0xaf0] sm:$0xff]
                  %328 = vst [vmem:[%s270 + $0x5b0] sm:$0xff] %v327
                  %v329 = vld [vmem:[%s269 + $0xaf8] sm:$0xff]
                  %330 = vst [vmem:[%s270 + $0x5b8] sm:$0xff] %v329
                  %v331 = vld [vmem:[%s269 + $0xbb8] sm:$0xff]
                  %332 = vst [vmem:[%s270 + $0x618] sm:$0xff] %v331
                  %v333 = vld [vmem:[%s269 + $0xbc0] sm:$0xff]
                  %334 = vst [vmem:[%s270 + $0x620] sm:$0xff] %v333
                  %v335 = vld [vmem:[%s269 + $0xc80] sm:$0xff]
                  %336 = vst [vmem:[%s270 + $0x680] sm:$0xff] %v335
                  %v337 = vld [vmem:[%s269 + $0xc88] sm:$0xff]
                  %338 = vst [vmem:[%s270 + $0x688] sm:$0xff] %v337
                  %v339 = vld [vmem:[%s269 + $0xd48] sm:$0xff]
                  %340 = vst [vmem:[%s270 + $0x6e8] sm:$0xff] %v339
                  %v341 = vld [vmem:[%s269 + $0xd50] sm:$0xff]
                  %342 = vst [vmem:[%s270 + $0x6f0] sm:$0xff] %v341
                  %v343 = vld [vmem:[%s269 + $0xe10] sm:$0xff]
                  %344 = vst [vmem:[%s270 + $0x750] sm:$0xff] %v343
                  %v345 = vld [vmem:[%s269 + $0xe18] sm:$0xff]
                  %346 = vst [vmem:[%s270 + $0x758] sm:$0xff] %v345
                  %v347 = vld [vmem:[%s269 + $0xed8] sm:$0xff]
                  %348 = vst [vmem:[%s270 + $0x7b8] sm:$0xff] %v347
                  %v349 = vld [vmem:[%s269 + $0xee0] sm:$0xff]
                  %350 = vst [vmem:[%s270 + $0x7c0] sm:$0xff] %v349
                  %v351 = vld [vmem:[%s269 + $0xfa0] sm:$0xff]
                  %352 = vst [vmem:[%s270 + $0x820] sm:$0xff] %v351
                  %v353 = vld [vmem:[%s269 + $0xfa8] sm:$0xff]
                  %354 = vst [vmem:[%s270 + $0x828] sm:$0xff] %v353
                  %v355 = vld [vmem:[%s269 + $0x1068] sm:$0xff]
                  %356 = vst [vmem:[%s270 + $0x888] sm:$0xff] %v355
                  %v357 = vld [vmem:[%s269 + $0x1070] sm:$0xff]
                  %358 = vst [vmem:[%s270 + $0x890] sm:$0xff] %v357
                  %v359 = vld [vmem:[%s269 + $0x1130] sm:$0xff]
                  %360 = vst [vmem:[%s270 + $0x8f0] sm:$0xff] %v359
                  %v361 = vld [vmem:[%s269 + $0x1138] sm:$0xff]
                  %362 = vst [vmem:[%s270 + $0x8f8] sm:$0xff] %v361
                  %v363 = vld [vmem:[%s269 + $0x11f8] sm:$0xff]
                  %364 = vst [vmem:[%s270 + $0x958] sm:$0xff] %v363
                  %v365 = vld [vmem:[%s269 + $0x1200] sm:$0xff]
                  %366 = vst [vmem:[%s270 + $0x960] sm:$0xff] %v365
                  %v367 = vld [vmem:[%s269 + $0x12c0] sm:$0xff]
                  %368 = vst [vmem:[%s270 + $0x9c0] sm:$0xff] %v367
                  %v369 = vld [vmem:[%s269 + $0x12c8] sm:$0xff]
                  %370 = vst [vmem:[%s270 + $0x9c8] sm:$0xff] %v369
                  %v371 = vld [vmem:[%s269 + $0x1388] sm:$0xff]
                  %372 = vst [vmem:[%s270 + $0xa28] sm:$0xff] %v371
                  %v373 = vld [vmem:[%s269 + $0x1390] sm:$0xff]
                  %374 = vst [vmem:[%s270 + $0xa30] sm:$0xff] %v373
                  %v375 = vld [vmem:[%s269 + $0x1450] sm:$0xff]
                  %376 = vst [vmem:[%s270 + $0xa90] sm:$0xff] %v375
                  %v377 = vld [vmem:[%s269 + $0x1458] sm:$0xff]
                  %378 = vst [vmem:[%s270 + $0xa98] sm:$0xff] %v377
                  %v379 = vld [vmem:[%s269 + $0x1518] sm:$0xff]
                  %380 = vst [vmem:[%s270 + $0xaf8] sm:$0xff] %v379
                  %v381 = vld [vmem:[%s269 + $0x1520] sm:$0xff]
                  %382 = vst [vmem:[%s270 + $0xb00] sm:$0xff] %v381
                  %v383 = vld [vmem:[%s269 + $0x15e0] sm:$0xff]
                  %384 = vst [vmem:[%s270 + $0xb60] sm:$0xff] %v383
                  %v385 = vld [vmem:[%s269 + $0x15e8] sm:$0xff]
                  %386 = vst [vmem:[%s270 + $0xb68] sm:$0xff] %v385
                  %v387 = vld [vmem:[%s269 + $0x16a8] sm:$0xff]
                  %388 = vst [vmem:[%s270 + $0xbc8] sm:$0xff] %v387
                  %v389 = vld [vmem:[%s269 + $0x16b0] sm:$0xff]
                  %390 = vst [vmem:[%s270 + $0xbd0] sm:$0xff] %v389
                  %v391 = vld [vmem:[%s269 + $0x1770] sm:$0xff]
                  %392 = vst [vmem:[%s270 + $0xc30] sm:$0xff] %v391
                  %v393 = vld [vmem:[%s269 + $0x1778] sm:$0xff]
                  %394 = vst [vmem:[%s270 + $0xc38] sm:$0xff] %v393
                  %v395 = vld [vmem:[%s269 + $0x1838] sm:$0xff]
                  %396 = vst [vmem:[%s270 + $0xc98] sm:$0xff] %v395
                  %v397 = vld [vmem:[%s269 + $0x1840] sm:$0xff]
                  %398 = vst [vmem:[%s270 + $0xca0] sm:$0xff] %v397
                  %s399 = sadd.s32 1, %s268
                  %p400 = scmp.ge.s32.totalorder %s399, %s259
                  %s401 = scalar_select %p400, 0, %s399
                  %s402 = smul.u32 %s401, 16
                  %s403 = smul.u32 %s401, 16
                  %s404 = scalar_lea.vmem %s167, %s402
                  %s405 = scalar_lea.vmem %s157, %s403 [#allocation2]
                $region52: #{tpu_custom_call.1} parent=46 // loop_footer
                  %s265 = sadd.s32 %s263, 1
                $region53: #{tpu_custom_call.1} parent=46 // loop_footer_branch
                  %262 = sbr.rel target = $region49
                $region54: #{tpu_custom_call.1} parent=46 // loop_exit
                  _
                %s406 = sshrl.u32 %s258, 1
                %s407 = sand.u32 %s258, 1
                %s408 = smul.u32 %s406, 2
                %s409 = smul.u32 128, %s408
                %s410 = sshra.s32 %s409, 4
                %s411 = scalar_lea.vmem %s167, %s410
                %s412 = smul.u32 128, %s408
                %s413 = sshra.s32 %s412, 4
                %s414 = scalar_lea.vmem %s157, %s413 [#allocation2]
                // While loop
                $region55: #{tpu_custom_call.1} parent=46 // loop_pre_header
                  _
                $region56: #{tpu_custom_call.1} parent=46 // loop_header
                  %s418 = sphi 0, %s420
                  %p419 = scmp.ge.s32.totalorder %s418, %s407
                  %s423 = sphi 0, %s492
                  %s424 = sphi %s411, %s495
                  %s425 = sphi %s414, %s496
                $region57: #{tpu_custom_call.1} parent=46 // loop_header_branch
                  %422 = sbr.rel (%p419) target = $region61
                $region58: #{tpu_custom_call.1} parent=46 // loop_body
                  %v426 = vld [vmem:[%s424] sm:$0xff]
                  %427 = vst [vmem:[%s425] sm:$0xff] %v426
                  %v428 = vld [vmem:[%s424 + $0xc8] sm:$0xff]
                  %429 = vst [vmem:[%s425 + $0x68] sm:$0xff] %v428
                  %v430 = vld [vmem:[%s424 + $0x190] sm:$0xff]
                  %431 = vst [vmem:[%s425 + $0xd0] sm:$0xff] %v430
                  %v432 = vld [vmem:[%s424 + $0x258] sm:$0xff]
                  %433 = vst [vmem:[%s425 + $0x138] sm:$0xff] %v432
                  %v434 = vld [vmem:[%s424 + $0x320] sm:$0xff]
                  %435 = vst [vmem:[%s425 + $0x1a0] sm:$0xff] %v434
                  %v436 = vld [vmem:[%s424 + $0x3e8] sm:$0xff]
                  %437 = vst [vmem:[%s425 + $0x208] sm:$0xff] %v436
                  %v438 = vld [vmem:[%s424 + $0x4b0] sm:$0xff]
                  %439 = vst [vmem:[%s425 + $0x270] sm:$0xff] %v438
                  %v440 = vld [vmem:[%s424 + $0x578] sm:$0xff]
                  %441 = vst [vmem:[%s425 + $0x2d8] sm:$0xff] %v440
                  %v442 = vld [vmem:[%s424 + $0x640] sm:$0xff]
                  %443 = vst [vmem:[%s425 + $0x340] sm:$0xff] %v442
                  %v444 = vld [vmem:[%s424 + $0x708] sm:$0xff]
                  %445 = vst [vmem:[%s425 + $0x3a8] sm:$0xff] %v444
                  %v446 = vld [vmem:[%s424 + $0x7d0] sm:$0xff]
                  %447 = vst [vmem:[%s425 + $0x410] sm:$0xff] %v446
                  %v448 = vld [vmem:[%s424 + $0x898] sm:$0xff]
                  %449 = vst [vmem:[%s425 + $0x478] sm:$0xff] %v448
                  %v450 = vld [vmem:[%s424 + $0x960] sm:$0xff]
                  %451 = vst [vmem:[%s425 + $0x4e0] sm:$0xff] %v450
                  %v452 = vld [vmem:[%s424 + $0xa28] sm:$0xff]
                  %453 = vst [vmem:[%s425 + $0x548] sm:$0xff] %v452
                  %v454 = vld [vmem:[%s424 + $0xaf0] sm:$0xff]
                  %455 = vst [vmem:[%s425 + $0x5b0] sm:$0xff] %v454
                  %v456 = vld [vmem:[%s424 + $0xbb8] sm:$0xff]
                  %457 = vst [vmem:[%s425 + $0x618] sm:$0xff] %v456
                  %v458 = vld [vmem:[%s424 + $0xc80] sm:$0xff]
                  %459 = vst [vmem:[%s425 + $0x680] sm:$0xff] %v458
                  %v460 = vld [vmem:[%s424 + $0xd48] sm:$0xff]
                  %461 = vst [vmem:[%s425 + $0x6e8] sm:$0xff] %v460
                  %v462 = vld [vmem:[%s424 + $0xe10] sm:$0xff]
                  %463 = vst [vmem:[%s425 + $0x750] sm:$0xff] %v462
                  %v464 = vld [vmem:[%s424 + $0xed8] sm:$0xff]
                  %465 = vst [vmem:[%s425 + $0x7b8] sm:$0xff] %v464
                  %v466 = vld [vmem:[%s424 + $0xfa0] sm:$0xff]
                  %467 = vst [vmem:[%s425 + $0x820] sm:$0xff] %v466
                  %v468 = vld [vmem:[%s424 + $0x1068] sm:$0xff]
                  %469 = vst [vmem:[%s425 + $0x888] sm:$0xff] %v468
                  %v470 = vld [vmem:[%s424 + $0x1130] sm:$0xff]
                  %471 = vst [vmem:[%s425 + $0x8f0] sm:$0xff] %v470
                  %v472 = vld [vmem:[%s424 + $0x11f8] sm:$0xff]
                  %473 = vst [vmem:[%s425 + $0x958] sm:$0xff] %v472
                  %v474 = vld [vmem:[%s424 + $0x12c0] sm:$0xff]
                  %475 = vst [vmem:[%s425 + $0x9c0] sm:$0xff] %v474
                  %v476 = vld [vmem:[%s424 + $0x1388] sm:$0xff]
                  %477 = vst [vmem:[%s425 + $0xa28] sm:$0xff] %v476
                  %v478 = vld [vmem:[%s424 + $0x1450] sm:$0xff]
                  %479 = vst [vmem:[%s425 + $0xa90] sm:$0xff] %v478
                  %v480 = vld [vmem:[%s424 + $0x1518] sm:$0xff]
                  %481 = vst [vmem:[%s425 + $0xaf8] sm:$0xff] %v480
                  %v482 = vld [vmem:[%s424 + $0x15e0] sm:$0xff]
                  %483 = vst [vmem:[%s425 + $0xb60] sm:$0xff] %v482
                  %v484 = vld [vmem:[%s424 + $0x16a8] sm:$0xff]
                  %485 = vst [vmem:[%s425 + $0xbc8] sm:$0xff] %v484
                  %v486 = vld [vmem:[%s424 + $0x1770] sm:$0xff]
                  %487 = vst [vmem:[%s425 + $0xc30] sm:$0xff] %v486
                  %v488 = vld [vmem:[%s424 + $0x1838] sm:$0xff]
                  %489 = vst [vmem:[%s425 + $0xc98] sm:$0xff] %v488
                  %s490 = sadd.s32 1, %s423
                  %p491 = scmp.ge.s32.totalorder %s490, %s407
                  %s492 = scalar_select %p491, 0, %s490
                  %s493 = smul.u32 %s492, 8
                  %s494 = smul.u32 %s492, 8
                  %s495 = scalar_lea.vmem %s411, %s493
                  %s496 = scalar_lea.vmem %s414, %s494 [#allocation2]
                $region59: #{tpu_custom_call.1} parent=46 // loop_footer
                  %s420 = sadd.s32 %s418, 1
                $region60: #{tpu_custom_call.1} parent=46 // loop_footer_branch
                  %417 = sbr.rel target = $region56
                $region61: #{tpu_custom_call.1} parent=46 // loop_exit
                  _
              $region47: #{tpu_custom_call.1} parent=31 // pred_fallthru
                _
              %p497 = pneg %p254
              // Predicated region
              $region62: #{tpu_custom_call.1} parent=31 // pred_check
                _
              $region63: #{tpu_custom_call.1} parent=31 // pred_check_branch
                %499 = sbr.rel (%p254) target = $region65
              $region64: #{tpu_custom_call.1} parent=31 // pred_region
                %s500 = sand.u32 %s168, 7
                %s501 = ssub.s32 %s168, %s500
                %s502 = scalar_lea.vmem %s167, %s501
                %s503 = ssub.s32 %s168, %s500
                %s504 = scalar_lea.vmem %s157, %s503 [#allocation2]
                %s505 = sshrl.u32 %s168, 3
                %s506 = sshrl.u32 %s505, 1
                // While loop
                $region66: #{tpu_custom_call.1} parent=64 // loop_pre_header
                  _
                $region67: #{tpu_custom_call.1} parent=64 // loop_header
                  %s510 = sphi 0, %s512
                  %p511 = scmp.ge.s32.totalorder %s510, %s506
                  %s515 = sphi 0, %s648
                  %s516 = sphi %s167, %s651
                  %s517 = sphi %s157, %s652
                $region68: #{tpu_custom_call.1} parent=64 // loop_header_branch
                  %514 = sbr.rel (%p511) target = $region72
                $region69: #{tpu_custom_call.1} parent=64 // loop_body
                  %v518 = vld [vmem:[%s516] sm:$0xff]
                  %519 = vst [vmem:[%s517] sm:$0xff] %v518
                  %v520 = vld [vmem:[%s516 + $0x8] sm:$0xff]
                  %521 = vst [vmem:[%s517 + $0x8] sm:$0xff] %v520
                  %v522 = vld [vmem:[%s516 + $0xc8] sm:$0xff]
                  %523 = vst [vmem:[%s517 + $0x68] sm:$0xff] %v522
                  %v524 = vld [vmem:[%s516 + $0xd0] sm:$0xff]
                  %525 = vst [vmem:[%s517 + $0x70] sm:$0xff] %v524
                  %v526 = vld [vmem:[%s516 + $0x190] sm:$0xff]
                  %527 = vst [vmem:[%s517 + $0xd0] sm:$0xff] %v526
                  %v528 = vld [vmem:[%s516 + $0x198] sm:$0xff]
                  %529 = vst [vmem:[%s517 + $0xd8] sm:$0xff] %v528
                  %v530 = vld [vmem:[%s516 + $0x258] sm:$0xff]
                  %531 = vst [vmem:[%s517 + $0x138] sm:$0xff] %v530
                  %v532 = vld [vmem:[%s516 + $0x260] sm:$0xff]
                  %533 = vst [vmem:[%s517 + $0x140] sm:$0xff] %v532
                  %v534 = vld [vmem:[%s516 + $0x320] sm:$0xff]
                  %535 = vst [vmem:[%s517 + $0x1a0] sm:$0xff] %v534
                  %v536 = vld [vmem:[%s516 + $0x328] sm:$0xff]
                  %537 = vst [vmem:[%s517 + $0x1a8] sm:$0xff] %v536
                  %v538 = vld [vmem:[%s516 + $0x3e8] sm:$0xff]
                  %539 = vst [vmem:[%s517 + $0x208] sm:$0xff] %v538
                  %v540 = vld [vmem:[%s516 + $0x3f0] sm:$0xff]
                  %541 = vst [vmem:[%s517 + $0x210] sm:$0xff] %v540
                  %v542 = vld [vmem:[%s516 + $0x4b0] sm:$0xff]
                  %543 = vst [vmem:[%s517 + $0x270] sm:$0xff] %v542
                  %v544 = vld [vmem:[%s516 + $0x4b8] sm:$0xff]
                  %545 = vst [vmem:[%s517 + $0x278] sm:$0xff] %v544
                  %v546 = vld [vmem:[%s516 + $0x578] sm:$0xff]
                  %547 = vst [vmem:[%s517 + $0x2d8] sm:$0xff] %v546
                  %v548 = vld [vmem:[%s516 + $0x580] sm:$0xff]
                  %549 = vst [vmem:[%s517 + $0x2e0] sm:$0xff] %v548
                  %v550 = vld [vmem:[%s516 + $0x640] sm:$0xff]
                  %551 = vst [vmem:[%s517 + $0x340] sm:$0xff] %v550
                  %v552 = vld [vmem:[%s516 + $0x648] sm:$0xff]
                  %553 = vst [vmem:[%s517 + $0x348] sm:$0xff] %v552
                  %v554 = vld [vmem:[%s516 + $0x708] sm:$0xff]
                  %555 = vst [vmem:[%s517 + $0x3a8] sm:$0xff] %v554
                  %v556 = vld [vmem:[%s516 + $0x710] sm:$0xff]
                  %557 = vst [vmem:[%s517 + $0x3b0] sm:$0xff] %v556
                  %v558 = vld [vmem:[%s516 + $0x7d0] sm:$0xff]
                  %559 = vst [vmem:[%s517 + $0x410] sm:$0xff] %v558
                  %v560 = vld [vmem:[%s516 + $0x7d8] sm:$0xff]
                  %561 = vst [vmem:[%s517 + $0x418] sm:$0xff] %v560
                  %v562 = vld [vmem:[%s516 + $0x898] sm:$0xff]
                  %563 = vst [vmem:[%s517 + $0x478] sm:$0xff] %v562
                  %v564 = vld [vmem:[%s516 + $0x8a0] sm:$0xff]
                  %565 = vst [vmem:[%s517 + $0x480] sm:$0xff] %v564
                  %v566 = vld [vmem:[%s516 + $0x960] sm:$0xff]
                  %567 = vst [vmem:[%s517 + $0x4e0] sm:$0xff] %v566
                  %v568 = vld [vmem:[%s516 + $0x968] sm:$0xff]
                  %569 = vst [vmem:[%s517 + $0x4e8] sm:$0xff] %v568
                  %v570 = vld [vmem:[%s516 + $0xa28] sm:$0xff]
                  %571 = vst [vmem:[%s517 + $0x548] sm:$0xff] %v570
                  %v572 = vld [vmem:[%s516 + $0xa30] sm:$0xff]
                  %573 = vst [vmem:[%s517 + $0x550] sm:$0xff] %v572
                  %v574 = vld [vmem:[%s516 + $0xaf0] sm:$0xff]
                  %575 = vst [vmem:[%s517 + $0x5b0] sm:$0xff] %v574
                  %v576 = vld [vmem:[%s516 + $0xaf8] sm:$0xff]
                  %577 = vst [vmem:[%s517 + $0x5b8] sm:$0xff] %v576
                  %v578 = vld [vmem:[%s516 + $0xbb8] sm:$0xff]
                  %579 = vst [vmem:[%s517 + $0x618] sm:$0xff] %v578
                  %v580 = vld [vmem:[%s516 + $0xbc0] sm:$0xff]
                  %581 = vst [vmem:[%s517 + $0x620] sm:$0xff] %v580
                  %v582 = vld [vmem:[%s516 + $0xc80] sm:$0xff]
                  %583 = vst [vmem:[%s517 + $0x680] sm:$0xff] %v582
                  %v584 = vld [vmem:[%s516 + $0xc88] sm:$0xff]
                  %585 = vst [vmem:[%s517 + $0x688] sm:$0xff] %v584
                  %v586 = vld [vmem:[%s516 + $0xd48] sm:$0xff]
                  %587 = vst [vmem:[%s517 + $0x6e8] sm:$0xff] %v586
                  %v588 = vld [vmem:[%s516 + $0xd50] sm:$0xff]
                  %589 = vst [vmem:[%s517 + $0x6f0] sm:$0xff] %v588
                  %v590 = vld [vmem:[%s516 + $0xe10] sm:$0xff]
                  %591 = vst [vmem:[%s517 + $0x750] sm:$0xff] %v590
                  %v592 = vld [vmem:[%s516 + $0xe18] sm:$0xff]
                  %593 = vst [vmem:[%s517 + $0x758] sm:$0xff] %v592
                  %v594 = vld [vmem:[%s516 + $0xed8] sm:$0xff]
                  %595 = vst [vmem:[%s517 + $0x7b8] sm:$0xff] %v594
                  %v596 = vld [vmem:[%s516 + $0xee0] sm:$0xff]
                  %597 = vst [vmem:[%s517 + $0x7c0] sm:$0xff] %v596
                  %v598 = vld [vmem:[%s516 + $0xfa0] sm:$0xff]
                  %599 = vst [vmem:[%s517 + $0x820] sm:$0xff] %v598
                  %v600 = vld [vmem:[%s516 + $0xfa8] sm:$0xff]
                  %601 = vst [vmem:[%s517 + $0x828] sm:$0xff] %v600
                  %v602 = vld [vmem:[%s516 + $0x1068] sm:$0xff]
                  %603 = vst [vmem:[%s517 + $0x888] sm:$0xff] %v602
                  %v604 = vld [vmem:[%s516 + $0x1070] sm:$0xff]
                  %605 = vst [vmem:[%s517 + $0x890] sm:$0xff] %v604
                  %v606 = vld [vmem:[%s516 + $0x1130] sm:$0xff]
                  %607 = vst [vmem:[%s517 + $0x8f0] sm:$0xff] %v606
                  %v608 = vld [vmem:[%s516 + $0x1138] sm:$0xff]
                  %609 = vst [vmem:[%s517 + $0x8f8] sm:$0xff] %v608
                  %v610 = vld [vmem:[%s516 + $0x11f8] sm:$0xff]
                  %611 = vst [vmem:[%s517 + $0x958] sm:$0xff] %v610
                  %v612 = vld [vmem:[%s516 + $0x1200] sm:$0xff]
                  %613 = vst [vmem:[%s517 + $0x960] sm:$0xff] %v612
                  %v614 = vld [vmem:[%s516 + $0x12c0] sm:$0xff]
                  %615 = vst [vmem:[%s517 + $0x9c0] sm:$0xff] %v614
                  %v616 = vld [vmem:[%s516 + $0x12c8] sm:$0xff]
                  %617 = vst [vmem:[%s517 + $0x9c8] sm:$0xff] %v616
                  %v618 = vld [vmem:[%s516 + $0x1388] sm:$0xff]
                  %619 = vst [vmem:[%s517 + $0xa28] sm:$0xff] %v618
                  %v620 = vld [vmem:[%s516 + $0x1390] sm:$0xff]
                  %621 = vst [vmem:[%s517 + $0xa30] sm:$0xff] %v620
                  %v622 = vld [vmem:[%s516 + $0x1450] sm:$0xff]
                  %623 = vst [vmem:[%s517 + $0xa90] sm:$0xff] %v622
                  %v624 = vld [vmem:[%s516 + $0x1458] sm:$0xff]
                  %625 = vst [vmem:[%s517 + $0xa98] sm:$0xff] %v624
                  %v626 = vld [vmem:[%s516 + $0x1518] sm:$0xff]
                  %627 = vst [vmem:[%s517 + $0xaf8] sm:$0xff] %v626
                  %v628 = vld [vmem:[%s516 + $0x1520] sm:$0xff]
                  %629 = vst [vmem:[%s517 + $0xb00] sm:$0xff] %v628
                  %v630 = vld [vmem:[%s516 + $0x15e0] sm:$0xff]
                  %631 = vst [vmem:[%s517 + $0xb60] sm:$0xff] %v630
                  %v632 = vld [vmem:[%s516 + $0x15e8] sm:$0xff]
                  %633 = vst [vmem:[%s517 + $0xb68] sm:$0xff] %v632
                  %v634 = vld [vmem:[%s516 + $0x16a8] sm:$0xff]
                  %635 = vst [vmem:[%s517 + $0xbc8] sm:$0xff] %v634
                  %v636 = vld [vmem:[%s516 + $0x16b0] sm:$0xff]
                  %637 = vst [vmem:[%s517 + $0xbd0] sm:$0xff] %v636
                  %v638 = vld [vmem:[%s516 + $0x1770] sm:$0xff]
                  %639 = vst [vmem:[%s517 + $0xc30] sm:$0xff] %v638
                  %v640 = vld [vmem:[%s516 + $0x1778] sm:$0xff]
                  %641 = vst [vmem:[%s517 + $0xc38] sm:$0xff] %v640
                  %v642 = vld [vmem:[%s516 + $0x1838] sm:$0xff]
                  %643 = vst [vmem:[%s517 + $0xc98] sm:$0xff] %v642
                  %v644 = vld [vmem:[%s516 + $0x1840] sm:$0xff]
                  %645 = vst [vmem:[%s517 + $0xca0] sm:$0xff] %v644
                  %s646 = sadd.s32 1, %s515
                  %p647 = scmp.ge.s32.totalorder %s646, %s506
                  %s648 = scalar_select %p647, 0, %s646
                  %s649 = smul.u32 %s648, 16
                  %s650 = smul.u32 %s648, 16
                  %s651 = scalar_lea.vmem %s167, %s649
                  %s652 = scalar_lea.vmem %s157, %s650 [#allocation2]
                $region70: #{tpu_custom_call.1} parent=64 // loop_footer
                  %s512 = sadd.s32 %s510, 1
                $region71: #{tpu_custom_call.1} parent=64 // loop_footer_branch
                  %509 = sbr.rel target = $region67
                $region72: #{tpu_custom_call.1} parent=64 // loop_exit
                  _
                %s653 = sshrl.u32 %s505, 1
                %s654 = sand.u32 %s505, 1
                %s655 = smul.u32 %s653, 2
                %s656 = smul.u32 128, %s655
                %s657 = sshra.s32 %s656, 4
                %s658 = scalar_lea.vmem %s167, %s657
                %s659 = smul.u32 128, %s655
                %s660 = sshra.s32 %s659, 4
                %s661 = scalar_lea.vmem %s157, %s660 [#allocation2]
                // While loop
                $region73: #{tpu_custom_call.1} parent=64 // loop_pre_header
                  _
                $region74: #{tpu_custom_call.1} parent=64 // loop_header
                  %s665 = sphi 0, %s667
                  %p666 = scmp.ge.s32.totalorder %s665, %s654
                  %s670 = sphi 0, %s739
                  %s671 = sphi %s658, %s742
                  %s672 = sphi %s661, %s743
                $region75: #{tpu_custom_call.1} parent=64 // loop_header_branch
                  %669 = sbr.rel (%p666) target = $region79
                $region76: #{tpu_custom_call.1} parent=64 // loop_body
                  %v673 = vld [vmem:[%s671] sm:$0xff]
                  %674 = vst [vmem:[%s672] sm:$0xff] %v673
                  %v675 = vld [vmem:[%s671 + $0xc8] sm:$0xff]
                  %676 = vst [vmem:[%s672 + $0x68] sm:$0xff] %v675
                  %v677 = vld [vmem:[%s671 + $0x190] sm:$0xff]
                  %678 = vst [vmem:[%s672 + $0xd0] sm:$0xff] %v677
                  %v679 = vld [vmem:[%s671 + $0x258] sm:$0xff]
                  %680 = vst [vmem:[%s672 + $0x138] sm:$0xff] %v679
                  %v681 = vld [vmem:[%s671 + $0x320] sm:$0xff]
                  %682 = vst [vmem:[%s672 + $0x1a0] sm:$0xff] %v681
                  %v683 = vld [vmem:[%s671 + $0x3e8] sm:$0xff]
                  %684 = vst [vmem:[%s672 + $0x208] sm:$0xff] %v683
                  %v685 = vld [vmem:[%s671 + $0x4b0] sm:$0xff]
                  %686 = vst [vmem:[%s672 + $0x270] sm:$0xff] %v685
                  %v687 = vld [vmem:[%s671 + $0x578] sm:$0xff]
                  %688 = vst [vmem:[%s672 + $0x2d8] sm:$0xff] %v687
                  %v689 = vld [vmem:[%s671 + $0x640] sm:$0xff]
                  %690 = vst [vmem:[%s672 + $0x340] sm:$0xff] %v689
                  %v691 = vld [vmem:[%s671 + $0x708] sm:$0xff]
                  %692 = vst [vmem:[%s672 + $0x3a8] sm:$0xff] %v691
                  %v693 = vld [vmem:[%s671 + $0x7d0] sm:$0xff]
                  %694 = vst [vmem:[%s672 + $0x410] sm:$0xff] %v693
                  %v695 = vld [vmem:[%s671 + $0x898] sm:$0xff]
                  %696 = vst [vmem:[%s672 + $0x478] sm:$0xff] %v695
                  %v697 = vld [vmem:[%s671 + $0x960] sm:$0xff]
                  %698 = vst [vmem:[%s672 + $0x4e0] sm:$0xff] %v697
                  %v699 = vld [vmem:[%s671 + $0xa28] sm:$0xff]
                  %700 = vst [vmem:[%s672 + $0x548] sm:$0xff] %v699
                  %v701 = vld [vmem:[%s671 + $0xaf0] sm:$0xff]
                  %702 = vst [vmem:[%s672 + $0x5b0] sm:$0xff] %v701
                  %v703 = vld [vmem:[%s671 + $0xbb8] sm:$0xff]
                  %704 = vst [vmem:[%s672 + $0x618] sm:$0xff] %v703
                  %v705 = vld [vmem:[%s671 + $0xc80] sm:$0xff]
                  %706 = vst [vmem:[%s672 + $0x680] sm:$0xff] %v705
                  %v707 = vld [vmem:[%s671 + $0xd48] sm:$0xff]
                  %708 = vst [vmem:[%s672 + $0x6e8] sm:$0xff] %v707
                  %v709 = vld [vmem:[%s671 + $0xe10] sm:$0xff]
                  %710 = vst [vmem:[%s672 + $0x750] sm:$0xff] %v709
                  %v711 = vld [vmem:[%s671 + $0xed8] sm:$0xff]
                  %712 = vst [vmem:[%s672 + $0x7b8] sm:$0xff] %v711
                  %v713 = vld [vmem:[%s671 + $0xfa0] sm:$0xff]
                  %714 = vst [vmem:[%s672 + $0x820] sm:$0xff] %v713
                  %v715 = vld [vmem:[%s671 + $0x1068] sm:$0xff]
                  %716 = vst [vmem:[%s672 + $0x888] sm:$0xff] %v715
                  %v717 = vld [vmem:[%s671 + $0x1130] sm:$0xff]
                  %718 = vst [vmem:[%s672 + $0x8f0] sm:$0xff] %v717
                  %v719 = vld [vmem:[%s671 + $0x11f8] sm:$0xff]
                  %720 = vst [vmem:[%s672 + $0x958] sm:$0xff] %v719
                  %v721 = vld [vmem:[%s671 + $0x12c0] sm:$0xff]
                  %722 = vst [vmem:[%s672 + $0x9c0] sm:$0xff] %v721
                  %v723 = vld [vmem:[%s671 + $0x1388] sm:$0xff]
                  %724 = vst [vmem:[%s672 + $0xa28] sm:$0xff] %v723
                  %v725 = vld [vmem:[%s671 + $0x1450] sm:$0xff]
                  %726 = vst [vmem:[%s672 + $0xa90] sm:$0xff] %v725
                  %v727 = vld [vmem:[%s671 + $0x1518] sm:$0xff]
                  %728 = vst [vmem:[%s672 + $0xaf8] sm:$0xff] %v727
                  %v729 = vld [vmem:[%s671 + $0x15e0] sm:$0xff]
                  %730 = vst [vmem:[%s672 + $0xb60] sm:$0xff] %v729
                  %v731 = vld [vmem:[%s671 + $0x16a8] sm:$0xff]
                  %732 = vst [vmem:[%s672 + $0xbc8] sm:$0xff] %v731
                  %v733 = vld [vmem:[%s671 + $0x1770] sm:$0xff]
                  %734 = vst [vmem:[%s672 + $0xc30] sm:$0xff] %v733
                  %v735 = vld [vmem:[%s671 + $0x1838] sm:$0xff]
                  %736 = vst [vmem:[%s672 + $0xc98] sm:$0xff] %v735
                  %s737 = sadd.s32 1, %s670
                  %p738 = scmp.ge.s32.totalorder %s737, %s654
                  %s739 = scalar_select %p738, 0, %s737
                  %s740 = smul.u32 %s739, 8
                  %s741 = smul.u32 %s739, 8
                  %s742 = scalar_lea.vmem %s658, %s740
                  %s743 = scalar_lea.vmem %s661, %s741 [#allocation2]
                $region77: #{tpu_custom_call.1} parent=64 // loop_footer
                  %s667 = sadd.s32 %s665, 1
                $region78: #{tpu_custom_call.1} parent=64 // loop_footer_branch
                  %664 = sbr.rel target = $region74
                $region79: #{tpu_custom_call.1} parent=64 // loop_exit
                  _
                %s744 = sshll.u32 1, %s500
                %s745 = ssub.s32 %s744, 1
                loop: start=0, step=1, limit=1
                $region80: #{tpu_custom_call.1} parent=64 // loop_pre_header
                  _
                $region81: #{tpu_custom_call.1} parent=64 // loop_header
                  %s747 = sphi 0, %s751
                  %p748 = scmp.ge.s32.totalorder %s747, 1
                  %s752 = sphi %s502, %s502
                  %s753 = sphi %s504, %s504
                $region82: #{tpu_custom_call.1} parent=64 // loop_header_branch
                  %750 = sbr.rel (%p748) target = $region86
                $region83: #{tpu_custom_call.1} parent=64 // loop_body
                  %v754 = vld [vmem:[%s752] sm:%s745]
                  %755 = vst [vmem:[%s753] sm:%s745] %v754
                  %v756 = vld [vmem:[%s752 + $0xc8] sm:%s745]
                  %757 = vst [vmem:[%s753 + $0x68] sm:%s745] %v756
                  %v758 = vld [vmem:[%s752 + $0x190] sm:%s745]
                  %759 = vst [vmem:[%s753 + $0xd0] sm:%s745] %v758
                  %v760 = vld [vmem:[%s752 + $0x258] sm:%s745]
                  %761 = vst [vmem:[%s753 + $0x138] sm:%s745] %v760
                  %v762 = vld [vmem:[%s752 + $0x320] sm:%s745]
                  %763 = vst [vmem:[%s753 + $0x1a0] sm:%s745] %v762
                  %v764 = vld [vmem:[%s752 + $0x3e8] sm:%s745]
                  %765 = vst [vmem:[%s753 + $0x208] sm:%s745] %v764
                  %v766 = vld [vmem:[%s752 + $0x4b0] sm:%s745]
                  %767 = vst [vmem:[%s753 + $0x270] sm:%s745] %v766
                  %v768 = vld [vmem:[%s752 + $0x578] sm:%s745]
                  %769 = vst [vmem:[%s753 + $0x2d8] sm:%s745] %v768
                  %v770 = vld [vmem:[%s752 + $0x640] sm:%s745]
                  %771 = vst [vmem:[%s753 + $0x340] sm:%s745] %v770
                  %v772 = vld [vmem:[%s752 + $0x708] sm:%s745]
                  %773 = vst [vmem:[%s753 + $0x3a8] sm:%s745] %v772
                  %v774 = vld [vmem:[%s752 + $0x7d0] sm:%s745]
                  %775 = vst [vmem:[%s753 + $0x410] sm:%s745] %v774
                  %v776 = vld [vmem:[%s752 + $0x898] sm:%s745]
                  %777 = vst [vmem:[%s753 + $0x478] sm:%s745] %v776
                  %v778 = vld [vmem:[%s752 + $0x960] sm:%s745]
                  %779 = vst [vmem:[%s753 + $0x4e0] sm:%s745] %v778
                  %v780 = vld [vmem:[%s752 + $0xa28] sm:%s745]
                  %781 = vst [vmem:[%s753 + $0x548] sm:%s745] %v780
                  %v782 = vld [vmem:[%s752 + $0xaf0] sm:%s745]
                  %783 = vst [vmem:[%s753 + $0x5b0] sm:%s745] %v782
                  %v784 = vld [vmem:[%s752 + $0xbb8] sm:%s745]
                  %785 = vst [vmem:[%s753 + $0x618] sm:%s745] %v784
                  %v786 = vld [vmem:[%s752 + $0xc80] sm:%s745]
                  %787 = vst [vmem:[%s753 + $0x680] sm:%s745] %v786
                  %v788 = vld [vmem:[%s752 + $0xd48] sm:%s745]
                  %789 = vst [vmem:[%s753 + $0x6e8] sm:%s745] %v788
                  %v790 = vld [vmem:[%s752 + $0xe10] sm:%s745]
                  %791 = vst [vmem:[%s753 + $0x750] sm:%s745] %v790
                  %v792 = vld [vmem:[%s752 + $0xed8] sm:%s745]
                  %793 = vst [vmem:[%s753 + $0x7b8] sm:%s745] %v792
                  %v794 = vld [vmem:[%s752 + $0xfa0] sm:%s745]
                  %795 = vst [vmem:[%s753 + $0x820] sm:%s745] %v794
                  %v796 = vld [vmem:[%s752 + $0x1068] sm:%s745]
                  %797 = vst [vmem:[%s753 + $0x888] sm:%s745] %v796
                  %v798 = vld [vmem:[%s752 + $0x1130] sm:%s745]
                  %799 = vst [vmem:[%s753 + $0x8f0] sm:%s745] %v798
                  %v800 = vld [vmem:[%s752 + $0x11f8] sm:%s745]
                  %801 = vst [vmem:[%s753 + $0x958] sm:%s745] %v800
                  %v802 = vld [vmem:[%s752 + $0x12c0] sm:%s745]
                  %803 = vst [vmem:[%s753 + $0x9c0] sm:%s745] %v802
                  %v804 = vld [vmem:[%s752 + $0x1388] sm:%s745]
                  %805 = vst [vmem:[%s753 + $0xa28] sm:%s745] %v804
                  %v806 = vld [vmem:[%s752 + $0x1450] sm:%s745]
                  %807 = vst [vmem:[%s753 + $0xa90] sm:%s745] %v806
                  %v808 = vld [vmem:[%s752 + $0x1518] sm:%s745]
                  %809 = vst [vmem:[%s753 + $0xaf8] sm:%s745] %v808
                  %v810 = vld [vmem:[%s752 + $0x15e0] sm:%s745]
                  %811 = vst [vmem:[%s753 + $0xb60] sm:%s745] %v810
                  %v812 = vld [vmem:[%s752 + $0x16a8] sm:%s745]
                  %813 = vst [vmem:[%s753 + $0xbc8] sm:%s745] %v812
                  %v814 = vld [vmem:[%s752 + $0x1770] sm:%s745]
                  %815 = vst [vmem:[%s753 + $0xc30] sm:%s745] %v814
                  %v816 = vld [vmem:[%s752 + $0x1838] sm:%s745]
                  %817 = vst [vmem:[%s753 + $0xc98] sm:%s745] %v816
                $region84: #{tpu_custom_call.1} parent=64 // loop_footer
                  %s751 = sadd.s32 1, %s747
                $region85: #{tpu_custom_call.1} parent=64 // loop_footer_branch
                  %746 = sbr.rel target = $region81
                $region86: #{tpu_custom_call.1} parent=64 // loop_exit
                  _
              $region65: #{tpu_custom_call.1} parent=31 // pred_fallthru
                _
            $region32: #{tpu_custom_call.1} parent=27 // pred_fallthru
              _
            // Predicated region
            $region33: #{tpu_custom_call.1} parent=27 // pred_check
              %p176 = pneg %p172
            $region34: #{tpu_custom_call.1} parent=27 // pred_check_branch
              %178 = sbr.rel (%p176) target = $region36
            $region35: #{tpu_custom_call.1} parent=27 // pred_region
              %s179 = sshll.u32 1, %s168
              %s180 = ssub.s32 %s179, 1
              loop: start=0, step=1, limit=1
              $region37: #{tpu_custom_call.1} parent=35 // loop_pre_header
                _
              $region38: #{tpu_custom_call.1} parent=35 // loop_header
                %s182 = sphi 0, %s186
                %p183 = scmp.ge.s32.totalorder %s182, 1
                %s187 = sphi %s167, %s167
                %s188 = sphi %s157, %s157
              $region39: #{tpu_custom_call.1} parent=35 // loop_header_branch
                %185 = sbr.rel (%p183) target = $region43
              $region40: #{tpu_custom_call.1} parent=35 // loop_body
                %v189 = vld [vmem:[%s187] sm:%s180]
                %190 = vst [vmem:[%s188] sm:%s180] %v189
                %v191 = vld [vmem:[%s187 + $0xc8] sm:%s180]
                %192 = vst [vmem:[%s188 + $0x68] sm:%s180] %v191
                %v193 = vld [vmem:[%s187 + $0x190] sm:%s180]
                %194 = vst [vmem:[%s188 + $0xd0] sm:%s180] %v193
                %v195 = vld [vmem:[%s187 + $0x258] sm:%s180]
                %196 = vst [vmem:[%s188 + $0x138] sm:%s180] %v195
                %v197 = vld [vmem:[%s187 + $0x320] sm:%s180]
                %198 = vst [vmem:[%s188 + $0x1a0] sm:%s180] %v197
                %v199 = vld [vmem:[%s187 + $0x3e8] sm:%s180]
                %200 = vst [vmem:[%s188 + $0x208] sm:%s180] %v199
                %v201 = vld [vmem:[%s187 + $0x4b0] sm:%s180]
                %202 = vst [vmem:[%s188 + $0x270] sm:%s180] %v201
                %v203 = vld [vmem:[%s187 + $0x578] sm:%s180]
                %204 = vst [vmem:[%s188 + $0x2d8] sm:%s180] %v203
                %v205 = vld [vmem:[%s187 + $0x640] sm:%s180]
                %206 = vst [vmem:[%s188 + $0x340] sm:%s180] %v205
                %v207 = vld [vmem:[%s187 + $0x708] sm:%s180]
                %208 = vst [vmem:[%s188 + $0x3a8] sm:%s180] %v207
                %v209 = vld [vmem:[%s187 + $0x7d0] sm:%s180]
                %210 = vst [vmem:[%s188 + $0x410] sm:%s180] %v209
                %v211 = vld [vmem:[%s187 + $0x898] sm:%s180]
                %212 = vst [vmem:[%s188 + $0x478] sm:%s180] %v211
                %v213 = vld [vmem:[%s187 + $0x960] sm:%s180]
                %214 = vst [vmem:[%s188 + $0x4e0] sm:%s180] %v213
                %v215 = vld [vmem:[%s187 + $0xa28] sm:%s180]
                %216 = vst [vmem:[%s188 + $0x548] sm:%s180] %v215
                %v217 = vld [vmem:[%s187 + $0xaf0] sm:%s180]
                %218 = vst [vmem:[%s188 + $0x5b0] sm:%s180] %v217
                %v219 = vld [vmem:[%s187 + $0xbb8] sm:%s180]
                %220 = vst [vmem:[%s188 + $0x618] sm:%s180] %v219
                %v221 = vld [vmem:[%s187 + $0xc80] sm:%s180]
                %222 = vst [vmem:[%s188 + $0x680] sm:%s180] %v221
                %v223 = vld [vmem:[%s187 + $0xd48] sm:%s180]
                %224 = vst [vmem:[%s188 + $0x6e8] sm:%s180] %v223
                %v225 = vld [vmem:[%s187 + $0xe10] sm:%s180]
                %226 = vst [vmem:[%s188 + $0x750] sm:%s180] %v225
                %v227 = vld [vmem:[%s187 + $0xed8] sm:%s180]
                %228 = vst [vmem:[%s188 + $0x7b8] sm:%s180] %v227
                %v229 = vld [vmem:[%s187 + $0xfa0] sm:%s180]
                %230 = vst [vmem:[%s188 + $0x820] sm:%s180] %v229
                %v231 = vld [vmem:[%s187 + $0x1068] sm:%s180]
                %232 = vst [vmem:[%s188 + $0x888] sm:%s180] %v231
                %v233 = vld [vmem:[%s187 + $0x1130] sm:%s180]
                %234 = vst [vmem:[%s188 + $0x8f0] sm:%s180] %v233
                %v235 = vld [vmem:[%s187 + $0x11f8] sm:%s180]
                %236 = vst [vmem:[%s188 + $0x958] sm:%s180] %v235
                %v237 = vld [vmem:[%s187 + $0x12c0] sm:%s180]
                %238 = vst [vmem:[%s188 + $0x9c0] sm:%s180] %v237
                %v239 = vld [vmem:[%s187 + $0x1388] sm:%s180]
                %240 = vst [vmem:[%s188 + $0xa28] sm:%s180] %v239
                %v241 = vld [vmem:[%s187 + $0x1450] sm:%s180]
                %242 = vst [vmem:[%s188 + $0xa90] sm:%s180] %v241
                %v243 = vld [vmem:[%s187 + $0x1518] sm:%s180]
                %244 = vst [vmem:[%s188 + $0xaf8] sm:%s180] %v243
                %v245 = vld [vmem:[%s187 + $0x15e0] sm:%s180]
                %246 = vst [vmem:[%s188 + $0xb60] sm:%s180] %v245
                %v247 = vld [vmem:[%s187 + $0x16a8] sm:%s180]
                %248 = vst [vmem:[%s188 + $0xbc8] sm:%s180] %v247
                %v249 = vld [vmem:[%s187 + $0x1770] sm:%s180]
                %250 = vst [vmem:[%s188 + $0xc30] sm:%s180] %v249
                %v251 = vld [vmem:[%s187 + $0x1838] sm:%s180]
                %252 = vst [vmem:[%s188 + $0xc98] sm:%s180] %v251
              $region41: #{tpu_custom_call.1} parent=35 // loop_footer
                %s186 = sadd.s32 1, %s182
              $region42: #{tpu_custom_call.1} parent=35 // loop_footer_branch
                %181 = sbr.rel target = $region38
              $region43: #{tpu_custom_call.1} parent=35 // loop_exit
                _
            $region36: #{tpu_custom_call.1} parent=27 // pred_fallthru
              _
          $region28: #{tpu_custom_call.1} parent=23 // pred_fallthru
            _
          %818 = vnop
        $region24: #{tpu_custom_call.1} parent=19 // pred_fallthru
          _
        // Predicated region
        $region87: #{tpu_custom_call.1} parent=19 // pred_check
          %p819 = pneg %p74
        $region88: #{tpu_custom_call.1} parent=19 // pred_check_branch
          %821 = sbr.rel (%p819) target = $region90
        $region89: #{tpu_custom_call.1} parent=19 // pred_region
          %s822 = sand.u32 %s64, 1
          %s823 = sand.u32 %s64, 1
          %s824 = smul.addr %s823, 3328
          %s825 = scalar_lea.vmem [#allocation3], %s824
          %s826 = smul.u32 13, %s20
          %s827 = ssub.s32 25, %s826
          %p828 = scmp.lt.s32.totalorder %s827, 13
          %s829 = scalar_select %p828, %s827, 13
          %s830 = smul.u32 4096, %s829
          %p831 = scmp.ne.s32.totalorder 0, %s830
          %s832 = smul.addr %s19, 800
          %s833 = sadd.s32 %s826, %s832
          %s834 = smul.addr %s833, 8
          %s835 = scalar_lea.vmem %s1, %s834
          %s836 = smul.u32 %s829, 8
          // Predicated region
          $region91: #{tpu_custom_call.1} parent=89 // pred_check
            %p837 = pneg %p831
          $region92: #{tpu_custom_call.1} parent=89 // pred_check_branch
            %839 = sbr.rel (%p837) target = $region94
          $region93: #{tpu_custom_call.1} parent=89 // pred_region
            %p840 = scmp.lt.u32.totalorder %s836, 8
            %p841 = pneg %p840
            // Predicated region
            $region95: #{tpu_custom_call.1} parent=93 // pred_check
              _
            $region96: #{tpu_custom_call.1} parent=93 // pred_check_branch
              %843 = sbr.rel (%p840) target = $region98
            $region97: #{tpu_custom_call.1} parent=93 // pred_region
              %s921 = sand.u32 %s836, 7
              %p922 = scmp.eq.s32.totalorder %s921, 0
              // Predicated region
              $region110: #{tpu_custom_call.1} parent=97 // pred_check
                %p923 = pneg %p922
              $region111: #{tpu_custom_call.1} parent=97 // pred_check_branch
                %925 = sbr.rel (%p923) target = $region113
              $region112: #{tpu_custom_call.1} parent=97 // pred_region
                %s926 = sshrl.u32 %s836, 3
                %s927 = sshrl.u32 %s926, 1
                // While loop
                $region114: #{tpu_custom_call.1} parent=112 // loop_pre_header
                  _
                $region115: #{tpu_custom_call.1} parent=112 // loop_header
                  %s931 = sphi 0, %s933
                  %p932 = scmp.ge.s32.totalorder %s931, %s927
                  %s936 = sphi 0, %s1069
                  %s937 = sphi %s835, %s1072
                  %s938 = sphi %s825, %s1073
                $region116: #{tpu_custom_call.1} parent=112 // loop_header_branch
                  %935 = sbr.rel (%p932) target = $region120
                $region117: #{tpu_custom_call.1} parent=112 // loop_body
                  %v939 = vld [vmem:[%s937] sm:$0xff]
                  %940 = vst [vmem:[%s938] sm:$0xff] %v939
                  %v941 = vld [vmem:[%s937 + $0x8] sm:$0xff]
                  %942 = vst [vmem:[%s938 + $0x8] sm:$0xff] %v941
                  %v943 = vld [vmem:[%s937 + $0xc8] sm:$0xff]
                  %944 = vst [vmem:[%s938 + $0x68] sm:$0xff] %v943
                  %v945 = vld [vmem:[%s937 + $0xd0] sm:$0xff]
                  %946 = vst [vmem:[%s938 + $0x70] sm:$0xff] %v945
                  %v947 = vld [vmem:[%s937 + $0x190] sm:$0xff]
                  %948 = vst [vmem:[%s938 + $0xd0] sm:$0xff] %v947
                  %v949 = vld [vmem:[%s937 + $0x198] sm:$0xff]
                  %950 = vst [vmem:[%s938 + $0xd8] sm:$0xff] %v949
                  %v951 = vld [vmem:[%s937 + $0x258] sm:$0xff]
                  %952 = vst [vmem:[%s938 + $0x138] sm:$0xff] %v951
                  %v953 = vld [vmem:[%s937 + $0x260] sm:$0xff]
                  %954 = vst [vmem:[%s938 + $0x140] sm:$0xff] %v953
                  %v955 = vld [vmem:[%s937 + $0x320] sm:$0xff]
                  %956 = vst [vmem:[%s938 + $0x1a0] sm:$0xff] %v955
                  %v957 = vld [vmem:[%s937 + $0x328] sm:$0xff]
                  %958 = vst [vmem:[%s938 + $0x1a8] sm:$0xff] %v957
                  %v959 = vld [vmem:[%s937 + $0x3e8] sm:$0xff]
                  %960 = vst [vmem:[%s938 + $0x208] sm:$0xff] %v959
                  %v961 = vld [vmem:[%s937 + $0x3f0] sm:$0xff]
                  %962 = vst [vmem:[%s938 + $0x210] sm:$0xff] %v961
                  %v963 = vld [vmem:[%s937 + $0x4b0] sm:$0xff]
                  %964 = vst [vmem:[%s938 + $0x270] sm:$0xff] %v963
                  %v965 = vld [vmem:[%s937 + $0x4b8] sm:$0xff]
                  %966 = vst [vmem:[%s938 + $0x278] sm:$0xff] %v965
                  %v967 = vld [vmem:[%s937 + $0x578] sm:$0xff]
                  %968 = vst [vmem:[%s938 + $0x2d8] sm:$0xff] %v967
                  %v969 = vld [vmem:[%s937 + $0x580] sm:$0xff]
                  %970 = vst [vmem:[%s938 + $0x2e0] sm:$0xff] %v969
                  %v971 = vld [vmem:[%s937 + $0x640] sm:$0xff]
                  %972 = vst [vmem:[%s938 + $0x340] sm:$0xff] %v971
                  %v973 = vld [vmem:[%s937 + $0x648] sm:$0xff]
                  %974 = vst [vmem:[%s938 + $0x348] sm:$0xff] %v973
                  %v975 = vld [vmem:[%s937 + $0x708] sm:$0xff]
                  %976 = vst [vmem:[%s938 + $0x3a8] sm:$0xff] %v975
                  %v977 = vld [vmem:[%s937 + $0x710] sm:$0xff]
                  %978 = vst [vmem:[%s938 + $0x3b0] sm:$0xff] %v977
                  %v979 = vld [vmem:[%s937 + $0x7d0] sm:$0xff]
                  %980 = vst [vmem:[%s938 + $0x410] sm:$0xff] %v979
                  %v981 = vld [vmem:[%s937 + $0x7d8] sm:$0xff]
                  %982 = vst [vmem:[%s938 + $0x418] sm:$0xff] %v981
                  %v983 = vld [vmem:[%s937 + $0x898] sm:$0xff]
                  %984 = vst [vmem:[%s938 + $0x478] sm:$0xff] %v983
                  %v985 = vld [vmem:[%s937 + $0x8a0] sm:$0xff]
                  %986 = vst [vmem:[%s938 + $0x480] sm:$0xff] %v985
                  %v987 = vld [vmem:[%s937 + $0x960] sm:$0xff]
                  %988 = vst [vmem:[%s938 + $0x4e0] sm:$0xff] %v987
                  %v989 = vld [vmem:[%s937 + $0x968] sm:$0xff]
                  %990 = vst [vmem:[%s938 + $0x4e8] sm:$0xff] %v989
                  %v991 = vld [vmem:[%s937 + $0xa28] sm:$0xff]
                  %992 = vst [vmem:[%s938 + $0x548] sm:$0xff] %v991
                  %v993 = vld [vmem:[%s937 + $0xa30] sm:$0xff]
                  %994 = vst [vmem:[%s938 + $0x550] sm:$0xff] %v993
                  %v995 = vld [vmem:[%s937 + $0xaf0] sm:$0xff]
                  %996 = vst [vmem:[%s938 + $0x5b0] sm:$0xff] %v995
                  %v997 = vld [vmem:[%s937 + $0xaf8] sm:$0xff]
                  %998 = vst [vmem:[%s938 + $0x5b8] sm:$0xff] %v997
                  %v999 = vld [vmem:[%s937 + $0xbb8] sm:$0xff]
                  %1000 = vst [vmem:[%s938 + $0x618] sm:$0xff] %v999
                  %v1001 = vld [vmem:[%s937 + $0xbc0] sm:$0xff]
                  %1002 = vst [vmem:[%s938 + $0x620] sm:$0xff] %v1001
                  %v1003 = vld [vmem:[%s937 + $0xc80] sm:$0xff]
                  %1004 = vst [vmem:[%s938 + $0x680] sm:$0xff] %v1003
                  %v1005 = vld [vmem:[%s937 + $0xc88] sm:$0xff]
                  %1006 = vst [vmem:[%s938 + $0x688] sm:$0xff] %v1005
                  %v1007 = vld [vmem:[%s937 + $0xd48] sm:$0xff]
                  %1008 = vst [vmem:[%s938 + $0x6e8] sm:$0xff] %v1007
                  %v1009 = vld [vmem:[%s937 + $0xd50] sm:$0xff]
                  %1010 = vst [vmem:[%s938 + $0x6f0] sm:$0xff] %v1009
                  %v1011 = vld [vmem:[%s937 + $0xe10] sm:$0xff]
                  %1012 = vst [vmem:[%s938 + $0x750] sm:$0xff] %v1011
                  %v1013 = vld [vmem:[%s937 + $0xe18] sm:$0xff]
                  %1014 = vst [vmem:[%s938 + $0x758] sm:$0xff] %v1013
                  %v1015 = vld [vmem:[%s937 + $0xed8] sm:$0xff]
                  %1016 = vst [vmem:[%s938 + $0x7b8] sm:$0xff] %v1015
                  %v1017 = vld [vmem:[%s937 + $0xee0] sm:$0xff]
                  %1018 = vst [vmem:[%s938 + $0x7c0] sm:$0xff] %v1017
                  %v1019 = vld [vmem:[%s937 + $0xfa0] sm:$0xff]
                  %1020 = vst [vmem:[%s938 + $0x820] sm:$0xff] %v1019
                  %v1021 = vld [vmem:[%s937 + $0xfa8] sm:$0xff]
                  %1022 = vst [vmem:[%s938 + $0x828] sm:$0xff] %v1021
                  %v1023 = vld [vmem:[%s937 + $0x1068] sm:$0xff]
                  %1024 = vst [vmem:[%s938 + $0x888] sm:$0xff] %v1023
                  %v1025 = vld [vmem:[%s937 + $0x1070] sm:$0xff]
                  %1026 = vst [vmem:[%s938 + $0x890] sm:$0xff] %v1025
                  %v1027 = vld [vmem:[%s937 + $0x1130] sm:$0xff]
                  %1028 = vst [vmem:[%s938 + $0x8f0] sm:$0xff] %v1027
                  %v1029 = vld [vmem:[%s937 + $0x1138] sm:$0xff]
                  %1030 = vst [vmem:[%s938 + $0x8f8] sm:$0xff] %v1029
                  %v1031 = vld [vmem:[%s937 + $0x11f8] sm:$0xff]
                  %1032 = vst [vmem:[%s938 + $0x958] sm:$0xff] %v1031
                  %v1033 = vld [vmem:[%s937 + $0x1200] sm:$0xff]
                  %1034 = vst [vmem:[%s938 + $0x960] sm:$0xff] %v1033
                  %v1035 = vld [vmem:[%s937 + $0x12c0] sm:$0xff]
                  %1036 = vst [vmem:[%s938 + $0x9c0] sm:$0xff] %v1035
                  %v1037 = vld [vmem:[%s937 + $0x12c8] sm:$0xff]
                  %1038 = vst [vmem:[%s938 + $0x9c8] sm:$0xff] %v1037
                  %v1039 = vld [vmem:[%s937 + $0x1388] sm:$0xff]
                  %1040 = vst [vmem:[%s938 + $0xa28] sm:$0xff] %v1039
                  %v1041 = vld [vmem:[%s937 + $0x1390] sm:$0xff]
                  %1042 = vst [vmem:[%s938 + $0xa30] sm:$0xff] %v1041
                  %v1043 = vld [vmem:[%s937 + $0x1450] sm:$0xff]
                  %1044 = vst [vmem:[%s938 + $0xa90] sm:$0xff] %v1043
                  %v1045 = vld [vmem:[%s937 + $0x1458] sm:$0xff]
                  %1046 = vst [vmem:[%s938 + $0xa98] sm:$0xff] %v1045
                  %v1047 = vld [vmem:[%s937 + $0x1518] sm:$0xff]
                  %1048 = vst [vmem:[%s938 + $0xaf8] sm:$0xff] %v1047
                  %v1049 = vld [vmem:[%s937 + $0x1520] sm:$0xff]
                  %1050 = vst [vmem:[%s938 + $0xb00] sm:$0xff] %v1049
                  %v1051 = vld [vmem:[%s937 + $0x15e0] sm:$0xff]
                  %1052 = vst [vmem:[%s938 + $0xb60] sm:$0xff] %v1051
                  %v1053 = vld [vmem:[%s937 + $0x15e8] sm:$0xff]
                  %1054 = vst [vmem:[%s938 + $0xb68] sm:$0xff] %v1053
                  %v1055 = vld [vmem:[%s937 + $0x16a8] sm:$0xff]
                  %1056 = vst [vmem:[%s938 + $0xbc8] sm:$0xff] %v1055
                  %v1057 = vld [vmem:[%s937 + $0x16b0] sm:$0xff]
                  %1058 = vst [vmem:[%s938 + $0xbd0] sm:$0xff] %v1057
                  %v1059 = vld [vmem:[%s937 + $0x1770] sm:$0xff]
                  %1060 = vst [vmem:[%s938 + $0xc30] sm:$0xff] %v1059
                  %v1061 = vld [vmem:[%s937 + $0x1778] sm:$0xff]
                  %1062 = vst [vmem:[%s938 + $0xc38] sm:$0xff] %v1061
                  %v1063 = vld [vmem:[%s937 + $0x1838] sm:$0xff]
                  %1064 = vst [vmem:[%s938 + $0xc98] sm:$0xff] %v1063
                  %v1065 = vld [vmem:[%s937 + $0x1840] sm:$0xff]
                  %1066 = vst [vmem:[%s938 + $0xca0] sm:$0xff] %v1065
                  %s1067 = sadd.s32 1, %s936
                  %p1068 = scmp.ge.s32.totalorder %s1067, %s927
                  %s1069 = scalar_select %p1068, 0, %s1067
                  %s1070 = smul.u32 %s1069, 16
                  %s1071 = smul.u32 %s1069, 16
                  %s1072 = scalar_lea.vmem %s835, %s1070
                  %s1073 = scalar_lea.vmem %s825, %s1071 [#allocation3]
                $region118: #{tpu_custom_call.1} parent=112 // loop_footer
                  %s933 = sadd.s32 %s931, 1
                $region119: #{tpu_custom_call.1} parent=112 // loop_footer_branch
                  %930 = sbr.rel target = $region115
                $region120: #{tpu_custom_call.1} parent=112 // loop_exit
                  _
                %s1074 = sshrl.u32 %s926, 1
                %s1075 = sand.u32 %s926, 1
                %s1076 = smul.u32 %s1074, 2
                %s1077 = smul.u32 128, %s1076
                %s1078 = sshra.s32 %s1077, 4
                %s1079 = scalar_lea.vmem %s835, %s1078
                %s1080 = smul.u32 128, %s1076
                %s1081 = sshra.s32 %s1080, 4
                %s1082 = scalar_lea.vmem %s825, %s1081 [#allocation3]
                // While loop
                $region121: #{tpu_custom_call.1} parent=112 // loop_pre_header
                  _
                $region122: #{tpu_custom_call.1} parent=112 // loop_header
                  %s1086 = sphi 0, %s1088
                  %p1087 = scmp.ge.s32.totalorder %s1086, %s1075
                  %s1091 = sphi 0, %s1160
                  %s1092 = sphi %s1079, %s1163
                  %s1093 = sphi %s1082, %s1164
                $region123: #{tpu_custom_call.1} parent=112 // loop_header_branch
                  %1090 = sbr.rel (%p1087) target = $region127
                $region124: #{tpu_custom_call.1} parent=112 // loop_body
                  %v1094 = vld [vmem:[%s1092] sm:$0xff]
                  %1095 = vst [vmem:[%s1093] sm:$0xff] %v1094
                  %v1096 = vld [vmem:[%s1092 + $0xc8] sm:$0xff]
                  %1097 = vst [vmem:[%s1093 + $0x68] sm:$0xff] %v1096
                  %v1098 = vld [vmem:[%s1092 + $0x190] sm:$0xff]
                  %1099 = vst [vmem:[%s1093 + $0xd0] sm:$0xff] %v1098
                  %v1100 = vld [vmem:[%s1092 + $0x258] sm:$0xff]
                  %1101 = vst [vmem:[%s1093 + $0x138] sm:$0xff] %v1100
                  %v1102 = vld [vmem:[%s1092 + $0x320] sm:$0xff]
                  %1103 = vst [vmem:[%s1093 + $0x1a0] sm:$0xff] %v1102
                  %v1104 = vld [vmem:[%s1092 + $0x3e8] sm:$0xff]
                  %1105 = vst [vmem:[%s1093 + $0x208] sm:$0xff] %v1104
                  %v1106 = vld [vmem:[%s1092 + $0x4b0] sm:$0xff]
                  %1107 = vst [vmem:[%s1093 + $0x270] sm:$0xff] %v1106
                  %v1108 = vld [vmem:[%s1092 + $0x578] sm:$0xff]
                  %1109 = vst [vmem:[%s1093 + $0x2d8] sm:$0xff] %v1108
                  %v1110 = vld [vmem:[%s1092 + $0x640] sm:$0xff]
                  %1111 = vst [vmem:[%s1093 + $0x340] sm:$0xff] %v1110
                  %v1112 = vld [vmem:[%s1092 + $0x708] sm:$0xff]
                  %1113 = vst [vmem:[%s1093 + $0x3a8] sm:$0xff] %v1112
                  %v1114 = vld [vmem:[%s1092 + $0x7d0] sm:$0xff]
                  %1115 = vst [vmem:[%s1093 + $0x410] sm:$0xff] %v1114
                  %v1116 = vld [vmem:[%s1092 + $0x898] sm:$0xff]
                  %1117 = vst [vmem:[%s1093 + $0x478] sm:$0xff] %v1116
                  %v1118 = vld [vmem:[%s1092 + $0x960] sm:$0xff]
                  %1119 = vst [vmem:[%s1093 + $0x4e0] sm:$0xff] %v1118
                  %v1120 = vld [vmem:[%s1092 + $0xa28] sm:$0xff]
                  %1121 = vst [vmem:[%s1093 + $0x548] sm:$0xff] %v1120
                  %v1122 = vld [vmem:[%s1092 + $0xaf0] sm:$0xff]
                  %1123 = vst [vmem:[%s1093 + $0x5b0] sm:$0xff] %v1122
                  %v1124 = vld [vmem:[%s1092 + $0xbb8] sm:$0xff]
                  %1125 = vst [vmem:[%s1093 + $0x618] sm:$0xff] %v1124
                  %v1126 = vld [vmem:[%s1092 + $0xc80] sm:$0xff]
                  %1127 = vst [vmem:[%s1093 + $0x680] sm:$0xff] %v1126
                  %v1128 = vld [vmem:[%s1092 + $0xd48] sm:$0xff]
                  %1129 = vst [vmem:[%s1093 + $0x6e8] sm:$0xff] %v1128
                  %v1130 = vld [vmem:[%s1092 + $0xe10] sm:$0xff]
                  %1131 = vst [vmem:[%s1093 + $0x750] sm:$0xff] %v1130
                  %v1132 = vld [vmem:[%s1092 + $0xed8] sm:$0xff]
                  %1133 = vst [vmem:[%s1093 + $0x7b8] sm:$0xff] %v1132
                  %v1134 = vld [vmem:[%s1092 + $0xfa0] sm:$0xff]
                  %1135 = vst [vmem:[%s1093 + $0x820] sm:$0xff] %v1134
                  %v1136 = vld [vmem:[%s1092 + $0x1068] sm:$0xff]
                  %1137 = vst [vmem:[%s1093 + $0x888] sm:$0xff] %v1136
                  %v1138 = vld [vmem:[%s1092 + $0x1130] sm:$0xff]
                  %1139 = vst [vmem:[%s1093 + $0x8f0] sm:$0xff] %v1138
                  %v1140 = vld [vmem:[%s1092 + $0x11f8] sm:$0xff]
                  %1141 = vst [vmem:[%s1093 + $0x958] sm:$0xff] %v1140
                  %v1142 = vld [vmem:[%s1092 + $0x12c0] sm:$0xff]
                  %1143 = vst [vmem:[%s1093 + $0x9c0] sm:$0xff] %v1142
                  %v1144 = vld [vmem:[%s1092 + $0x1388] sm:$0xff]
                  %1145 = vst [vmem:[%s1093 + $0xa28] sm:$0xff] %v1144
                  %v1146 = vld [vmem:[%s1092 + $0x1450] sm:$0xff]
                  %1147 = vst [vmem:[%s1093 + $0xa90] sm:$0xff] %v1146
                  %v1148 = vld [vmem:[%s1092 + $0x1518] sm:$0xff]
                  %1149 = vst [vmem:[%s1093 + $0xaf8] sm:$0xff] %v1148
                  %v1150 = vld [vmem:[%s1092 + $0x15e0] sm:$0xff]
                  %1151 = vst [vmem:[%s1093 + $0xb60] sm:$0xff] %v1150
                  %v1152 = vld [vmem:[%s1092 + $0x16a8] sm:$0xff]
                  %1153 = vst [vmem:[%s1093 + $0xbc8] sm:$0xff] %v1152
                  %v1154 = vld [vmem:[%s1092 + $0x1770] sm:$0xff]
                  %1155 = vst [vmem:[%s1093 + $0xc30] sm:$0xff] %v1154
                  %v1156 = vld [vmem:[%s1092 + $0x1838] sm:$0xff]
                  %1157 = vst [vmem:[%s1093 + $0xc98] sm:$0xff] %v1156
                  %s1158 = sadd.s32 1, %s1091
                  %p1159 = scmp.ge.s32.totalorder %s1158, %s1075
                  %s1160 = scalar_select %p1159, 0, %s1158
                  %s1161 = smul.u32 %s1160, 8
                  %s1162 = smul.u32 %s1160, 8
                  %s1163 = scalar_lea.vmem %s1079, %s1161
                  %s1164 = scalar_lea.vmem %s1082, %s1162 [#allocation3]
                $region125: #{tpu_custom_call.1} parent=112 // loop_footer
                  %s1088 = sadd.s32 %s1086, 1
                $region126: #{tpu_custom_call.1} parent=112 // loop_footer_branch
                  %1085 = sbr.rel target = $region122
                $region127: #{tpu_custom_call.1} parent=112 // loop_exit
                  _
              $region113: #{tpu_custom_call.1} parent=97 // pred_fallthru
                _
              %p1165 = pneg %p922
              // Predicated region
              $region128: #{tpu_custom_call.1} parent=97 // pred_check
                _
              $region129: #{tpu_custom_call.1} parent=97 // pred_check_branch
                %1167 = sbr.rel (%p922) target = $region131
              $region130: #{tpu_custom_call.1} parent=97 // pred_region
                %s1168 = sand.u32 %s836, 7
                %s1169 = ssub.s32 %s836, %s1168
                %s1170 = scalar_lea.vmem %s835, %s1169
                %s1171 = ssub.s32 %s836, %s1168
                %s1172 = scalar_lea.vmem %s825, %s1171 [#allocation3]
                %s1173 = sshrl.u32 %s836, 3
                %s1174 = sshrl.u32 %s1173, 1
                // While loop
                $region132: #{tpu_custom_call.1} parent=130 // loop_pre_header
                  _
                $region133: #{tpu_custom_call.1} parent=130 // loop_header
                  %s1178 = sphi 0, %s1180
                  %p1179 = scmp.ge.s32.totalorder %s1178, %s1174
                  %s1183 = sphi 0, %s1316
                  %s1184 = sphi %s835, %s1319
                  %s1185 = sphi %s825, %s1320
                $region134: #{tpu_custom_call.1} parent=130 // loop_header_branch
                  %1182 = sbr.rel (%p1179) target = $region138
                $region135: #{tpu_custom_call.1} parent=130 // loop_body
                  %v1186 = vld [vmem:[%s1184] sm:$0xff]
                  %1187 = vst [vmem:[%s1185] sm:$0xff] %v1186
                  %v1188 = vld [vmem:[%s1184 + $0x8] sm:$0xff]
                  %1189 = vst [vmem:[%s1185 + $0x8] sm:$0xff] %v1188
                  %v1190 = vld [vmem:[%s1184 + $0xc8] sm:$0xff]
                  %1191 = vst [vmem:[%s1185 + $0x68] sm:$0xff] %v1190
                  %v1192 = vld [vmem:[%s1184 + $0xd0] sm:$0xff]
                  %1193 = vst [vmem:[%s1185 + $0x70] sm:$0xff] %v1192
                  %v1194 = vld [vmem:[%s1184 + $0x190] sm:$0xff]
                  %1195 = vst [vmem:[%s1185 + $0xd0] sm:$0xff] %v1194
                  %v1196 = vld [vmem:[%s1184 + $0x198] sm:$0xff]
                  %1197 = vst [vmem:[%s1185 + $0xd8] sm:$0xff] %v1196
                  %v1198 = vld [vmem:[%s1184 + $0x258] sm:$0xff]
                  %1199 = vst [vmem:[%s1185 + $0x138] sm:$0xff] %v1198
                  %v1200 = vld [vmem:[%s1184 + $0x260] sm:$0xff]
                  %1201 = vst [vmem:[%s1185 + $0x140] sm:$0xff] %v1200
                  %v1202 = vld [vmem:[%s1184 + $0x320] sm:$0xff]
                  %1203 = vst [vmem:[%s1185 + $0x1a0] sm:$0xff] %v1202
                  %v1204 = vld [vmem:[%s1184 + $0x328] sm:$0xff]
                  %1205 = vst [vmem:[%s1185 + $0x1a8] sm:$0xff] %v1204
                  %v1206 = vld [vmem:[%s1184 + $0x3e8] sm:$0xff]
                  %1207 = vst [vmem:[%s1185 + $0x208] sm:$0xff] %v1206
                  %v1208 = vld [vmem:[%s1184 + $0x3f0] sm:$0xff]
                  %1209 = vst [vmem:[%s1185 + $0x210] sm:$0xff] %v1208
                  %v1210 = vld [vmem:[%s1184 + $0x4b0] sm:$0xff]
                  %1211 = vst [vmem:[%s1185 + $0x270] sm:$0xff] %v1210
                  %v1212 = vld [vmem:[%s1184 + $0x4b8] sm:$0xff]
                  %1213 = vst [vmem:[%s1185 + $0x278] sm:$0xff] %v1212
                  %v1214 = vld [vmem:[%s1184 + $0x578] sm:$0xff]
                  %1215 = vst [vmem:[%s1185 + $0x2d8] sm:$0xff] %v1214
                  %v1216 = vld [vmem:[%s1184 + $0x580] sm:$0xff]
                  %1217 = vst [vmem:[%s1185 + $0x2e0] sm:$0xff] %v1216
                  %v1218 = vld [vmem:[%s1184 + $0x640] sm:$0xff]
                  %1219 = vst [vmem:[%s1185 + $0x340] sm:$0xff] %v1218
                  %v1220 = vld [vmem:[%s1184 + $0x648] sm:$0xff]
                  %1221 = vst [vmem:[%s1185 + $0x348] sm:$0xff] %v1220
                  %v1222 = vld [vmem:[%s1184 + $0x708] sm:$0xff]
                  %1223 = vst [vmem:[%s1185 + $0x3a8] sm:$0xff] %v1222
                  %v1224 = vld [vmem:[%s1184 + $0x710] sm:$0xff]
                  %1225 = vst [vmem:[%s1185 + $0x3b0] sm:$0xff] %v1224
                  %v1226 = vld [vmem:[%s1184 + $0x7d0] sm:$0xff]
                  %1227 = vst [vmem:[%s1185 + $0x410] sm:$0xff] %v1226
                  %v1228 = vld [vmem:[%s1184 + $0x7d8] sm:$0xff]
                  %1229 = vst [vmem:[%s1185 + $0x418] sm:$0xff] %v1228
                  %v1230 = vld [vmem:[%s1184 + $0x898] sm:$0xff]
                  %1231 = vst [vmem:[%s1185 + $0x478] sm:$0xff] %v1230
                  %v1232 = vld [vmem:[%s1184 + $0x8a0] sm:$0xff]
                  %1233 = vst [vmem:[%s1185 + $0x480] sm:$0xff] %v1232
                  %v1234 = vld [vmem:[%s1184 + $0x960] sm:$0xff]
                  %1235 = vst [vmem:[%s1185 + $0x4e0] sm:$0xff] %v1234
                  %v1236 = vld [vmem:[%s1184 + $0x968] sm:$0xff]
                  %1237 = vst [vmem:[%s1185 + $0x4e8] sm:$0xff] %v1236
                  %v1238 = vld [vmem:[%s1184 + $0xa28] sm:$0xff]
                  %1239 = vst [vmem:[%s1185 + $0x548] sm:$0xff] %v1238
                  %v1240 = vld [vmem:[%s1184 + $0xa30] sm:$0xff]
                  %1241 = vst [vmem:[%s1185 + $0x550] sm:$0xff] %v1240
                  %v1242 = vld [vmem:[%s1184 + $0xaf0] sm:$0xff]
                  %1243 = vst [vmem:[%s1185 + $0x5b0] sm:$0xff] %v1242
                  %v1244 = vld [vmem:[%s1184 + $0xaf8] sm:$0xff]
                  %1245 = vst [vmem:[%s1185 + $0x5b8] sm:$0xff] %v1244
                  %v1246 = vld [vmem:[%s1184 + $0xbb8] sm:$0xff]
                  %1247 = vst [vmem:[%s1185 + $0x618] sm:$0xff] %v1246
                  %v1248 = vld [vmem:[%s1184 + $0xbc0] sm:$0xff]
                  %1249 = vst [vmem:[%s1185 + $0x620] sm:$0xff] %v1248
                  %v1250 = vld [vmem:[%s1184 + $0xc80] sm:$0xff]
                  %1251 = vst [vmem:[%s1185 + $0x680] sm:$0xff] %v1250
                  %v1252 = vld [vmem:[%s1184 + $0xc88] sm:$0xff]
                  %1253 = vst [vmem:[%s1185 + $0x688] sm:$0xff] %v1252
                  %v1254 = vld [vmem:[%s1184 + $0xd48] sm:$0xff]
                  %1255 = vst [vmem:[%s1185 + $0x6e8] sm:$0xff] %v1254
                  %v1256 = vld [vmem:[%s1184 + $0xd50] sm:$0xff]
                  %1257 = vst [vmem:[%s1185 + $0x6f0] sm:$0xff] %v1256
                  %v1258 = vld [vmem:[%s1184 + $0xe10] sm:$0xff]
                  %1259 = vst [vmem:[%s1185 + $0x750] sm:$0xff] %v1258
                  %v1260 = vld [vmem:[%s1184 + $0xe18] sm:$0xff]
                  %1261 = vst [vmem:[%s1185 + $0x758] sm:$0xff] %v1260
                  %v1262 = vld [vmem:[%s1184 + $0xed8] sm:$0xff]
                  %1263 = vst [vmem:[%s1185 + $0x7b8] sm:$0xff] %v1262
                  %v1264 = vld [vmem:[%s1184 + $0xee0] sm:$0xff]
                  %1265 = vst [vmem:[%s1185 + $0x7c0] sm:$0xff] %v1264
                  %v1266 = vld [vmem:[%s1184 + $0xfa0] sm:$0xff]
                  %1267 = vst [vmem:[%s1185 + $0x820] sm:$0xff] %v1266
                  %v1268 = vld [vmem:[%s1184 + $0xfa8] sm:$0xff]
                  %1269 = vst [vmem:[%s1185 + $0x828] sm:$0xff] %v1268
                  %v1270 = vld [vmem:[%s1184 + $0x1068] sm:$0xff]
                  %1271 = vst [vmem:[%s1185 + $0x888] sm:$0xff] %v1270
                  %v1272 = vld [vmem:[%s1184 + $0x1070] sm:$0xff]
                  %1273 = vst [vmem:[%s1185 + $0x890] sm:$0xff] %v1272
                  %v1274 = vld [vmem:[%s1184 + $0x1130] sm:$0xff]
                  %1275 = vst [vmem:[%s1185 + $0x8f0] sm:$0xff] %v1274
                  %v1276 = vld [vmem:[%s1184 + $0x1138] sm:$0xff]
                  %1277 = vst [vmem:[%s1185 + $0x8f8] sm:$0xff] %v1276
                  %v1278 = vld [vmem:[%s1184 + $0x11f8] sm:$0xff]
                  %1279 = vst [vmem:[%s1185 + $0x958] sm:$0xff] %v1278
                  %v1280 = vld [vmem:[%s1184 + $0x1200] sm:$0xff]
                  %1281 = vst [vmem:[%s1185 + $0x960] sm:$0xff] %v1280
                  %v1282 = vld [vmem:[%s1184 + $0x12c0] sm:$0xff]
                  %1283 = vst [vmem:[%s1185 + $0x9c0] sm:$0xff] %v1282
                  %v1284 = vld [vmem:[%s1184 + $0x12c8] sm:$0xff]
                  %1285 = vst [vmem:[%s1185 + $0x9c8] sm:$0xff] %v1284
                  %v1286 = vld [vmem:[%s1184 + $0x1388] sm:$0xff]
                  %1287 = vst [vmem:[%s1185 + $0xa28] sm:$0xff] %v1286
                  %v1288 = vld [vmem:[%s1184 + $0x1390] sm:$0xff]
                  %1289 = vst [vmem:[%s1185 + $0xa30] sm:$0xff] %v1288
                  %v1290 = vld [vmem:[%s1184 + $0x1450] sm:$0xff]
                  %1291 = vst [vmem:[%s1185 + $0xa90] sm:$0xff] %v1290
                  %v1292 = vld [vmem:[%s1184 + $0x1458] sm:$0xff]
                  %1293 = vst [vmem:[%s1185 + $0xa98] sm:$0xff] %v1292
                  %v1294 = vld [vmem:[%s1184 + $0x1518] sm:$0xff]
                  %1295 = vst [vmem:[%s1185 + $0xaf8] sm:$0xff] %v1294
                  %v1296 = vld [vmem:[%s1184 + $0x1520] sm:$0xff]
                  %1297 = vst [vmem:[%s1185 + $0xb00] sm:$0xff] %v1296
                  %v1298 = vld [vmem:[%s1184 + $0x15e0] sm:$0xff]
                  %1299 = vst [vmem:[%s1185 + $0xb60] sm:$0xff] %v1298
                  %v1300 = vld [vmem:[%s1184 + $0x15e8] sm:$0xff]
                  %1301 = vst [vmem:[%s1185 + $0xb68] sm:$0xff] %v1300
                  %v1302 = vld [vmem:[%s1184 + $0x16a8] sm:$0xff]
                  %1303 = vst [vmem:[%s1185 + $0xbc8] sm:$0xff] %v1302
                  %v1304 = vld [vmem:[%s1184 + $0x16b0] sm:$0xff]
                  %1305 = vst [vmem:[%s1185 + $0xbd0] sm:$0xff] %v1304
                  %v1306 = vld [vmem:[%s1184 + $0x1770] sm:$0xff]
                  %1307 = vst [vmem:[%s1185 + $0xc30] sm:$0xff] %v1306
                  %v1308 = vld [vmem:[%s1184 + $0x1778] sm:$0xff]
                  %1309 = vst [vmem:[%s1185 + $0xc38] sm:$0xff] %v1308
                  %v1310 = vld [vmem:[%s1184 + $0x1838] sm:$0xff]
                  %1311 = vst [vmem:[%s1185 + $0xc98] sm:$0xff] %v1310
                  %v1312 = vld [vmem:[%s1184 + $0x1840] sm:$0xff]
                  %1313 = vst [vmem:[%s1185 + $0xca0] sm:$0xff] %v1312
                  %s1314 = sadd.s32 1, %s1183
                  %p1315 = scmp.ge.s32.totalorder %s1314, %s1174
                  %s1316 = scalar_select %p1315, 0, %s1314
                  %s1317 = smul.u32 %s1316, 16
                  %s1318 = smul.u32 %s1316, 16
                  %s1319 = scalar_lea.vmem %s835, %s1317
                  %s1320 = scalar_lea.vmem %s825, %s1318 [#allocation3]
                $region136: #{tpu_custom_call.1} parent=130 // loop_footer
                  %s1180 = sadd.s32 %s1178, 1
                $region137: #{tpu_custom_call.1} parent=130 // loop_footer_branch
                  %1177 = sbr.rel target = $region133
                $region138: #{tpu_custom_call.1} parent=130 // loop_exit
                  _
                %s1321 = sshrl.u32 %s1173, 1
                %s1322 = sand.u32 %s1173, 1
                %s1323 = smul.u32 %s1321, 2
                %s1324 = smul.u32 128, %s1323
                %s1325 = sshra.s32 %s1324, 4
                %s1326 = scalar_lea.vmem %s835, %s1325
                %s1327 = smul.u32 128, %s1323
                %s1328 = sshra.s32 %s1327, 4
                %s1329 = scalar_lea.vmem %s825, %s1328 [#allocation3]
                // While loop
                $region139: #{tpu_custom_call.1} parent=130 // loop_pre_header
                  _
                $region140: #{tpu_custom_call.1} parent=130 // loop_header
                  %s1333 = sphi 0, %s1335
                  %p1334 = scmp.ge.s32.totalorder %s1333, %s1322
                  %s1338 = sphi 0, %s1407
                  %s1339 = sphi %s1326, %s1410
                  %s1340 = sphi %s1329, %s1411
                $region141: #{tpu_custom_call.1} parent=130 // loop_header_branch
                  %1337 = sbr.rel (%p1334) target = $region145
                $region142: #{tpu_custom_call.1} parent=130 // loop_body
                  %v1341 = vld [vmem:[%s1339] sm:$0xff]
                  %1342 = vst [vmem:[%s1340] sm:$0xff] %v1341
                  %v1343 = vld [vmem:[%s1339 + $0xc8] sm:$0xff]
                  %1344 = vst [vmem:[%s1340 + $0x68] sm:$0xff] %v1343
                  %v1345 = vld [vmem:[%s1339 + $0x190] sm:$0xff]
                  %1346 = vst [vmem:[%s1340 + $0xd0] sm:$0xff] %v1345
                  %v1347 = vld [vmem:[%s1339 + $0x258] sm:$0xff]
                  %1348 = vst [vmem:[%s1340 + $0x138] sm:$0xff] %v1347
                  %v1349 = vld [vmem:[%s1339 + $0x320] sm:$0xff]
                  %1350 = vst [vmem:[%s1340 + $0x1a0] sm:$0xff] %v1349
                  %v1351 = vld [vmem:[%s1339 + $0x3e8] sm:$0xff]
                  %1352 = vst [vmem:[%s1340 + $0x208] sm:$0xff] %v1351
                  %v1353 = vld [vmem:[%s1339 + $0x4b0] sm:$0xff]
                  %1354 = vst [vmem:[%s1340 + $0x270] sm:$0xff] %v1353
                  %v1355 = vld [vmem:[%s1339 + $0x578] sm:$0xff]
                  %1356 = vst [vmem:[%s1340 + $0x2d8] sm:$0xff] %v1355
                  %v1357 = vld [vmem:[%s1339 + $0x640] sm:$0xff]
                  %1358 = vst [vmem:[%s1340 + $0x340] sm:$0xff] %v1357
                  %v1359 = vld [vmem:[%s1339 + $0x708] sm:$0xff]
                  %1360 = vst [vmem:[%s1340 + $0x3a8] sm:$0xff] %v1359
                  %v1361 = vld [vmem:[%s1339 + $0x7d0] sm:$0xff]
                  %1362 = vst [vmem:[%s1340 + $0x410] sm:$0xff] %v1361
                  %v1363 = vld [vmem:[%s1339 + $0x898] sm:$0xff]
                  %1364 = vst [vmem:[%s1340 + $0x478] sm:$0xff] %v1363
                  %v1365 = vld [vmem:[%s1339 + $0x960] sm:$0xff]
                  %1366 = vst [vmem:[%s1340 + $0x4e0] sm:$0xff] %v1365
                  %v1367 = vld [vmem:[%s1339 + $0xa28] sm:$0xff]
                  %1368 = vst [vmem:[%s1340 + $0x548] sm:$0xff] %v1367
                  %v1369 = vld [vmem:[%s1339 + $0xaf0] sm:$0xff]
                  %1370 = vst [vmem:[%s1340 + $0x5b0] sm:$0xff] %v1369
                  %v1371 = vld [vmem:[%s1339 + $0xbb8] sm:$0xff]
                  %1372 = vst [vmem:[%s1340 + $0x618] sm:$0xff] %v1371
                  %v1373 = vld [vmem:[%s1339 + $0xc80] sm:$0xff]
                  %1374 = vst [vmem:[%s1340 + $0x680] sm:$0xff] %v1373
                  %v1375 = vld [vmem:[%s1339 + $0xd48] sm:$0xff]
                  %1376 = vst [vmem:[%s1340 + $0x6e8] sm:$0xff] %v1375
                  %v1377 = vld [vmem:[%s1339 + $0xe10] sm:$0xff]
                  %1378 = vst [vmem:[%s1340 + $0x750] sm:$0xff] %v1377
                  %v1379 = vld [vmem:[%s1339 + $0xed8] sm:$0xff]
                  %1380 = vst [vmem:[%s1340 + $0x7b8] sm:$0xff] %v1379
                  %v1381 = vld [vmem:[%s1339 + $0xfa0] sm:$0xff]
                  %1382 = vst [vmem:[%s1340 + $0x820] sm:$0xff] %v1381
                  %v1383 = vld [vmem:[%s1339 + $0x1068] sm:$0xff]
                  %1384 = vst [vmem:[%s1340 + $0x888] sm:$0xff] %v1383
                  %v1385 = vld [vmem:[%s1339 + $0x1130] sm:$0xff]
                  %1386 = vst [vmem:[%s1340 + $0x8f0] sm:$0xff] %v1385
                  %v1387 = vld [vmem:[%s1339 + $0x11f8] sm:$0xff]
                  %1388 = vst [vmem:[%s1340 + $0x958] sm:$0xff] %v1387
                  %v1389 = vld [vmem:[%s1339 + $0x12c0] sm:$0xff]
                  %1390 = vst [vmem:[%s1340 + $0x9c0] sm:$0xff] %v1389
                  %v1391 = vld [vmem:[%s1339 + $0x1388] sm:$0xff]
                  %1392 = vst [vmem:[%s1340 + $0xa28] sm:$0xff] %v1391
                  %v1393 = vld [vmem:[%s1339 + $0x1450] sm:$0xff]
                  %1394 = vst [vmem:[%s1340 + $0xa90] sm:$0xff] %v1393
                  %v1395 = vld [vmem:[%s1339 + $0x1518] sm:$0xff]
                  %1396 = vst [vmem:[%s1340 + $0xaf8] sm:$0xff] %v1395
                  %v1397 = vld [vmem:[%s1339 + $0x15e0] sm:$0xff]
                  %1398 = vst [vmem:[%s1340 + $0xb60] sm:$0xff] %v1397
                  %v1399 = vld [vmem:[%s1339 + $0x16a8] sm:$0xff]
                  %1400 = vst [vmem:[%s1340 + $0xbc8] sm:$0xff] %v1399
                  %v1401 = vld [vmem:[%s1339 + $0x1770] sm:$0xff]
                  %1402 = vst [vmem:[%s1340 + $0xc30] sm:$0xff] %v1401
                  %v1403 = vld [vmem:[%s1339 + $0x1838] sm:$0xff]
                  %1404 = vst [vmem:[%s1340 + $0xc98] sm:$0xff] %v1403
                  %s1405 = sadd.s32 1, %s1338
                  %p1406 = scmp.ge.s32.totalorder %s1405, %s1322
                  %s1407 = scalar_select %p1406, 0, %s1405
                  %s1408 = smul.u32 %s1407, 8
                  %s1409 = smul.u32 %s1407, 8
                  %s1410 = scalar_lea.vmem %s1326, %s1408
                  %s1411 = scalar_lea.vmem %s1329, %s1409 [#allocation3]
                $region143: #{tpu_custom_call.1} parent=130 // loop_footer
                  %s1335 = sadd.s32 %s1333, 1
                $region144: #{tpu_custom_call.1} parent=130 // loop_footer_branch
                  %1332 = sbr.rel target = $region140
                $region145: #{tpu_custom_call.1} parent=130 // loop_exit
                  _
                %s1412 = sshll.u32 1, %s1168
                %s1413 = ssub.s32 %s1412, 1
                loop: start=0, step=1, limit=1
                $region146: #{tpu_custom_call.1} parent=130 // loop_pre_header
                  _
                $region147: #{tpu_custom_call.1} parent=130 // loop_header
                  %s1415 = sphi 0, %s1419
                  %p1416 = scmp.ge.s32.totalorder %s1415, 1
                  %s1420 = sphi %s1170, %s1170
                  %s1421 = sphi %s1172, %s1172
                $region148: #{tpu_custom_call.1} parent=130 // loop_header_branch
                  %1418 = sbr.rel (%p1416) target = $region152
                $region149: #{tpu_custom_call.1} parent=130 // loop_body
                  %v1422 = vld [vmem:[%s1420] sm:%s1413]
                  %1423 = vst [vmem:[%s1421] sm:%s1413] %v1422
                  %v1424 = vld [vmem:[%s1420 + $0xc8] sm:%s1413]
                  %1425 = vst [vmem:[%s1421 + $0x68] sm:%s1413] %v1424
                  %v1426 = vld [vmem:[%s1420 + $0x190] sm:%s1413]
                  %1427 = vst [vmem:[%s1421 + $0xd0] sm:%s1413] %v1426
                  %v1428 = vld [vmem:[%s1420 + $0x258] sm:%s1413]
                  %1429 = vst [vmem:[%s1421 + $0x138] sm:%s1413] %v1428
                  %v1430 = vld [vmem:[%s1420 + $0x320] sm:%s1413]
                  %1431 = vst [vmem:[%s1421 + $0x1a0] sm:%s1413] %v1430
                  %v1432 = vld [vmem:[%s1420 + $0x3e8] sm:%s1413]
                  %1433 = vst [vmem:[%s1421 + $0x208] sm:%s1413] %v1432
                  %v1434 = vld [vmem:[%s1420 + $0x4b0] sm:%s1413]
                  %1435 = vst [vmem:[%s1421 + $0x270] sm:%s1413] %v1434
                  %v1436 = vld [vmem:[%s1420 + $0x578] sm:%s1413]
                  %1437 = vst [vmem:[%s1421 + $0x2d8] sm:%s1413] %v1436
                  %v1438 = vld [vmem:[%s1420 + $0x640] sm:%s1413]
                  %1439 = vst [vmem:[%s1421 + $0x340] sm:%s1413] %v1438
                  %v1440 = vld [vmem:[%s1420 + $0x708] sm:%s1413]
                  %1441 = vst [vmem:[%s1421 + $0x3a8] sm:%s1413] %v1440
                  %v1442 = vld [vmem:[%s1420 + $0x7d0] sm:%s1413]
                  %1443 = vst [vmem:[%s1421 + $0x410] sm:%s1413] %v1442
                  %v1444 = vld [vmem:[%s1420 + $0x898] sm:%s1413]
                  %1445 = vst [vmem:[%s1421 + $0x478] sm:%s1413] %v1444
                  %v1446 = vld [vmem:[%s1420 + $0x960] sm:%s1413]
                  %1447 = vst [vmem:[%s1421 + $0x4e0] sm:%s1413] %v1446
                  %v1448 = vld [vmem:[%s1420 + $0xa28] sm:%s1413]
                  %1449 = vst [vmem:[%s1421 + $0x548] sm:%s1413] %v1448
                  %v1450 = vld [vmem:[%s1420 + $0xaf0] sm:%s1413]
                  %1451 = vst [vmem:[%s1421 + $0x5b0] sm:%s1413] %v1450
                  %v1452 = vld [vmem:[%s1420 + $0xbb8] sm:%s1413]
                  %1453 = vst [vmem:[%s1421 + $0x618] sm:%s1413] %v1452
                  %v1454 = vld [vmem:[%s1420 + $0xc80] sm:%s1413]
                  %1455 = vst [vmem:[%s1421 + $0x680] sm:%s1413] %v1454
                  %v1456 = vld [vmem:[%s1420 + $0xd48] sm:%s1413]
                  %1457 = vst [vmem:[%s1421 + $0x6e8] sm:%s1413] %v1456
                  %v1458 = vld [vmem:[%s1420 + $0xe10] sm:%s1413]
                  %1459 = vst [vmem:[%s1421 + $0x750] sm:%s1413] %v1458
                  %v1460 = vld [vmem:[%s1420 + $0xed8] sm:%s1413]
                  %1461 = vst [vmem:[%s1421 + $0x7b8] sm:%s1413] %v1460
                  %v1462 = vld [vmem:[%s1420 + $0xfa0] sm:%s1413]
                  %1463 = vst [vmem:[%s1421 + $0x820] sm:%s1413] %v1462
                  %v1464 = vld [vmem:[%s1420 + $0x1068] sm:%s1413]
                  %1465 = vst [vmem:[%s1421 + $0x888] sm:%s1413] %v1464
                  %v1466 = vld [vmem:[%s1420 + $0x1130] sm:%s1413]
                  %1467 = vst [vmem:[%s1421 + $0x8f0] sm:%s1413] %v1466
                  %v1468 = vld [vmem:[%s1420 + $0x11f8] sm:%s1413]
                  %1469 = vst [vmem:[%s1421 + $0x958] sm:%s1413] %v1468
                  %v1470 = vld [vmem:[%s1420 + $0x12c0] sm:%s1413]
                  %1471 = vst [vmem:[%s1421 + $0x9c0] sm:%s1413] %v1470
                  %v1472 = vld [vmem:[%s1420 + $0x1388] sm:%s1413]
                  %1473 = vst [vmem:[%s1421 + $0xa28] sm:%s1413] %v1472
                  %v1474 = vld [vmem:[%s1420 + $0x1450] sm:%s1413]
                  %1475 = vst [vmem:[%s1421 + $0xa90] sm:%s1413] %v1474
                  %v1476 = vld [vmem:[%s1420 + $0x1518] sm:%s1413]
                  %1477 = vst [vmem:[%s1421 + $0xaf8] sm:%s1413] %v1476
                  %v1478 = vld [vmem:[%s1420 + $0x15e0] sm:%s1413]
                  %1479 = vst [vmem:[%s1421 + $0xb60] sm:%s1413] %v1478
                  %v1480 = vld [vmem:[%s1420 + $0x16a8] sm:%s1413]
                  %1481 = vst [vmem:[%s1421 + $0xbc8] sm:%s1413] %v1480
                  %v1482 = vld [vmem:[%s1420 + $0x1770] sm:%s1413]
                  %1483 = vst [vmem:[%s1421 + $0xc30] sm:%s1413] %v1482
                  %v1484 = vld [vmem:[%s1420 + $0x1838] sm:%s1413]
                  %1485 = vst [vmem:[%s1421 + $0xc98] sm:%s1413] %v1484
                $region150: #{tpu_custom_call.1} parent=130 // loop_footer
                  %s1419 = sadd.s32 1, %s1415
                $region151: #{tpu_custom_call.1} parent=130 // loop_footer_branch
                  %1414 = sbr.rel target = $region147
                $region152: #{tpu_custom_call.1} parent=130 // loop_exit
                  _
              $region131: #{tpu_custom_call.1} parent=97 // pred_fallthru
                _
            $region98: #{tpu_custom_call.1} parent=93 // pred_fallthru
              _
            // Predicated region
            $region99: #{tpu_custom_call.1} parent=93 // pred_check
              %p844 = pneg %p840
            $region100: #{tpu_custom_call.1} parent=93 // pred_check_branch
              %846 = sbr.rel (%p844) target = $region102
            $region101: #{tpu_custom_call.1} parent=93 // pred_region
              %s847 = sshll.u32 1, %s836
              %s848 = ssub.s32 %s847, 1
              loop: start=0, step=1, limit=1
              $region103: #{tpu_custom_call.1} parent=101 // loop_pre_header
                _
              $region104: #{tpu_custom_call.1} parent=101 // loop_header
                %s850 = sphi 0, %s854
                %p851 = scmp.ge.s32.totalorder %s850, 1
                %s855 = sphi %s835, %s835
                %s856 = sphi %s825, %s825
              $region105: #{tpu_custom_call.1} parent=101 // loop_header_branch
                %853 = sbr.rel (%p851) target = $region109
              $region106: #{tpu_custom_call.1} parent=101 // loop_body
                %v857 = vld [vmem:[%s855] sm:%s848]
                %858 = vst [vmem:[%s856] sm:%s848] %v857
                %v859 = vld [vmem:[%s855 + $0xc8] sm:%s848]
                %860 = vst [vmem:[%s856 + $0x68] sm:%s848] %v859
                %v861 = vld [vmem:[%s855 + $0x190] sm:%s848]
                %862 = vst [vmem:[%s856 + $0xd0] sm:%s848] %v861
                %v863 = vld [vmem:[%s855 + $0x258] sm:%s848]
                %864 = vst [vmem:[%s856 + $0x138] sm:%s848] %v863
                %v865 = vld [vmem:[%s855 + $0x320] sm:%s848]
                %866 = vst [vmem:[%s856 + $0x1a0] sm:%s848] %v865
                %v867 = vld [vmem:[%s855 + $0x3e8] sm:%s848]
                %868 = vst [vmem:[%s856 + $0x208] sm:%s848] %v867
                %v869 = vld [vmem:[%s855 + $0x4b0] sm:%s848]
                %870 = vst [vmem:[%s856 + $0x270] sm:%s848] %v869
                %v871 = vld [vmem:[%s855 + $0x578] sm:%s848]
                %872 = vst [vmem:[%s856 + $0x2d8] sm:%s848] %v871
                %v873 = vld [vmem:[%s855 + $0x640] sm:%s848]
                %874 = vst [vmem:[%s856 + $0x340] sm:%s848] %v873
                %v875 = vld [vmem:[%s855 + $0x708] sm:%s848]
                %876 = vst [vmem:[%s856 + $0x3a8] sm:%s848] %v875
                %v877 = vld [vmem:[%s855 + $0x7d0] sm:%s848]
                %878 = vst [vmem:[%s856 + $0x410] sm:%s848] %v877
                %v879 = vld [vmem:[%s855 + $0x898] sm:%s848]
                %880 = vst [vmem:[%s856 + $0x478] sm:%s848] %v879
                %v881 = vld [vmem:[%s855 + $0x960] sm:%s848]
                %882 = vst [vmem:[%s856 + $0x4e0] sm:%s848] %v881
                %v883 = vld [vmem:[%s855 + $0xa28] sm:%s848]
                %884 = vst [vmem:[%s856 + $0x548] sm:%s848] %v883
                %v885 = vld [vmem:[%s855 + $0xaf0] sm:%s848]
                %886 = vst [vmem:[%s856 + $0x5b0] sm:%s848] %v885
                %v887 = vld [vmem:[%s855 + $0xbb8] sm:%s848]
                %888 = vst [vmem:[%s856 + $0x618] sm:%s848] %v887
                %v889 = vld [vmem:[%s855 + $0xc80] sm:%s848]
                %890 = vst [vmem:[%s856 + $0x680] sm:%s848] %v889
                %v891 = vld [vmem:[%s855 + $0xd48] sm:%s848]
                %892 = vst [vmem:[%s856 + $0x6e8] sm:%s848] %v891
                %v893 = vld [vmem:[%s855 + $0xe10] sm:%s848]
                %894 = vst [vmem:[%s856 + $0x750] sm:%s848] %v893
                %v895 = vld [vmem:[%s855 + $0xed8] sm:%s848]
                %896 = vst [vmem:[%s856 + $0x7b8] sm:%s848] %v895
                %v897 = vld [vmem:[%s855 + $0xfa0] sm:%s848]
                %898 = vst [vmem:[%s856 + $0x820] sm:%s848] %v897
                %v899 = vld [vmem:[%s855 + $0x1068] sm:%s848]
                %900 = vst [vmem:[%s856 + $0x888] sm:%s848] %v899
                %v901 = vld [vmem:[%s855 + $0x1130] sm:%s848]
                %902 = vst [vmem:[%s856 + $0x8f0] sm:%s848] %v901
                %v903 = vld [vmem:[%s855 + $0x11f8] sm:%s848]
                %904 = vst [vmem:[%s856 + $0x958] sm:%s848] %v903
                %v905 = vld [vmem:[%s855 + $0x12c0] sm:%s848]
                %906 = vst [vmem:[%s856 + $0x9c0] sm:%s848] %v905
                %v907 = vld [vmem:[%s855 + $0x1388] sm:%s848]
                %908 = vst [vmem:[%s856 + $0xa28] sm:%s848] %v907
                %v909 = vld [vmem:[%s855 + $0x1450] sm:%s848]
                %910 = vst [vmem:[%s856 + $0xa90] sm:%s848] %v909
                %v911 = vld [vmem:[%s855 + $0x1518] sm:%s848]
                %912 = vst [vmem:[%s856 + $0xaf8] sm:%s848] %v911
                %v913 = vld [vmem:[%s855 + $0x15e0] sm:%s848]
                %914 = vst [vmem:[%s856 + $0xb60] sm:%s848] %v913
                %v915 = vld [vmem:[%s855 + $0x16a8] sm:%s848]
                %916 = vst [vmem:[%s856 + $0xbc8] sm:%s848] %v915
                %v917 = vld [vmem:[%s855 + $0x1770] sm:%s848]
                %918 = vst [vmem:[%s856 + $0xc30] sm:%s848] %v917
                %v919 = vld [vmem:[%s855 + $0x1838] sm:%s848]
                %920 = vst [vmem:[%s856 + $0xc98] sm:%s848] %v919
              $region107: #{tpu_custom_call.1} parent=101 // loop_footer
                %s854 = sadd.s32 1, %s850
              $region108: #{tpu_custom_call.1} parent=101 // loop_footer_branch
                %849 = sbr.rel target = $region104
              $region109: #{tpu_custom_call.1} parent=101 // loop_exit
                _
            $region102: #{tpu_custom_call.1} parent=93 // pred_fallthru
              _
          $region94: #{tpu_custom_call.1} parent=89 // pred_fallthru
            _
          %1486 = vnop
        $region90: #{tpu_custom_call.1} parent=19 // pred_fallthru
          _
      $region20: #{tpu_custom_call.1} parent=5 // pred_fallthru
        _
      %p1487 = scmp.le.s32.totalorder 1, %s12
      %p1488 = scmp.lt.s32.totalorder %s12, 3
      %p1489 = pnand %p1487, %p1488
      %p1490 = pneg %p1489
      // Predicated region
      $region153: #{tpu_custom_call.1} parent=5 // pred_check
        _
      $region154: #{tpu_custom_call.1} parent=5 // pred_check_branch
        %1492 = sbr.rel (%p1489) target = $region156
      $region155: #{tpu_custom_call.1} parent=5 // pred_region
        %s1493 = ssub.s32 %s12, 1
        %s1494 = sand.u32 %s39, 1
        %s1495 = sand.u32 %s39, 1
        %s1496 = smul.addr %s1495, 3328
        %s1497 = scalar_lea.vmem [#allocation2], %s1496
        // Predicated region
        $region157: #{tpu_custom_call.1} parent=155 // pred_check
          %p1498 = pneg %p52
        $region158: #{tpu_custom_call.1} parent=155 // pred_check_branch
          %1500 = sbr.rel (%p1498) target = $region160
        $region159: #{tpu_custom_call.1} parent=155 // pred_region
          _
        $region160: #{tpu_custom_call.1} parent=155 // pred_fallthru
          _
        %s1501 = sand.u32 %s67, 1
        %s1502 = sand.u32 %s67, 1
        %s1503 = smul.addr %s1502, 3328
        %s1504 = scalar_lea.vmem [#allocation3], %s1503
        // Predicated region
        $region161: #{tpu_custom_call.1} parent=155 // pred_check
          %p1505 = pneg %p80
        $region162: #{tpu_custom_call.1} parent=155 // pred_check_branch
          %1507 = sbr.rel (%p1505) target = $region164
        $region163: #{tpu_custom_call.1} parent=155 // pred_region
          _
        $region164: #{tpu_custom_call.1} parent=155 // pred_fallthru
          _
        %s1508 = sand.u32 %s39, 1
        %s1509 = sand.u32 %s39, 1
        %s1510 = smul.addr %s1509, 3328
        %s1511 = scalar_lea.vmem [#allocation2], %s1510
        %p1512 = pneg %p52
        %p1513 = pneg %p49
        %s1514 = sand.u32 %s67, 1
        %s1515 = sand.u32 %s67, 1
        %s1516 = smul.addr %s1515, 3328
        %s1517 = scalar_lea.vmem [#allocation3], %s1516
        %p1518 = pneg %p80
        %p1519 = pneg %p77
        %p1520 = pneg %p101
        %p1521 = pneg %p98
        %p1522 = pneg %p129
        %p1523 = pneg %p126
        %s1524 = sand.u32 %s116, 1
        %s1525 = scalar_lea.sflag [#allocation5], %s1524
        %s1526 = sand.u32 %s116, 1
        %s1527 = smul.addr %s1526, 832
        %s1528 = scalar_lea.vmem [#allocation4], %s1527
        %s1529 = smul.u32 13, %s22
        %s1530 = ssub.s32 25, %s1529
        %p1531 = scmp.lt.s32.totalorder %s1530, 13
        %s1532 = scalar_select %p1531, %s1530, 13
        %s1533 = smul.u32 4096, %s1532
        %s1534 = smul.u32 13, %s22
        %s1535 = ssub.s32 25, %s1534
        %p1536 = scmp.lt.s32.totalorder %s1535, 13
        %s1537 = scalar_select %p1536, %s1535, 13
        %s1538 = smul.u32 4096, %s1537
        %s1539 = smul.u32 13, %s22
        %s1540 = ssub.s32 25, %s1539
        %p1541 = scmp.lt.s32.totalorder %s1540, 13
        %s1542 = scalar_select %p1541, %s1540, 13
        %s1543 = smul.u32 1024, %s1542
        %v1545 = vld [vmem:[%s1497] sm:$0xff]
        %v1546 = vld [vmem:[%s1497 + $0x8] sm:$0xff]
        %v1547 = vld [vmem:[%s1497 + $0x10] sm:$0xff]
        %v1548 = vld [vmem:[%s1497 + $0x18] sm:$0xff]
        %v1549 = vld [vmem:[%s1497 + $0x20] sm:$0xff]
        %v1550 = vld [vmem:[%s1497 + $0x28] sm:$0xff]
        %v1551 = vld [vmem:[%s1497 + $0x30] sm:$0xff]
        %v1552 = vld [vmem:[%s1497 + $0x38] sm:$0xff]
        %v1553 = vld [vmem:[%s1497 + $0x40] sm:$0xff]
        %v1554 = vld [vmem:[%s1497 + $0x48] sm:$0xff]
        %v1555 = vld [vmem:[%s1497 + $0x50] sm:$0xff]
        %v1556 = vld [vmem:[%s1497 + $0x58] sm:$0xff]
        %v1557 = vld [vmem:[%s1497 + $0x60] sm:$0xff]
        %v1558 = vld [vmem:[%s1497 + $0x68] sm:$0xff]
        %v1559 = vld [vmem:[%s1497 + $0x70] sm:$0xff]
        %v1560 = vld [vmem:[%s1497 + $0x78] sm:$0xff]
        %v1561 = vld [vmem:[%s1497 + $0x80] sm:$0xff]
        %v1562 = vld [vmem:[%s1497 + $0x88] sm:$0xff]
        %v1563 = vld [vmem:[%s1497 + $0x90] sm:$0xff]
        %v1564 = vld [vmem:[%s1497 + $0x98] sm:$0xff]
        %v1565 = vld [vmem:[%s1497 + $0xa0] sm:$0xff]
        %v1566 = vld [vmem:[%s1497 + $0xa8] sm:$0xff]
        %v1567 = vld [vmem:[%s1497 + $0xb0] sm:$0xff]
        %v1568 = vld [vmem:[%s1497 + $0xb8] sm:$0xff]
        %v1569 = vld [vmem:[%s1497 + $0xc0] sm:$0xff]
        %v1570 = vld [vmem:[%s1497 + $0xc8] sm:$0xff]
        %v1571 = vld [vmem:[%s1497 + $0xd0] sm:$0xff]
        %v1572 = vld [vmem:[%s1497 + $0xd8] sm:$0xff]
        %v1573 = vld [vmem:[%s1497 + $0xe0] sm:$0xff]
        %v1574 = vld [vmem:[%s1497 + $0xe8] sm:$0xff]
        %v1575 = vld [vmem:[%s1497 + $0xf0] sm:$0xff]
        %v1576 = vld [vmem:[%s1497 + $0xf8] sm:$0xff]
        %v1577 = vld [vmem:[%s1497 + $0x100] sm:$0xff]
        %v1578 = vld [vmem:[%s1497 + $0x108] sm:$0xff]
        %v1579 = vld [vmem:[%s1497 + $0x110] sm:$0xff]
        %v1580 = vld [vmem:[%s1497 + $0x118] sm:$0xff]
        %v1581 = vld [vmem:[%s1497 + $0x120] sm:$0xff]
        %v1582 = vld [vmem:[%s1497 + $0x128] sm:$0xff]
        %v1583 = vld [vmem:[%s1497 + $0x130] sm:$0xff]
        %v1584 = vld [vmem:[%s1497 + $0x138] sm:$0xff]
        %v1585 = vld [vmem:[%s1497 + $0x140] sm:$0xff]
        %v1586 = vld [vmem:[%s1497 + $0x148] sm:$0xff]
        %v1587 = vld [vmem:[%s1497 + $0x150] sm:$0xff]
        %v1588 = vld [vmem:[%s1497 + $0x158] sm:$0xff]
        %v1589 = vld [vmem:[%s1497 + $0x160] sm:$0xff]
        %v1590 = vld [vmem:[%s1497 + $0x168] sm:$0xff]
        %v1591 = vld [vmem:[%s1497 + $0x170] sm:$0xff]
        %v1592 = vld [vmem:[%s1497 + $0x178] sm:$0xff]
        %v1593 = vld [vmem:[%s1497 + $0x180] sm:$0xff]
        %v1594 = vld [vmem:[%s1497 + $0x188] sm:$0xff]
        %v1595 = vld [vmem:[%s1497 + $0x190] sm:$0xff]
        %v1596 = vld [vmem:[%s1497 + $0x198] sm:$0xff]
        %v1597 = vld [vmem:[%s1497 + $0x1a0] sm:$0xff]
        %v1598 = vld [vmem:[%s1497 + $0x1a8] sm:$0xff]
        %v1599 = vld [vmem:[%s1497 + $0x1b0] sm:$0xff]
        %v1600 = vld [vmem:[%s1497 + $0x1b8] sm:$0xff]
        %v1601 = vld [vmem:[%s1497 + $0x1c0] sm:$0xff]
        %v1602 = vld [vmem:[%s1497 + $0x1c8] sm:$0xff]
        %v1603 = vld [vmem:[%s1497 + $0x1d0] sm:$0xff]
        %v1604 = vld [vmem:[%s1497 + $0x1d8] sm:$0xff]
        %v1605 = vld [vmem:[%s1497 + $0x1e0] sm:$0xff]
        %v1606 = vld [vmem:[%s1497 + $0x1e8] sm:$0xff]
        %v1607 = vld [vmem:[%s1497 + $0x1f0] sm:$0xff]
        %v1608 = vld [vmem:[%s1497 + $0x1f8] sm:$0xff]
        %v1609 = vld [vmem:[%s1497 + $0x200] sm:$0xff]
        %v1610 = vld [vmem:[%s1497 + $0x208] sm:$0xff]
        %v1611 = vld [vmem:[%s1497 + $0x210] sm:$0xff]
        %v1612 = vld [vmem:[%s1497 + $0x218] sm:$0xff]
        %v1613 = vld [vmem:[%s1497 + $0x220] sm:$0xff]
        %v1614 = vld [vmem:[%s1497 + $0x228] sm:$0xff]
        %v1615 = vld [vmem:[%s1497 + $0x230] sm:$0xff]
        %v1616 = vld [vmem:[%s1497 + $0x238] sm:$0xff]
        %v1617 = vld [vmem:[%s1497 + $0x240] sm:$0xff]
        %v1618 = vld [vmem:[%s1497 + $0x248] sm:$0xff]
        %v1619 = vld [vmem:[%s1497 + $0x250] sm:$0xff]
        %v1620 = vld [vmem:[%s1497 + $0x258] sm:$0xff]
        %v1621 = vld [vmem:[%s1497 + $0x260] sm:$0xff]
        %v1622 = vld [vmem:[%s1497 + $0x268] sm:$0xff]
        %v1623 = vld [vmem:[%s1497 + $0x270] sm:$0xff]
        %v1624 = vld [vmem:[%s1497 + $0x278] sm:$0xff]
        %v1625 = vld [vmem:[%s1497 + $0x280] sm:$0xff]
        %v1626 = vld [vmem:[%s1497 + $0x288] sm:$0xff]
        %v1627 = vld [vmem:[%s1497 + $0x290] sm:$0xff]
        %v1628 = vld [vmem:[%s1497 + $0x298] sm:$0xff]
        %v1629 = vld [vmem:[%s1497 + $0x2a0] sm:$0xff]
        %v1630 = vld [vmem:[%s1497 + $0x2a8] sm:$0xff]
        %v1631 = vld [vmem:[%s1497 + $0x2b0] sm:$0xff]
        %v1632 = vld [vmem:[%s1497 + $0x2b8] sm:$0xff]
        %v1633 = vld [vmem:[%s1497 + $0x2c0] sm:$0xff]
        %v1634 = vld [vmem:[%s1497 + $0x2c8] sm:$0xff]
        %v1635 = vld [vmem:[%s1497 + $0x2d0] sm:$0xff]
        %v1636 = vld [vmem:[%s1497 + $0x2d8] sm:$0xff]
        %v1637 = vld [vmem:[%s1497 + $0x2e0] sm:$0xff]
        %v1638 = vld [vmem:[%s1497 + $0x2e8] sm:$0xff]
        %v1639 = vld [vmem:[%s1497 + $0x2f0] sm:$0xff]
        %v1640 = vld [vmem:[%s1497 + $0x2f8] sm:$0xff]
        %v1641 = vld [vmem:[%s1497 + $0x300] sm:$0xff]
        %v1642 = vld [vmem:[%s1497 + $0x308] sm:$0xff]
        %v1643 = vld [vmem:[%s1497 + $0x310] sm:$0xff]
        %v1644 = vld [vmem:[%s1497 + $0x318] sm:$0xff]
        %v1645 = vld [vmem:[%s1497 + $0x320] sm:$0xff]
        %v1646 = vld [vmem:[%s1497 + $0x328] sm:$0xff]
        %v1647 = vld [vmem:[%s1497 + $0x330] sm:$0xff]
        %v1648 = vld [vmem:[%s1497 + $0x338] sm:$0xff]
        %v1649 = vld [vmem:[%s1497 + $0x340] sm:$0xff]
        %v1650 = vld [vmem:[%s1497 + $0x348] sm:$0xff]
        %v1651 = vld [vmem:[%s1497 + $0x350] sm:$0xff]
        %v1652 = vld [vmem:[%s1497 + $0x358] sm:$0xff]
        %v1653 = vld [vmem:[%s1497 + $0x360] sm:$0xff]
        %v1654 = vld [vmem:[%s1497 + $0x368] sm:$0xff]
        %v1655 = vld [vmem:[%s1497 + $0x370] sm:$0xff]
        %v1656 = vld [vmem:[%s1497 + $0x378] sm:$0xff]
        %v1657 = vld [vmem:[%s1497 + $0x380] sm:$0xff]
        %v1658 = vld [vmem:[%s1497 + $0x388] sm:$0xff]
        %v1659 = vld [vmem:[%s1497 + $0x390] sm:$0xff]
        %v1660 = vld [vmem:[%s1497 + $0x398] sm:$0xff]
        %v1661 = vld [vmem:[%s1497 + $0x3a0] sm:$0xff]
        %v1662 = vld [vmem:[%s1497 + $0x3a8] sm:$0xff]
        %v1663 = vld [vmem:[%s1497 + $0x3b0] sm:$0xff]
        %v1664 = vld [vmem:[%s1497 + $0x3b8] sm:$0xff]
        %v1665 = vld [vmem:[%s1497 + $0x3c0] sm:$0xff]
        %v1666 = vld [vmem:[%s1497 + $0x3c8] sm:$0xff]
        %v1667 = vld [vmem:[%s1497 + $0x3d0] sm:$0xff]
        %v1668 = vld [vmem:[%s1497 + $0x3d8] sm:$0xff]
        %v1669 = vld [vmem:[%s1497 + $0x3e0] sm:$0xff]
        %v1670 = vld [vmem:[%s1497 + $0x3e8] sm:$0xff]
        %v1671 = vld [vmem:[%s1497 + $0x3f0] sm:$0xff]
        %v1672 = vld [vmem:[%s1497 + $0x3f8] sm:$0xff]
        %v1673 = vld [vmem:[%s1497 + $0x400] sm:$0xff]
        %v1674 = vld [vmem:[%s1497 + $0x408] sm:$0xff]
        %v1675 = vld [vmem:[%s1497 + $0x410] sm:$0xff]
        %v1676 = vld [vmem:[%s1497 + $0x418] sm:$0xff]
        %v1677 = vld [vmem:[%s1497 + $0x420] sm:$0xff]
        %v1678 = vld [vmem:[%s1497 + $0x428] sm:$0xff]
        %v1679 = vld [vmem:[%s1497 + $0x430] sm:$0xff]
        %v1680 = vld [vmem:[%s1497 + $0x438] sm:$0xff]
        %v1681 = vld [vmem:[%s1497 + $0x440] sm:$0xff]
        %v1682 = vld [vmem:[%s1497 + $0x448] sm:$0xff]
        %v1683 = vld [vmem:[%s1497 + $0x450] sm:$0xff]
        %v1684 = vld [vmem:[%s1497 + $0x458] sm:$0xff]
        %v1685 = vld [vmem:[%s1497 + $0x460] sm:$0xff]
        %v1686 = vld [vmem:[%s1497 + $0x468] sm:$0xff]
        %v1687 = vld [vmem:[%s1497 + $0x470] sm:$0xff]
        %v1688 = vld [vmem:[%s1497 + $0x478] sm:$0xff]
        %v1689 = vld [vmem:[%s1497 + $0x480] sm:$0xff]
        %v1690 = vld [vmem:[%s1497 + $0x488] sm:$0xff]
        %v1691 = vld [vmem:[%s1497 + $0x490] sm:$0xff]
        %v1692 = vld [vmem:[%s1497 + $0x498] sm:$0xff]
        %v1693 = vld [vmem:[%s1497 + $0x4a0] sm:$0xff]
        %v1694 = vld [vmem:[%s1497 + $0x4a8] sm:$0xff]
        %v1695 = vld [vmem:[%s1497 + $0x4b0] sm:$0xff]
        %v1696 = vld [vmem:[%s1497 + $0x4b8] sm:$0xff]
        %v1697 = vld [vmem:[%s1497 + $0x4c0] sm:$0xff]
        %v1698 = vld [vmem:[%s1497 + $0x4c8] sm:$0xff]
        %v1699 = vld [vmem:[%s1497 + $0x4d0] sm:$0xff]
        %v1700 = vld [vmem:[%s1497 + $0x4d8] sm:$0xff]
        %v1701 = vld [vmem:[%s1497 + $0x4e0] sm:$0xff]
        %v1702 = vld [vmem:[%s1497 + $0x4e8] sm:$0xff]
        %v1703 = vld [vmem:[%s1497 + $0x4f0] sm:$0xff]
        %v1704 = vld [vmem:[%s1497 + $0x4f8] sm:$0xff]
        %v1705 = vld [vmem:[%s1497 + $0x500] sm:$0xff]
        %v1706 = vld [vmem:[%s1497 + $0x508] sm:$0xff]
        %v1707 = vld [vmem:[%s1497 + $0x510] sm:$0xff]
        %v1708 = vld [vmem:[%s1497 + $0x518] sm:$0xff]
        %v1709 = vld [vmem:[%s1497 + $0x520] sm:$0xff]
        %v1710 = vld [vmem:[%s1497 + $0x528] sm:$0xff]
        %v1711 = vld [vmem:[%s1497 + $0x530] sm:$0xff]
        %v1712 = vld [vmem:[%s1497 + $0x538] sm:$0xff]
        %v1713 = vld [vmem:[%s1497 + $0x540] sm:$0xff]
        %v1714 = vld [vmem:[%s1497 + $0x548] sm:$0xff]
        %v1715 = vld [vmem:[%s1497 + $0x550] sm:$0xff]
        %v1716 = vld [vmem:[%s1497 + $0x558] sm:$0xff]
        %v1717 = vld [vmem:[%s1497 + $0x560] sm:$0xff]
        %v1718 = vld [vmem:[%s1497 + $0x568] sm:$0xff]
        %v1719 = vld [vmem:[%s1497 + $0x570] sm:$0xff]
        %v1720 = vld [vmem:[%s1497 + $0x578] sm:$0xff]
        %v1721 = vld [vmem:[%s1497 + $0x580] sm:$0xff]
        %v1722 = vld [vmem:[%s1497 + $0x588] sm:$0xff]
        %v1723 = vld [vmem:[%s1497 + $0x590] sm:$0xff]
        %v1724 = vld [vmem:[%s1497 + $0x598] sm:$0xff]
        %v1725 = vld [vmem:[%s1497 + $0x5a0] sm:$0xff]
        %v1726 = vld [vmem:[%s1497 + $0x5a8] sm:$0xff]
        %v1727 = vld [vmem:[%s1497 + $0x5b0] sm:$0xff]
        %v1728 = vld [vmem:[%s1497 + $0x5b8] sm:$0xff]
        %v1729 = vld [vmem:[%s1497 + $0x5c0] sm:$0xff]
        %v1730 = vld [vmem:[%s1497 + $0x5c8] sm:$0xff]
        %v1731 = vld [vmem:[%s1497 + $0x5d0] sm:$0xff]
        %v1732 = vld [vmem:[%s1497 + $0x5d8] sm:$0xff]
        %v1733 = vld [vmem:[%s1497 + $0x5e0] sm:$0xff]
        %v1734 = vld [vmem:[%s1497 + $0x5e8] sm:$0xff]
        %v1735 = vld [vmem:[%s1497 + $0x5f0] sm:$0xff]
        %v1736 = vld [vmem:[%s1497 + $0x5f8] sm:$0xff]
        %v1737 = vld [vmem:[%s1497 + $0x600] sm:$0xff]
        %v1738 = vld [vmem:[%s1497 + $0x608] sm:$0xff]
        %v1739 = vld [vmem:[%s1497 + $0x610] sm:$0xff]
        %v1740 = vld [vmem:[%s1497 + $0x618] sm:$0xff]
        %v1741 = vld [vmem:[%s1497 + $0x620] sm:$0xff]
        %v1742 = vld [vmem:[%s1497 + $0x628] sm:$0xff]
        %v1743 = vld [vmem:[%s1497 + $0x630] sm:$0xff]
        %v1744 = vld [vmem:[%s1497 + $0x638] sm:$0xff]
        %v1745 = vld [vmem:[%s1497 + $0x640] sm:$0xff]
        %v1746 = vld [vmem:[%s1497 + $0x648] sm:$0xff]
        %v1747 = vld [vmem:[%s1497 + $0x650] sm:$0xff]
        %v1748 = vld [vmem:[%s1497 + $0x658] sm:$0xff]
        %v1749 = vld [vmem:[%s1497 + $0x660] sm:$0xff]
        %v1750 = vld [vmem:[%s1497 + $0x668] sm:$0xff]
        %v1751 = vld [vmem:[%s1497 + $0x670] sm:$0xff]
        %v1752 = vld [vmem:[%s1497 + $0x678] sm:$0xff]
        %v1753 = vld [vmem:[%s1497 + $0x680] sm:$0xff]
        %v1754 = vld [vmem:[%s1497 + $0x688] sm:$0xff]
        %v1755 = vld [vmem:[%s1497 + $0x690] sm:$0xff]
        %v1756 = vld [vmem:[%s1497 + $0x698] sm:$0xff]
        %v1757 = vld [vmem:[%s1497 + $0x6a0] sm:$0xff]
        %v1758 = vld [vmem:[%s1497 + $0x6a8] sm:$0xff]
        %v1759 = vld [vmem:[%s1497 + $0x6b0] sm:$0xff]
        %v1760 = vld [vmem:[%s1497 + $0x6b8] sm:$0xff]
        %v1761 = vld [vmem:[%s1497 + $0x6c0] sm:$0xff]
        %v1762 = vld [vmem:[%s1497 + $0x6c8] sm:$0xff]
        %v1763 = vld [vmem:[%s1497 + $0x6d0] sm:$0xff]
        %v1764 = vld [vmem:[%s1497 + $0x6d8] sm:$0xff]
        %v1765 = vld [vmem:[%s1497 + $0x6e0] sm:$0xff]
        %v1766 = vld [vmem:[%s1497 + $0x6e8] sm:$0xff]
        %v1767 = vld [vmem:[%s1497 + $0x6f0] sm:$0xff]
        %v1768 = vld [vmem:[%s1497 + $0x6f8] sm:$0xff]
        %v1769 = vld [vmem:[%s1497 + $0x700] sm:$0xff]
        %v1770 = vld [vmem:[%s1497 + $0x708] sm:$0xff]
        %v1771 = vld [vmem:[%s1497 + $0x710] sm:$0xff]
        %v1772 = vld [vmem:[%s1497 + $0x718] sm:$0xff]
        %v1773 = vld [vmem:[%s1497 + $0x720] sm:$0xff]
        %v1774 = vld [vmem:[%s1497 + $0x728] sm:$0xff]
        %v1775 = vld [vmem:[%s1497 + $0x730] sm:$0xff]
        %v1776 = vld [vmem:[%s1497 + $0x738] sm:$0xff]
        %v1777 = vld [vmem:[%s1497 + $0x740] sm:$0xff]
        %v1778 = vld [vmem:[%s1497 + $0x748] sm:$0xff]
        %v1779 = vld [vmem:[%s1497 + $0x750] sm:$0xff]
        %v1780 = vld [vmem:[%s1497 + $0x758] sm:$0xff]
        %v1781 = vld [vmem:[%s1497 + $0x760] sm:$0xff]
        %v1782 = vld [vmem:[%s1497 + $0x768] sm:$0xff]
        %v1783 = vld [vmem:[%s1497 + $0x770] sm:$0xff]
        %v1784 = vld [vmem:[%s1497 + $0x778] sm:$0xff]
        %v1785 = vld [vmem:[%s1497 + $0x780] sm:$0xff]
        %v1786 = vld [vmem:[%s1497 + $0x788] sm:$0xff]
        %v1787 = vld [vmem:[%s1497 + $0x790] sm:$0xff]
        %v1788 = vld [vmem:[%s1497 + $0x798] sm:$0xff]
        %v1789 = vld [vmem:[%s1497 + $0x7a0] sm:$0xff]
        %v1790 = vld [vmem:[%s1497 + $0x7a8] sm:$0xff]
        %v1791 = vld [vmem:[%s1497 + $0x7b0] sm:$0xff]
        %v1792 = vld [vmem:[%s1497 + $0x7b8] sm:$0xff]
        %v1793 = vld [vmem:[%s1497 + $0x7c0] sm:$0xff]
        %v1794 = vld [vmem:[%s1497 + $0x7c8] sm:$0xff]
        %v1795 = vld [vmem:[%s1497 + $0x7d0] sm:$0xff]
        %v1796 = vld [vmem:[%s1497 + $0x7d8] sm:$0xff]
        %v1797 = vld [vmem:[%s1497 + $0x7e0] sm:$0xff]
        %v1798 = vld [vmem:[%s1497 + $0x7e8] sm:$0xff]
        %v1799 = vld [vmem:[%s1497 + $0x7f0] sm:$0xff]
        %v1800 = vld [vmem:[%s1497 + $0x7f8] sm:$0xff]
        %v1801 = vld [vmem:[%s1497 + $0x800] sm:$0xff]
        %v1802 = vld [vmem:[%s1497 + $0x808] sm:$0xff]
        %v1803 = vld [vmem:[%s1497 + $0x810] sm:$0xff]
        %v1804 = vld [vmem:[%s1497 + $0x818] sm:$0xff]
        %v1805 = vld [vmem:[%s1497 + $0x820] sm:$0xff]
        %v1806 = vld [vmem:[%s1497 + $0x828] sm:$0xff]
        %v1807 = vld [vmem:[%s1497 + $0x830] sm:$0xff]
        %v1808 = vld [vmem:[%s1497 + $0x838] sm:$0xff]
        %v1809 = vld [vmem:[%s1497 + $0x840] sm:$0xff]
        %v1810 = vld [vmem:[%s1497 + $0x848] sm:$0xff]
        %v1811 = vld [vmem:[%s1497 + $0x850] sm:$0xff]
        %v1812 = vld [vmem:[%s1497 + $0x858] sm:$0xff]
        %v1813 = vld [vmem:[%s1497 + $0x860] sm:$0xff]
        %v1814 = vld [vmem:[%s1497 + $0x868] sm:$0xff]
        %v1815 = vld [vmem:[%s1497 + $0x870] sm:$0xff]
        %v1816 = vld [vmem:[%s1497 + $0x878] sm:$0xff]
        %v1817 = vld [vmem:[%s1497 + $0x880] sm:$0xff]
        %v1818 = vld [vmem:[%s1497 + $0x888] sm:$0xff]
        %v1819 = vld [vmem:[%s1497 + $0x890] sm:$0xff]
        %v1820 = vld [vmem:[%s1497 + $0x898] sm:$0xff]
        %v1821 = vld [vmem:[%s1497 + $0x8a0] sm:$0xff]
        %v1822 = vld [vmem:[%s1497 + $0x8a8] sm:$0xff]
        %v1823 = vld [vmem:[%s1497 + $0x8b0] sm:$0xff]
        %v1824 = vld [vmem:[%s1497 + $0x8b8] sm:$0xff]
        %v1825 = vld [vmem:[%s1497 + $0x8c0] sm:$0xff]
        %v1826 = vld [vmem:[%s1497 + $0x8c8] sm:$0xff]
        %v1827 = vld [vmem:[%s1497 + $0x8d0] sm:$0xff]
        %v1828 = vld [vmem:[%s1497 + $0x8d8] sm:$0xff]
        %v1829 = vld [vmem:[%s1497 + $0x8e0] sm:$0xff]
        %v1830 = vld [vmem:[%s1497 + $0x8e8] sm:$0xff]
        %v1831 = vld [vmem:[%s1497 + $0x8f0] sm:$0xff]
        %v1832 = vld [vmem:[%s1497 + $0x8f8] sm:$0xff]
        %v1833 = vld [vmem:[%s1497 + $0x900] sm:$0xff]
        %v1834 = vld [vmem:[%s1497 + $0x908] sm:$0xff]
        %v1835 = vld [vmem:[%s1497 + $0x910] sm:$0xff]
        %v1836 = vld [vmem:[%s1497 + $0x918] sm:$0xff]
        %v1837 = vld [vmem:[%s1497 + $0x920] sm:$0xff]
        %v1838 = vld [vmem:[%s1497 + $0x928] sm:$0xff]
        %v1839 = vld [vmem:[%s1497 + $0x930] sm:$0xff]
        %v1840 = vld [vmem:[%s1497 + $0x938] sm:$0xff]
        %v1841 = vld [vmem:[%s1497 + $0x940] sm:$0xff]
        %v1842 = vld [vmem:[%s1497 + $0x948] sm:$0xff]
        %v1843 = vld [vmem:[%s1497 + $0x950] sm:$0xff]
        %v1844 = vld [vmem:[%s1497 + $0x958] sm:$0xff]
        %v1845 = vld [vmem:[%s1497 + $0x960] sm:$0xff]
        %v1846 = vld [vmem:[%s1497 + $0x968] sm:$0xff]
        %v1847 = vld [vmem:[%s1497 + $0x970] sm:$0xff]
        %v1848 = vld [vmem:[%s1497 + $0x978] sm:$0xff]
        %v1849 = vld [vmem:[%s1497 + $0x980] sm:$0xff]
        %v1850 = vld [vmem:[%s1497 + $0x988] sm:$0xff]
        %v1851 = vld [vmem:[%s1497 + $0x990] sm:$0xff]
        %v1852 = vld [vmem:[%s1497 + $0x998] sm:$0xff]
        %v1853 = vld [vmem:[%s1497 + $0x9a0] sm:$0xff]
        %v1854 = vld [vmem:[%s1497 + $0x9a8] sm:$0xff]
        %v1855 = vld [vmem:[%s1497 + $0x9b0] sm:$0xff]
        %v1856 = vld [vmem:[%s1497 + $0x9b8] sm:$0xff]
        %v1857 = vld [vmem:[%s1497 + $0x9c0] sm:$0xff]
        %v1858 = vld [vmem:[%s1497 + $0x9c8] sm:$0xff]
        %v1859 = vld [vmem:[%s1497 + $0x9d0] sm:$0xff]
        %v1860 = vld [vmem:[%s1497 + $0x9d8] sm:$0xff]
        %v1861 = vld [vmem:[%s1497 + $0x9e0] sm:$0xff]
        %v1862 = vld [vmem:[%s1497 + $0x9e8] sm:$0xff]
        %v1863 = vld [vmem:[%s1497 + $0x9f0] sm:$0xff]
        %v1864 = vld [vmem:[%s1497 + $0x9f8] sm:$0xff]
        %v1865 = vld [vmem:[%s1497 + $0xa00] sm:$0xff]
        %v1866 = vld [vmem:[%s1497 + $0xa08] sm:$0xff]
        %v1867 = vld [vmem:[%s1497 + $0xa10] sm:$0xff]
        %v1868 = vld [vmem:[%s1497 + $0xa18] sm:$0xff]
        %v1869 = vld [vmem:[%s1497 + $0xa20] sm:$0xff]
        %v1870 = vld [vmem:[%s1497 + $0xa28] sm:$0xff]
        %v1871 = vld [vmem:[%s1497 + $0xa30] sm:$0xff]
        %v1872 = vld [vmem:[%s1497 + $0xa38] sm:$0xff]
        %v1873 = vld [vmem:[%s1497 + $0xa40] sm:$0xff]
        %v1874 = vld [vmem:[%s1497 + $0xa48] sm:$0xff]
        %v1875 = vld [vmem:[%s1497 + $0xa50] sm:$0xff]
        %v1876 = vld [vmem:[%s1497 + $0xa58] sm:$0xff]
        %v1877 = vld [vmem:[%s1497 + $0xa60] sm:$0xff]
        %v1878 = vld [vmem:[%s1497 + $0xa68] sm:$0xff]
        %v1879 = vld [vmem:[%s1497 + $0xa70] sm:$0xff]
        %v1880 = vld [vmem:[%s1497 + $0xa78] sm:$0xff]
        %v1881 = vld [vmem:[%s1497 + $0xa80] sm:$0xff]
        %v1882 = vld [vmem:[%s1497 + $0xa88] sm:$0xff]
        %v1883 = vld [vmem:[%s1497 + $0xa90] sm:$0xff]
        %v1884 = vld [vmem:[%s1497 + $0xa98] sm:$0xff]
        %v1885 = vld [vmem:[%s1497 + $0xaa0] sm:$0xff]
        %v1886 = vld [vmem:[%s1497 + $0xaa8] sm:$0xff]
        %v1887 = vld [vmem:[%s1497 + $0xab0] sm:$0xff]
        %v1888 = vld [vmem:[%s1497 + $0xab8] sm:$0xff]
        %v1889 = vld [vmem:[%s1497 + $0xac0] sm:$0xff]
        %v1890 = vld [vmem:[%s1497 + $0xac8] sm:$0xff]
        %v1891 = vld [vmem:[%s1497 + $0xad0] sm:$0xff]
        %v1892 = vld [vmem:[%s1497 + $0xad8] sm:$0xff]
        %v1893 = vld [vmem:[%s1497 + $0xae0] sm:$0xff]
        %v1894 = vld [vmem:[%s1497 + $0xae8] sm:$0xff]
        %v1895 = vld [vmem:[%s1497 + $0xaf0] sm:$0xff]
        %v1896 = vld [vmem:[%s1497 + $0xaf8] sm:$0xff]
        %v1897 = vld [vmem:[%s1497 + $0xb00] sm:$0xff]
        %v1898 = vld [vmem:[%s1497 + $0xb08] sm:$0xff]
        %v1899 = vld [vmem:[%s1497 + $0xb10] sm:$0xff]
        %v1900 = vld [vmem:[%s1497 + $0xb18] sm:$0xff]
        %v1901 = vld [vmem:[%s1497 + $0xb20] sm:$0xff]
        %v1902 = vld [vmem:[%s1497 + $0xb28] sm:$0xff]
        %v1903 = vld [vmem:[%s1497 + $0xb30] sm:$0xff]
        %v1904 = vld [vmem:[%s1497 + $0xb38] sm:$0xff]
        %v1905 = vld [vmem:[%s1497 + $0xb40] sm:$0xff]
        %v1906 = vld [vmem:[%s1497 + $0xb48] sm:$0xff]
        %v1907 = vld [vmem:[%s1497 + $0xb50] sm:$0xff]
        %v1908 = vld [vmem:[%s1497 + $0xb58] sm:$0xff]
        %v1909 = vld [vmem:[%s1497 + $0xb60] sm:$0xff]
        %v1910 = vld [vmem:[%s1497 + $0xb68] sm:$0xff]
        %v1911 = vld [vmem:[%s1497 + $0xb70] sm:$0xff]
        %v1912 = vld [vmem:[%s1497 + $0xb78] sm:$0xff]
        %v1913 = vld [vmem:[%s1497 + $0xb80] sm:$0xff]
        %v1914 = vld [vmem:[%s1497 + $0xb88] sm:$0xff]
        %v1915 = vld [vmem:[%s1497 + $0xb90] sm:$0xff]
        %v1916 = vld [vmem:[%s1497 + $0xb98] sm:$0xff]
        %v1917 = vld [vmem:[%s1497 + $0xba0] sm:$0xff]
        %v1918 = vld [vmem:[%s1497 + $0xba8] sm:$0xff]
        %v1919 = vld [vmem:[%s1497 + $0xbb0] sm:$0xff]
        %v1920 = vld [vmem:[%s1497 + $0xbb8] sm:$0xff]
        %v1921 = vld [vmem:[%s1497 + $0xbc0] sm:$0xff]
        %v1922 = vld [vmem:[%s1497 + $0xbc8] sm:$0xff]
        %v1923 = vld [vmem:[%s1497 + $0xbd0] sm:$0xff]
        %v1924 = vld [vmem:[%s1497 + $0xbd8] sm:$0xff]
        %v1925 = vld [vmem:[%s1497 + $0xbe0] sm:$0xff]
        %v1926 = vld [vmem:[%s1497 + $0xbe8] sm:$0xff]
        %v1927 = vld [vmem:[%s1497 + $0xbf0] sm:$0xff]
        %v1928 = vld [vmem:[%s1497 + $0xbf8] sm:$0xff]
        %v1929 = vld [vmem:[%s1497 + $0xc00] sm:$0xff]
        %v1930 = vld [vmem:[%s1497 + $0xc08] sm:$0xff]
        %v1931 = vld [vmem:[%s1497 + $0xc10] sm:$0xff]
        %v1932 = vld [vmem:[%s1497 + $0xc18] sm:$0xff]
        %v1933 = vld [vmem:[%s1497 + $0xc20] sm:$0xff]
        %v1934 = vld [vmem:[%s1497 + $0xc28] sm:$0xff]
        %v1935 = vld [vmem:[%s1497 + $0xc30] sm:$0xff]
        %v1936 = vld [vmem:[%s1497 + $0xc38] sm:$0xff]
        %v1937 = vld [vmem:[%s1497 + $0xc40] sm:$0xff]
        %v1938 = vld [vmem:[%s1497 + $0xc48] sm:$0xff]
        %v1939 = vld [vmem:[%s1497 + $0xc50] sm:$0xff]
        %v1940 = vld [vmem:[%s1497 + $0xc58] sm:$0xff]
        %v1941 = vld [vmem:[%s1497 + $0xc60] sm:$0xff]
        %v1942 = vld [vmem:[%s1497 + $0xc68] sm:$0xff]
        %v1943 = vld [vmem:[%s1497 + $0xc70] sm:$0xff]
        %v1944 = vld [vmem:[%s1497 + $0xc78] sm:$0xff]
        %v1945 = vld [vmem:[%s1497 + $0xc80] sm:$0xff]
        %v1946 = vld [vmem:[%s1497 + $0xc88] sm:$0xff]
        %v1947 = vld [vmem:[%s1497 + $0xc90] sm:$0xff]
        %v1948 = vld [vmem:[%s1497 + $0xc98] sm:$0xff]
        %v1949 = vld [vmem:[%s1497 + $0xca0] sm:$0xff]
        %v1950 = vld [vmem:[%s1497 + $0xca8] sm:$0xff]
        %v1951 = vld [vmem:[%s1497 + $0xcb0] sm:$0xff]
        %v1952 = vld [vmem:[%s1497 + $0xcb8] sm:$0xff]
        %v1953 = vld [vmem:[%s1497 + $0xcc0] sm:$0xff]
        %v1954 = vld [vmem:[%s1497 + $0xcc8] sm:$0xff]
        %v1955 = vld [vmem:[%s1497 + $0xcd0] sm:$0xff]
        %v1956 = vld [vmem:[%s1497 + $0xcd8] sm:$0xff]
        %v1957 = vld [vmem:[%s1497 + $0xce0] sm:$0xff]
        %v1958 = vld [vmem:[%s1497 + $0xce8] sm:$0xff]
        %v1959 = vld [vmem:[%s1497 + $0xcf0] sm:$0xff]
        %v1960 = vld [vmem:[%s1497 + $0xcf8] sm:$0xff]
        %v1961 = vld [vmem:[%s1504] sm:$0xff]
        %v1962 = vld [vmem:[%s1504 + $0x8] sm:$0xff]
        %v1963 = vld [vmem:[%s1504 + $0x10] sm:$0xff]
        %v1964 = vld [vmem:[%s1504 + $0x18] sm:$0xff]
        %v1965 = vld [vmem:[%s1504 + $0x20] sm:$0xff]
        %v1966 = vld [vmem:[%s1504 + $0x28] sm:$0xff]
        %v1967 = vld [vmem:[%s1504 + $0x30] sm:$0xff]
        %v1968 = vld [vmem:[%s1504 + $0x38] sm:$0xff]
        %v1969 = vld [vmem:[%s1504 + $0x40] sm:$0xff]
        %v1970 = vld [vmem:[%s1504 + $0x48] sm:$0xff]
        %v1971 = vld [vmem:[%s1504 + $0x50] sm:$0xff]
        %v1972 = vld [vmem:[%s1504 + $0x58] sm:$0xff]
        %v1973 = vld [vmem:[%s1504 + $0x60] sm:$0xff]
        %v1974 = vld [vmem:[%s1504 + $0x68] sm:$0xff]
        %v1975 = vld [vmem:[%s1504 + $0x70] sm:$0xff]
        %v1976 = vld [vmem:[%s1504 + $0x78] sm:$0xff]
        %v1977 = vld [vmem:[%s1504 + $0x80] sm:$0xff]
        %v1978 = vld [vmem:[%s1504 + $0x88] sm:$0xff]
        %v1979 = vld [vmem:[%s1504 + $0x90] sm:$0xff]
        %v1980 = vld [vmem:[%s1504 + $0x98] sm:$0xff]
        %v1981 = vld [vmem:[%s1504 + $0xa0] sm:$0xff]
        %v1982 = vld [vmem:[%s1504 + $0xa8] sm:$0xff]
        %v1983 = vld [vmem:[%s1504 + $0xb0] sm:$0xff]
        %v1984 = vld [vmem:[%s1504 + $0xb8] sm:$0xff]
        %v1985 = vld [vmem:[%s1504 + $0xc0] sm:$0xff]
        %v1986 = vld [vmem:[%s1504 + $0xc8] sm:$0xff]
        %v1987 = vld [vmem:[%s1504 + $0xd0] sm:$0xff]
        %v1988 = vld [vmem:[%s1504 + $0xd8] sm:$0xff]
        %v1989 = vld [vmem:[%s1504 + $0xe0] sm:$0xff]
        %v1990 = vld [vmem:[%s1504 + $0xe8] sm:$0xff]
        %v1991 = vld [vmem:[%s1504 + $0xf0] sm:$0xff]
        %v1992 = vld [vmem:[%s1504 + $0xf8] sm:$0xff]
        %v1993 = vld [vmem:[%s1504 + $0x100] sm:$0xff]
        %v1994 = vld [vmem:[%s1504 + $0x108] sm:$0xff]
        %v1995 = vld [vmem:[%s1504 + $0x110] sm:$0xff]
        %v1996 = vld [vmem:[%s1504 + $0x118] sm:$0xff]
        %v1997 = vld [vmem:[%s1504 + $0x120] sm:$0xff]
        %v1998 = vld [vmem:[%s1504 + $0x128] sm:$0xff]
        %v1999 = vld [vmem:[%s1504 + $0x130] sm:$0xff]
        %v2000 = vld [vmem:[%s1504 + $0x138] sm:$0xff]
        %v2001 = vld [vmem:[%s1504 + $0x140] sm:$0xff]
        %v2002 = vld [vmem:[%s1504 + $0x148] sm:$0xff]
        %v2003 = vld [vmem:[%s1504 + $0x150] sm:$0xff]
        %v2004 = vld [vmem:[%s1504 + $0x158] sm:$0xff]
        %v2005 = vld [vmem:[%s1504 + $0x160] sm:$0xff]
        %v2006 = vld [vmem:[%s1504 + $0x168] sm:$0xff]
        %v2007 = vld [vmem:[%s1504 + $0x170] sm:$0xff]
        %v2008 = vld [vmem:[%s1504 + $0x178] sm:$0xff]
        %v2009 = vld [vmem:[%s1504 + $0x180] sm:$0xff]
        %v2010 = vld [vmem:[%s1504 + $0x188] sm:$0xff]
        %v2011 = vld [vmem:[%s1504 + $0x190] sm:$0xff]
        %v2012 = vld [vmem:[%s1504 + $0x198] sm:$0xff]
        %v2013 = vld [vmem:[%s1504 + $0x1a0] sm:$0xff]
        %v2014 = vld [vmem:[%s1504 + $0x1a8] sm:$0xff]
        %v2015 = vld [vmem:[%s1504 + $0x1b0] sm:$0xff]
        %v2016 = vld [vmem:[%s1504 + $0x1b8] sm:$0xff]
        %v2017 = vld [vmem:[%s1504 + $0x1c0] sm:$0xff]
        %v2018 = vld [vmem:[%s1504 + $0x1c8] sm:$0xff]
        %v2019 = vld [vmem:[%s1504 + $0x1d0] sm:$0xff]
        %v2020 = vld [vmem:[%s1504 + $0x1d8] sm:$0xff]
        %v2021 = vld [vmem:[%s1504 + $0x1e0] sm:$0xff]
        %v2022 = vld [vmem:[%s1504 + $0x1e8] sm:$0xff]
        %v2023 = vld [vmem:[%s1504 + $0x1f0] sm:$0xff]
        %v2024 = vld [vmem:[%s1504 + $0x1f8] sm:$0xff]
        %v2025 = vld [vmem:[%s1504 + $0x200] sm:$0xff]
        %v2026 = vld [vmem:[%s1504 + $0x208] sm:$0xff]
        %v2027 = vld [vmem:[%s1504 + $0x210] sm:$0xff]
        %v2028 = vld [vmem:[%s1504 + $0x218] sm:$0xff]
        %v2029 = vld [vmem:[%s1504 + $0x220] sm:$0xff]
        %v2030 = vld [vmem:[%s1504 + $0x228] sm:$0xff]
        %v2031 = vld [vmem:[%s1504 + $0x230] sm:$0xff]
        %v2032 = vld [vmem:[%s1504 + $0x238] sm:$0xff]
        %v2033 = vld [vmem:[%s1504 + $0x240] sm:$0xff]
        %v2034 = vld [vmem:[%s1504 + $0x248] sm:$0xff]
        %v2035 = vld [vmem:[%s1504 + $0x250] sm:$0xff]
        %v2036 = vld [vmem:[%s1504 + $0x258] sm:$0xff]
        %v2037 = vld [vmem:[%s1504 + $0x260] sm:$0xff]
        %v2038 = vld [vmem:[%s1504 + $0x268] sm:$0xff]
        %v2039 = vld [vmem:[%s1504 + $0x270] sm:$0xff]
        %v2040 = vld [vmem:[%s1504 + $0x278] sm:$0xff]
        %v2041 = vld [vmem:[%s1504 + $0x280] sm:$0xff]
        %v2042 = vld [vmem:[%s1504 + $0x288] sm:$0xff]
        %v2043 = vld [vmem:[%s1504 + $0x290] sm:$0xff]
        %v2044 = vld [vmem:[%s1504 + $0x298] sm:$0xff]
        %v2045 = vld [vmem:[%s1504 + $0x2a0] sm:$0xff]
        %v2046 = vld [vmem:[%s1504 + $0x2a8] sm:$0xff]
        %v2047 = vld [vmem:[%s1504 + $0x2b0] sm:$0xff]
        %v2048 = vld [vmem:[%s1504 + $0x2b8] sm:$0xff]
        %v2049 = vld [vmem:[%s1504 + $0x2c0] sm:$0xff]
        %v2050 = vld [vmem:[%s1504 + $0x2c8] sm:$0xff]
        %v2051 = vld [vmem:[%s1504 + $0x2d0] sm:$0xff]
        %v2052 = vld [vmem:[%s1504 + $0x2d8] sm:$0xff]
        %v2053 = vld [vmem:[%s1504 + $0x2e0] sm:$0xff]
        %v2054 = vld [vmem:[%s1504 + $0x2e8] sm:$0xff]
        %v2055 = vld [vmem:[%s1504 + $0x2f0] sm:$0xff]
        %v2056 = vld [vmem:[%s1504 + $0x2f8] sm:$0xff]
        %v2057 = vld [vmem:[%s1504 + $0x300] sm:$0xff]
        %v2058 = vld [vmem:[%s1504 + $0x308] sm:$0xff]
        %v2059 = vld [vmem:[%s1504 + $0x310] sm:$0xff]
        %v2060 = vld [vmem:[%s1504 + $0x318] sm:$0xff]
        %v2061 = vld [vmem:[%s1504 + $0x320] sm:$0xff]
        %v2062 = vld [vmem:[%s1504 + $0x328] sm:$0xff]
        %v2063 = vld [vmem:[%s1504 + $0x330] sm:$0xff]
        %v2064 = vld [vmem:[%s1504 + $0x338] sm:$0xff]
        %v2065 = vld [vmem:[%s1504 + $0x340] sm:$0xff]
        %v2066 = vld [vmem:[%s1504 + $0x348] sm:$0xff]
        %v2067 = vld [vmem:[%s1504 + $0x350] sm:$0xff]
        %v2068 = vld [vmem:[%s1504 + $0x358] sm:$0xff]
        %v2069 = vld [vmem:[%s1504 + $0x360] sm:$0xff]
        %v2070 = vld [vmem:[%s1504 + $0x368] sm:$0xff]
        %v2071 = vld [vmem:[%s1504 + $0x370] sm:$0xff]
        %v2072 = vld [vmem:[%s1504 + $0x378] sm:$0xff]
        %v2073 = vld [vmem:[%s1504 + $0x380] sm:$0xff]
        %v2074 = vld [vmem:[%s1504 + $0x388] sm:$0xff]
        %v2075 = vld [vmem:[%s1504 + $0x390] sm:$0xff]
        %v2076 = vld [vmem:[%s1504 + $0x398] sm:$0xff]
        %v2077 = vld [vmem:[%s1504 + $0x3a0] sm:$0xff]
        %v2078 = vld [vmem:[%s1504 + $0x3a8] sm:$0xff]
        %v2079 = vld [vmem:[%s1504 + $0x3b0] sm:$0xff]
        %v2080 = vld [vmem:[%s1504 + $0x3b8] sm:$0xff]
        %v2081 = vld [vmem:[%s1504 + $0x3c0] sm:$0xff]
        %v2082 = vld [vmem:[%s1504 + $0x3c8] sm:$0xff]
        %v2083 = vld [vmem:[%s1504 + $0x3d0] sm:$0xff]
        %v2084 = vld [vmem:[%s1504 + $0x3d8] sm:$0xff]
        %v2085 = vld [vmem:[%s1504 + $0x3e0] sm:$0xff]
        %v2086 = vld [vmem:[%s1504 + $0x3e8] sm:$0xff]
        %v2087 = vld [vmem:[%s1504 + $0x3f0] sm:$0xff]
        %v2088 = vld [vmem:[%s1504 + $0x3f8] sm:$0xff]
        %v2089 = vld [vmem:[%s1504 + $0x400] sm:$0xff]
        %v2090 = vld [vmem:[%s1504 + $0x408] sm:$0xff]
        %v2091 = vld [vmem:[%s1504 + $0x410] sm:$0xff]
        %v2092 = vld [vmem:[%s1504 + $0x418] sm:$0xff]
        %v2093 = vld [vmem:[%s1504 + $0x420] sm:$0xff]
        %v2094 = vld [vmem:[%s1504 + $0x428] sm:$0xff]
        %v2095 = vld [vmem:[%s1504 + $0x430] sm:$0xff]
        %v2096 = vld [vmem:[%s1504 + $0x438] sm:$0xff]
        %v2097 = vld [vmem:[%s1504 + $0x440] sm:$0xff]
        %v2098 = vld [vmem:[%s1504 + $0x448] sm:$0xff]
        %v2099 = vld [vmem:[%s1504 + $0x450] sm:$0xff]
        %v2100 = vld [vmem:[%s1504 + $0x458] sm:$0xff]
        %v2101 = vld [vmem:[%s1504 + $0x460] sm:$0xff]
        %v2102 = vld [vmem:[%s1504 + $0x468] sm:$0xff]
        %v2103 = vld [vmem:[%s1504 + $0x470] sm:$0xff]
        %v2104 = vld [vmem:[%s1504 + $0x478] sm:$0xff]
        %v2105 = vld [vmem:[%s1504 + $0x480] sm:$0xff]
        %v2106 = vld [vmem:[%s1504 + $0x488] sm:$0xff]
        %v2107 = vld [vmem:[%s1504 + $0x490] sm:$0xff]
        %v2108 = vld [vmem:[%s1504 + $0x498] sm:$0xff]
        %v2109 = vld [vmem:[%s1504 + $0x4a0] sm:$0xff]
        %v2110 = vld [vmem:[%s1504 + $0x4a8] sm:$0xff]
        %v2111 = vld [vmem:[%s1504 + $0x4b0] sm:$0xff]
        %v2112 = vld [vmem:[%s1504 + $0x4b8] sm:$0xff]
        %v2113 = vld [vmem:[%s1504 + $0x4c0] sm:$0xff]
        %v2114 = vld [vmem:[%s1504 + $0x4c8] sm:$0xff]
        %v2115 = vld [vmem:[%s1504 + $0x4d0] sm:$0xff]
        %v2116 = vld [vmem:[%s1504 + $0x4d8] sm:$0xff]
        %v2117 = vld [vmem:[%s1504 + $0x4e0] sm:$0xff]
        %v2118 = vld [vmem:[%s1504 + $0x4e8] sm:$0xff]
        %v2119 = vld [vmem:[%s1504 + $0x4f0] sm:$0xff]
        %v2120 = vld [vmem:[%s1504 + $0x4f8] sm:$0xff]
        %v2121 = vld [vmem:[%s1504 + $0x500] sm:$0xff]
        %v2122 = vld [vmem:[%s1504 + $0x508] sm:$0xff]
        %v2123 = vld [vmem:[%s1504 + $0x510] sm:$0xff]
        %v2124 = vld [vmem:[%s1504 + $0x518] sm:$0xff]
        %v2125 = vld [vmem:[%s1504 + $0x520] sm:$0xff]
        %v2126 = vld [vmem:[%s1504 + $0x528] sm:$0xff]
        %v2127 = vld [vmem:[%s1504 + $0x530] sm:$0xff]
        %v2128 = vld [vmem:[%s1504 + $0x538] sm:$0xff]
        %v2129 = vld [vmem:[%s1504 + $0x540] sm:$0xff]
        %v2130 = vld [vmem:[%s1504 + $0x548] sm:$0xff]
        %v2131 = vld [vmem:[%s1504 + $0x550] sm:$0xff]
        %v2132 = vld [vmem:[%s1504 + $0x558] sm:$0xff]
        %v2133 = vld [vmem:[%s1504 + $0x560] sm:$0xff]
        %v2134 = vld [vmem:[%s1504 + $0x568] sm:$0xff]
        %v2135 = vld [vmem:[%s1504 + $0x570] sm:$0xff]
        %v2136 = vld [vmem:[%s1504 + $0x578] sm:$0xff]
        %v2137 = vld [vmem:[%s1504 + $0x580] sm:$0xff]
        %v2138 = vld [vmem:[%s1504 + $0x588] sm:$0xff]
        %v2139 = vld [vmem:[%s1504 + $0x590] sm:$0xff]
        %v2140 = vld [vmem:[%s1504 + $0x598] sm:$0xff]
        %v2141 = vld [vmem:[%s1504 + $0x5a0] sm:$0xff]
        %v2142 = vld [vmem:[%s1504 + $0x5a8] sm:$0xff]
        %v2143 = vld [vmem:[%s1504 + $0x5b0] sm:$0xff]
        %v2144 = vld [vmem:[%s1504 + $0x5b8] sm:$0xff]
        %v2145 = vld [vmem:[%s1504 + $0x5c0] sm:$0xff]
        %v2146 = vld [vmem:[%s1504 + $0x5c8] sm:$0xff]
        %v2147 = vld [vmem:[%s1504 + $0x5d0] sm:$0xff]
        %v2148 = vld [vmem:[%s1504 + $0x5d8] sm:$0xff]
        %v2149 = vld [vmem:[%s1504 + $0x5e0] sm:$0xff]
        %v2150 = vld [vmem:[%s1504 + $0x5e8] sm:$0xff]
        %v2151 = vld [vmem:[%s1504 + $0x5f0] sm:$0xff]
        %v2152 = vld [vmem:[%s1504 + $0x5f8] sm:$0xff]
        %v2153 = vld [vmem:[%s1504 + $0x600] sm:$0xff]
        %v2154 = vld [vmem:[%s1504 + $0x608] sm:$0xff]
        %v2155 = vld [vmem:[%s1504 + $0x610] sm:$0xff]
        %v2156 = vld [vmem:[%s1504 + $0x618] sm:$0xff]
        %v2157 = vld [vmem:[%s1504 + $0x620] sm:$0xff]
        %v2158 = vld [vmem:[%s1504 + $0x628] sm:$0xff]
        %v2159 = vld [vmem:[%s1504 + $0x630] sm:$0xff]
        %v2160 = vld [vmem:[%s1504 + $0x638] sm:$0xff]
        %v2161 = vld [vmem:[%s1504 + $0x640] sm:$0xff]
        %v2162 = vld [vmem:[%s1504 + $0x648] sm:$0xff]
        %v2163 = vld [vmem:[%s1504 + $0x650] sm:$0xff]
        %v2164 = vld [vmem:[%s1504 + $0x658] sm:$0xff]
        %v2165 = vld [vmem:[%s1504 + $0x660] sm:$0xff]
        %v2166 = vld [vmem:[%s1504 + $0x668] sm:$0xff]
        %v2167 = vld [vmem:[%s1504 + $0x670] sm:$0xff]
        %v2168 = vld [vmem:[%s1504 + $0x678] sm:$0xff]
        %v2169 = vld [vmem:[%s1504 + $0x680] sm:$0xff]
        %v2170 = vld [vmem:[%s1504 + $0x688] sm:$0xff]
        %v2171 = vld [vmem:[%s1504 + $0x690] sm:$0xff]
        %v2172 = vld [vmem:[%s1504 + $0x698] sm:$0xff]
        %v2173 = vld [vmem:[%s1504 + $0x6a0] sm:$0xff]
        %v2174 = vld [vmem:[%s1504 + $0x6a8] sm:$0xff]
        %v2175 = vld [vmem:[%s1504 + $0x6b0] sm:$0xff]
        %v2176 = vld [vmem:[%s1504 + $0x6b8] sm:$0xff]
        %v2177 = vld [vmem:[%s1504 + $0x6c0] sm:$0xff]
        %v2178 = vld [vmem:[%s1504 + $0x6c8] sm:$0xff]
        %v2179 = vld [vmem:[%s1504 + $0x6d0] sm:$0xff]
        %v2180 = vld [vmem:[%s1504 + $0x6d8] sm:$0xff]
        %v2181 = vld [vmem:[%s1504 + $0x6e0] sm:$0xff]
        %v2182 = vld [vmem:[%s1504 + $0x6e8] sm:$0xff]
        %v2183 = vld [vmem:[%s1504 + $0x6f0] sm:$0xff]
        %v2184 = vld [vmem:[%s1504 + $0x6f8] sm:$0xff]
        %v2185 = vld [vmem:[%s1504 + $0x700] sm:$0xff]
        %v2186 = vld [vmem:[%s1504 + $0x708] sm:$0xff]
        %v2187 = vld [vmem:[%s1504 + $0x710] sm:$0xff]
        %v2188 = vld [vmem:[%s1504 + $0x718] sm:$0xff]
        %v2189 = vld [vmem:[%s1504 + $0x720] sm:$0xff]
        %v2190 = vld [vmem:[%s1504 + $0x728] sm:$0xff]
        %v2191 = vld [vmem:[%s1504 + $0x730] sm:$0xff]
        %v2192 = vld [vmem:[%s1504 + $0x738] sm:$0xff]
        %v2193 = vld [vmem:[%s1504 + $0x740] sm:$0xff]
        %v2194 = vld [vmem:[%s1504 + $0x748] sm:$0xff]
        %v2195 = vld [vmem:[%s1504 + $0x750] sm:$0xff]
        %v2196 = vld [vmem:[%s1504 + $0x758] sm:$0xff]
        %v2197 = vld [vmem:[%s1504 + $0x760] sm:$0xff]
        %v2198 = vld [vmem:[%s1504 + $0x768] sm:$0xff]
        %v2199 = vld [vmem:[%s1504 + $0x770] sm:$0xff]
        %v2200 = vld [vmem:[%s1504 + $0x778] sm:$0xff]
        %v2201 = vld [vmem:[%s1504 + $0x780] sm:$0xff]
        %v2202 = vld [vmem:[%s1504 + $0x788] sm:$0xff]
        %v2203 = vld [vmem:[%s1504 + $0x790] sm:$0xff]
        %v2204 = vld [vmem:[%s1504 + $0x798] sm:$0xff]
        %v2205 = vld [vmem:[%s1504 + $0x7a0] sm:$0xff]
        %v2206 = vld [vmem:[%s1504 + $0x7a8] sm:$0xff]
        %v2207 = vld [vmem:[%s1504 + $0x7b0] sm:$0xff]
        %v2208 = vld [vmem:[%s1504 + $0x7b8] sm:$0xff]
        %v2209 = vld [vmem:[%s1504 + $0x7c0] sm:$0xff]
        %v2210 = vld [vmem:[%s1504 + $0x7c8] sm:$0xff]
        %v2211 = vld [vmem:[%s1504 + $0x7d0] sm:$0xff]
        %v2212 = vld [vmem:[%s1504 + $0x7d8] sm:$0xff]
        %v2213 = vld [vmem:[%s1504 + $0x7e0] sm:$0xff]
        %v2214 = vld [vmem:[%s1504 + $0x7e8] sm:$0xff]
        %v2215 = vld [vmem:[%s1504 + $0x7f0] sm:$0xff]
        %v2216 = vld [vmem:[%s1504 + $0x7f8] sm:$0xff]
        %v2217 = vld [vmem:[%s1504 + $0x800] sm:$0xff]
        %v2218 = vld [vmem:[%s1504 + $0x808] sm:$0xff]
        %v2219 = vld [vmem:[%s1504 + $0x810] sm:$0xff]
        %v2220 = vld [vmem:[%s1504 + $0x818] sm:$0xff]
        %v2221 = vld [vmem:[%s1504 + $0x820] sm:$0xff]
        %v2222 = vld [vmem:[%s1504 + $0x828] sm:$0xff]
        %v2223 = vld [vmem:[%s1504 + $0x830] sm:$0xff]
        %v2224 = vld [vmem:[%s1504 + $0x838] sm:$0xff]
        %v2225 = vld [vmem:[%s1504 + $0x840] sm:$0xff]
        %v2226 = vld [vmem:[%s1504 + $0x848] sm:$0xff]
        %v2227 = vld [vmem:[%s1504 + $0x850] sm:$0xff]
        %v2228 = vld [vmem:[%s1504 + $0x858] sm:$0xff]
        %v2229 = vld [vmem:[%s1504 + $0x860] sm:$0xff]
        %v2230 = vld [vmem:[%s1504 + $0x868] sm:$0xff]
        %v2231 = vld [vmem:[%s1504 + $0x870] sm:$0xff]
        %v2232 = vld [vmem:[%s1504 + $0x878] sm:$0xff]
        %v2233 = vld [vmem:[%s1504 + $0x880] sm:$0xff]
        %v2234 = vld [vmem:[%s1504 + $0x888] sm:$0xff]
        %v2235 = vld [vmem:[%s1504 + $0x890] sm:$0xff]
        %v2236 = vld [vmem:[%s1504 + $0x898] sm:$0xff]
        %v2237 = vld [vmem:[%s1504 + $0x8a0] sm:$0xff]
        %v2238 = vld [vmem:[%s1504 + $0x8a8] sm:$0xff]
        %v2239 = vld [vmem:[%s1504 + $0x8b0] sm:$0xff]
        %v2240 = vld [vmem:[%s1504 + $0x8b8] sm:$0xff]
        %v2241 = vld [vmem:[%s1504 + $0x8c0] sm:$0xff]
        %v2242 = vld [vmem:[%s1504 + $0x8c8] sm:$0xff]
        %v2243 = vld [vmem:[%s1504 + $0x8d0] sm:$0xff]
        %v2244 = vld [vmem:[%s1504 + $0x8d8] sm:$0xff]
        %v2245 = vld [vmem:[%s1504 + $0x8e0] sm:$0xff]
        %v2246 = vld [vmem:[%s1504 + $0x8e8] sm:$0xff]
        %v2247 = vld [vmem:[%s1504 + $0x8f0] sm:$0xff]
        %v2248 = vld [vmem:[%s1504 + $0x8f8] sm:$0xff]
        %v2249 = vld [vmem:[%s1504 + $0x900] sm:$0xff]
        %v2250 = vld [vmem:[%s1504 + $0x908] sm:$0xff]
        %v2251 = vld [vmem:[%s1504 + $0x910] sm:$0xff]
        %v2252 = vld [vmem:[%s1504 + $0x918] sm:$0xff]
        %v2253 = vld [vmem:[%s1504 + $0x920] sm:$0xff]
        %v2254 = vld [vmem:[%s1504 + $0x928] sm:$0xff]
        %v2255 = vld [vmem:[%s1504 + $0x930] sm:$0xff]
        %v2256 = vld [vmem:[%s1504 + $0x938] sm:$0xff]
        %v2257 = vld [vmem:[%s1504 + $0x940] sm:$0xff]
        %v2258 = vld [vmem:[%s1504 + $0x948] sm:$0xff]
        %v2259 = vld [vmem:[%s1504 + $0x950] sm:$0xff]
        %v2260 = vld [vmem:[%s1504 + $0x958] sm:$0xff]
        %v2261 = vld [vmem:[%s1504 + $0x960] sm:$0xff]
        %v2262 = vld [vmem:[%s1504 + $0x968] sm:$0xff]
        %v2263 = vld [vmem:[%s1504 + $0x970] sm:$0xff]
        %v2264 = vld [vmem:[%s1504 + $0x978] sm:$0xff]
        %v2265 = vld [vmem:[%s1504 + $0x980] sm:$0xff]
        %v2266 = vld [vmem:[%s1504 + $0x988] sm:$0xff]
        %v2267 = vld [vmem:[%s1504 + $0x990] sm:$0xff]
        %v2268 = vld [vmem:[%s1504 + $0x998] sm:$0xff]
        %v2269 = vld [vmem:[%s1504 + $0x9a0] sm:$0xff]
        %v2270 = vld [vmem:[%s1504 + $0x9a8] sm:$0xff]
        %v2271 = vld [vmem:[%s1504 + $0x9b0] sm:$0xff]
        %v2272 = vld [vmem:[%s1504 + $0x9b8] sm:$0xff]
        %v2273 = vld [vmem:[%s1504 + $0x9c0] sm:$0xff]
        %v2274 = vld [vmem:[%s1504 + $0x9c8] sm:$0xff]
        %v2275 = vld [vmem:[%s1504 + $0x9d0] sm:$0xff]
        %v2276 = vld [vmem:[%s1504 + $0x9d8] sm:$0xff]
        %v2277 = vld [vmem:[%s1504 + $0x9e0] sm:$0xff]
        %v2278 = vld [vmem:[%s1504 + $0x9e8] sm:$0xff]
        %v2279 = vld [vmem:[%s1504 + $0x9f0] sm:$0xff]
        %v2280 = vld [vmem:[%s1504 + $0x9f8] sm:$0xff]
        %v2281 = vld [vmem:[%s1504 + $0xa00] sm:$0xff]
        %v2282 = vld [vmem:[%s1504 + $0xa08] sm:$0xff]
        %v2283 = vld [vmem:[%s1504 + $0xa10] sm:$0xff]
        %v2284 = vld [vmem:[%s1504 + $0xa18] sm:$0xff]
        %v2285 = vld [vmem:[%s1504 + $0xa20] sm:$0xff]
        %v2286 = vld [vmem:[%s1504 + $0xa28] sm:$0xff]
        %v2287 = vld [vmem:[%s1504 + $0xa30] sm:$0xff]
        %v2288 = vld [vmem:[%s1504 + $0xa38] sm:$0xff]
        %v2289 = vld [vmem:[%s1504 + $0xa40] sm:$0xff]
        %v2290 = vld [vmem:[%s1504 + $0xa48] sm:$0xff]
        %v2291 = vld [vmem:[%s1504 + $0xa50] sm:$0xff]
        %v2292 = vld [vmem:[%s1504 + $0xa58] sm:$0xff]
        %v2293 = vld [vmem:[%s1504 + $0xa60] sm:$0xff]
        %v2294 = vld [vmem:[%s1504 + $0xa68] sm:$0xff]
        %v2295 = vld [vmem:[%s1504 + $0xa70] sm:$0xff]
        %v2296 = vld [vmem:[%s1504 + $0xa78] sm:$0xff]
        %v2297 = vld [vmem:[%s1504 + $0xa80] sm:$0xff]
        %v2298 = vld [vmem:[%s1504 + $0xa88] sm:$0xff]
        %v2299 = vld [vmem:[%s1504 + $0xa90] sm:$0xff]
        %v2300 = vld [vmem:[%s1504 + $0xa98] sm:$0xff]
        %v2301 = vld [vmem:[%s1504 + $0xaa0] sm:$0xff]
        %v2302 = vld [vmem:[%s1504 + $0xaa8] sm:$0xff]
        %v2303 = vld [vmem:[%s1504 + $0xab0] sm:$0xff]
        %v2304 = vld [vmem:[%s1504 + $0xab8] sm:$0xff]
        %v2305 = vld [vmem:[%s1504 + $0xac0] sm:$0xff]
        %v2306 = vld [vmem:[%s1504 + $0xac8] sm:$0xff]
        %v2307 = vld [vmem:[%s1504 + $0xad0] sm:$0xff]
        %v2308 = vld [vmem:[%s1504 + $0xad8] sm:$0xff]
        %v2309 = vld [vmem:[%s1504 + $0xae0] sm:$0xff]
        %v2310 = vld [vmem:[%s1504 + $0xae8] sm:$0xff]
        %v2311 = vld [vmem:[%s1504 + $0xaf0] sm:$0xff]
        %v2312 = vld [vmem:[%s1504 + $0xaf8] sm:$0xff]
        %v2313 = vld [vmem:[%s1504 + $0xb00] sm:$0xff]
        %v2314 = vld [vmem:[%s1504 + $0xb08] sm:$0xff]
        %v2315 = vld [vmem:[%s1504 + $0xb10] sm:$0xff]
        %v2316 = vld [vmem:[%s1504 + $0xb18] sm:$0xff]
        %v2317 = vld [vmem:[%s1504 + $0xb20] sm:$0xff]
        %v2318 = vld [vmem:[%s1504 + $0xb28] sm:$0xff]
        %v2319 = vld [vmem:[%s1504 + $0xb30] sm:$0xff]
        %v2320 = vld [vmem:[%s1504 + $0xb38] sm:$0xff]
        %v2321 = vld [vmem:[%s1504 + $0xb40] sm:$0xff]
        %v2322 = vld [vmem:[%s1504 + $0xb48] sm:$0xff]
        %v2323 = vld [vmem:[%s1504 + $0xb50] sm:$0xff]
        %v2324 = vld [vmem:[%s1504 + $0xb58] sm:$0xff]
        %v2325 = vld [vmem:[%s1504 + $0xb60] sm:$0xff]
        %v2326 = vld [vmem:[%s1504 + $0xb68] sm:$0xff]
        %v2327 = vld [vmem:[%s1504 + $0xb70] sm:$0xff]
        %v2328 = vld [vmem:[%s1504 + $0xb78] sm:$0xff]
        %v2329 = vld [vmem:[%s1504 + $0xb80] sm:$0xff]
        %v2330 = vld [vmem:[%s1504 + $0xb88] sm:$0xff]
        %v2331 = vld [vmem:[%s1504 + $0xb90] sm:$0xff]
        %v2332 = vld [vmem:[%s1504 + $0xb98] sm:$0xff]
        %v2333 = vld [vmem:[%s1504 + $0xba0] sm:$0xff]
        %v2334 = vld [vmem:[%s1504 + $0xba8] sm:$0xff]
        %v2335 = vld [vmem:[%s1504 + $0xbb0] sm:$0xff]
        %v2336 = vld [vmem:[%s1504 + $0xbb8] sm:$0xff]
        %v2337 = vld [vmem:[%s1504 + $0xbc0] sm:$0xff]
        %v2338 = vld [vmem:[%s1504 + $0xbc8] sm:$0xff]
        %v2339 = vld [vmem:[%s1504 + $0xbd0] sm:$0xff]
        %v2340 = vld [vmem:[%s1504 + $0xbd8] sm:$0xff]
        %v2341 = vld [vmem:[%s1504 + $0xbe0] sm:$0xff]
        %v2342 = vld [vmem:[%s1504 + $0xbe8] sm:$0xff]
        %v2343 = vld [vmem:[%s1504 + $0xbf0] sm:$0xff]
        %v2344 = vld [vmem:[%s1504 + $0xbf8] sm:$0xff]
        %v2345 = vld [vmem:[%s1504 + $0xc00] sm:$0xff]
        %v2346 = vld [vmem:[%s1504 + $0xc08] sm:$0xff]
        %v2347 = vld [vmem:[%s1504 + $0xc10] sm:$0xff]
        %v2348 = vld [vmem:[%s1504 + $0xc18] sm:$0xff]
        %v2349 = vld [vmem:[%s1504 + $0xc20] sm:$0xff]
        %v2350 = vld [vmem:[%s1504 + $0xc28] sm:$0xff]
        %v2351 = vld [vmem:[%s1504 + $0xc30] sm:$0xff]
        %v2352 = vld [vmem:[%s1504 + $0xc38] sm:$0xff]
        %v2353 = vld [vmem:[%s1504 + $0xc40] sm:$0xff]
        %v2354 = vld [vmem:[%s1504 + $0xc48] sm:$0xff]
        %v2355 = vld [vmem:[%s1504 + $0xc50] sm:$0xff]
        %v2356 = vld [vmem:[%s1504 + $0xc58] sm:$0xff]
        %v2357 = vld [vmem:[%s1504 + $0xc60] sm:$0xff]
        %v2358 = vld [vmem:[%s1504 + $0xc68] sm:$0xff]
        %v2359 = vld [vmem:[%s1504 + $0xc70] sm:$0xff]
        %v2360 = vld [vmem:[%s1504 + $0xc78] sm:$0xff]
        %v2361 = vld [vmem:[%s1504 + $0xc80] sm:$0xff]
        %v2362 = vld [vmem:[%s1504 + $0xc88] sm:$0xff]
        %v2363 = vld [vmem:[%s1504 + $0xc90] sm:$0xff]
        %v2364 = vld [vmem:[%s1504 + $0xc98] sm:$0xff]
        %v2365 = vld [vmem:[%s1504 + $0xca0] sm:$0xff]
        %v2366 = vld [vmem:[%s1504 + $0xca8] sm:$0xff]
        %v2367 = vld [vmem:[%s1504 + $0xcb0] sm:$0xff]
        %v2368 = vld [vmem:[%s1504 + $0xcb8] sm:$0xff]
        %v2369 = vld [vmem:[%s1504 + $0xcc0] sm:$0xff]
        %v2370 = vld [vmem:[%s1504 + $0xcc8] sm:$0xff]
        %v2371 = vld [vmem:[%s1504 + $0xcd0] sm:$0xff]
        %v2372 = vld [vmem:[%s1504 + $0xcd8] sm:$0xff]
        %v2373 = vld [vmem:[%s1504 + $0xce0] sm:$0xff]
        %v2374 = vld [vmem:[%s1504 + $0xce8] sm:$0xff]
        %v2375 = vld [vmem:[%s1504 + $0xcf0] sm:$0xff]
        %v2376 = vld [vmem:[%s1504 + $0xcf8] sm:$0xff]
        %v2377 = vadd.f32 %v1545, %v1961
        %v2378 = vadd.f32 %v1546, %v1962
        %v2379 = vadd.f32 %v1547, %v1963
        %v2380 = vadd.f32 %v1548, %v1964
        %v2381 = vadd.f32 %v1549, %v1965
        %v2382 = vadd.f32 %v1550, %v1966
        %v2383 = vadd.f32 %v1551, %v1967
        %v2384 = vadd.f32 %v1552, %v1968
        %v2385 = vadd.f32 %v1553, %v1969
        %v2386 = vadd.f32 %v1554, %v1970
        %v2387 = vadd.f32 %v1555, %v1971
        %v2388 = vadd.f32 %v1556, %v1972
        %v2389 = vadd.f32 %v1557, %v1973
        %v2390 = vadd.f32 %v1558, %v1974
        %v2391 = vadd.f32 %v1559, %v1975
        %v2392 = vadd.f32 %v1560, %v1976
        %v2393 = vadd.f32 %v1561, %v1977
        %v2394 = vadd.f32 %v1562, %v1978
        %v2395 = vadd.f32 %v1563, %v1979
        %v2396 = vadd.f32 %v1564, %v1980
        %v2397 = vadd.f32 %v1565, %v1981
        %v2398 = vadd.f32 %v1566, %v1982
        %v2399 = vadd.f32 %v1567, %v1983
        %v2400 = vadd.f32 %v1568, %v1984
        %v2401 = vadd.f32 %v1569, %v1985
        %v2402 = vadd.f32 %v1570, %v1986
        %v2403 = vadd.f32 %v1571, %v1987
        %v2404 = vadd.f32 %v1572, %v1988
        %v2405 = vadd.f32 %v1573, %v1989
        %v2406 = vadd.f32 %v1574, %v1990
        %v2407 = vadd.f32 %v1575, %v1991
        %v2408 = vadd.f32 %v1576, %v1992
        %v2409 = vadd.f32 %v1577, %v1993
        %v2410 = vadd.f32 %v1578, %v1994
        %v2411 = vadd.f32 %v1579, %v1995
        %v2412 = vadd.f32 %v1580, %v1996
        %v2413 = vadd.f32 %v1581, %v1997
        %v2414 = vadd.f32 %v1582, %v1998
        %v2415 = vadd.f32 %v1583, %v1999
        %v2416 = vadd.f32 %v1584, %v2000
        %v2417 = vadd.f32 %v1585, %v2001
        %v2418 = vadd.f32 %v1586, %v2002
        %v2419 = vadd.f32 %v1587, %v2003
        %v2420 = vadd.f32 %v1588, %v2004
        %v2421 = vadd.f32 %v1589, %v2005
        %v2422 = vadd.f32 %v1590, %v2006
        %v2423 = vadd.f32 %v1591, %v2007
        %v2424 = vadd.f32 %v1592, %v2008
        %v2425 = vadd.f32 %v1593, %v2009
        %v2426 = vadd.f32 %v1594, %v2010
        %v2427 = vadd.f32 %v1595, %v2011
        %v2428 = vadd.f32 %v1596, %v2012
        %v2429 = vadd.f32 %v1597, %v2013
        %v2430 = vadd.f32 %v1598, %v2014
        %v2431 = vadd.f32 %v1599, %v2015
        %v2432 = vadd.f32 %v1600, %v2016
        %v2433 = vadd.f32 %v1601, %v2017
        %v2434 = vadd.f32 %v1602, %v2018
        %v2435 = vadd.f32 %v1603, %v2019
        %v2436 = vadd.f32 %v1604, %v2020
        %v2437 = vadd.f32 %v1605, %v2021
        %v2438 = vadd.f32 %v1606, %v2022
        %v2439 = vadd.f32 %v1607, %v2023
        %v2440 = vadd.f32 %v1608, %v2024
        %v2441 = vadd.f32 %v1609, %v2025
        %v2442 = vadd.f32 %v1610, %v2026
        %v2443 = vadd.f32 %v1611, %v2027
        %v2444 = vadd.f32 %v1612, %v2028
        %v2445 = vadd.f32 %v1613, %v2029
        %v2446 = vadd.f32 %v1614, %v2030
        %v2447 = vadd.f32 %v1615, %v2031
        %v2448 = vadd.f32 %v1616, %v2032
        %v2449 = vadd.f32 %v1617, %v2033
        %v2450 = vadd.f32 %v1618, %v2034
        %v2451 = vadd.f32 %v1619, %v2035
        %v2452 = vadd.f32 %v1620, %v2036
        %v2453 = vadd.f32 %v1621, %v2037
        %v2454 = vadd.f32 %v1622, %v2038
        %v2455 = vadd.f32 %v1623, %v2039
        %v2456 = vadd.f32 %v1624, %v2040
        %v2457 = vadd.f32 %v1625, %v2041
        %v2458 = vadd.f32 %v1626, %v2042
        %v2459 = vadd.f32 %v1627, %v2043
        %v2460 = vadd.f32 %v1628, %v2044
        %v2461 = vadd.f32 %v1629, %v2045
        %v2462 = vadd.f32 %v1630, %v2046
        %v2463 = vadd.f32 %v1631, %v2047
        %v2464 = vadd.f32 %v1632, %v2048
        %v2465 = vadd.f32 %v1633, %v2049
        %v2466 = vadd.f32 %v1634, %v2050
        %v2467 = vadd.f32 %v1635, %v2051
        %v2468 = vadd.f32 %v1636, %v2052
        %v2469 = vadd.f32 %v1637, %v2053
        %v2470 = vadd.f32 %v1638, %v2054
        %v2471 = vadd.f32 %v1639, %v2055
        %v2472 = vadd.f32 %v1640, %v2056
        %v2473 = vadd.f32 %v1641, %v2057
        %v2474 = vadd.f32 %v1642, %v2058
        %v2475 = vadd.f32 %v1643, %v2059
        %v2476 = vadd.f32 %v1644, %v2060
        %v2477 = vadd.f32 %v1645, %v2061
        %v2478 = vadd.f32 %v1646, %v2062
        %v2479 = vadd.f32 %v1647, %v2063
        %v2480 = vadd.f32 %v1648, %v2064
        %v2481 = vadd.f32 %v1649, %v2065
        %v2482 = vadd.f32 %v1650, %v2066
        %v2483 = vadd.f32 %v1651, %v2067
        %v2484 = vadd.f32 %v1652, %v2068
        %v2485 = vadd.f32 %v1653, %v2069
        %v2486 = vadd.f32 %v1654, %v2070
        %v2487 = vadd.f32 %v1655, %v2071
        %v2488 = vadd.f32 %v1656, %v2072
        %v2489 = vadd.f32 %v1657, %v2073
        %v2490 = vadd.f32 %v1658, %v2074
        %v2491 = vadd.f32 %v1659, %v2075
        %v2492 = vadd.f32 %v1660, %v2076
        %v2493 = vadd.f32 %v1661, %v2077
        %v2494 = vadd.f32 %v1662, %v2078
        %v2495 = vadd.f32 %v1663, %v2079
        %v2496 = vadd.f32 %v1664, %v2080
        %v2497 = vadd.f32 %v1665, %v2081
        %v2498 = vadd.f32 %v1666, %v2082
        %v2499 = vadd.f32 %v1667, %v2083
        %v2500 = vadd.f32 %v1668, %v2084
        %v2501 = vadd.f32 %v1669, %v2085
        %v2502 = vadd.f32 %v1670, %v2086
        %v2503 = vadd.f32 %v1671, %v2087
        %v2504 = vadd.f32 %v1672, %v2088
        %v2505 = vadd.f32 %v1673, %v2089
        %v2506 = vadd.f32 %v1674, %v2090
        %v2507 = vadd.f32 %v1675, %v2091
        %v2508 = vadd.f32 %v1676, %v2092
        %v2509 = vadd.f32 %v1677, %v2093
        %v2510 = vadd.f32 %v1678, %v2094
        %v2511 = vadd.f32 %v1679, %v2095
        %v2512 = vadd.f32 %v1680, %v2096
        %v2513 = vadd.f32 %v1681, %v2097
        %v2514 = vadd.f32 %v1682, %v2098
        %v2515 = vadd.f32 %v1683, %v2099
        %v2516 = vadd.f32 %v1684, %v2100
        %v2517 = vadd.f32 %v1685, %v2101
        %v2518 = vadd.f32 %v1686, %v2102
        %v2519 = vadd.f32 %v1687, %v2103
        %v2520 = vadd.f32 %v1688, %v2104
        %v2521 = vadd.f32 %v1689, %v2105
        %v2522 = vadd.f32 %v1690, %v2106
        %v2523 = vadd.f32 %v1691, %v2107
        %v2524 = vadd.f32 %v1692, %v2108
        %v2525 = vadd.f32 %v1693, %v2109
        %v2526 = vadd.f32 %v1694, %v2110
        %v2527 = vadd.f32 %v1695, %v2111
        %v2528 = vadd.f32 %v1696, %v2112
        %v2529 = vadd.f32 %v1697, %v2113
        %v2530 = vadd.f32 %v1698, %v2114
        %v2531 = vadd.f32 %v1699, %v2115
        %v2532 = vadd.f32 %v1700, %v2116
        %v2533 = vadd.f32 %v1701, %v2117
        %v2534 = vadd.f32 %v1702, %v2118
        %v2535 = vadd.f32 %v1703, %v2119
        %v2536 = vadd.f32 %v1704, %v2120
        %v2537 = vadd.f32 %v1705, %v2121
        %v2538 = vadd.f32 %v1706, %v2122
        %v2539 = vadd.f32 %v1707, %v2123
        %v2540 = vadd.f32 %v1708, %v2124
        %v2541 = vadd.f32 %v1709, %v2125
        %v2542 = vadd.f32 %v1710, %v2126
        %v2543 = vadd.f32 %v1711, %v2127
        %v2544 = vadd.f32 %v1712, %v2128
        %v2545 = vadd.f32 %v1713, %v2129
        %v2546 = vadd.f32 %v1714, %v2130
        %v2547 = vadd.f32 %v1715, %v2131
        %v2548 = vadd.f32 %v1716, %v2132
        %v2549 = vadd.f32 %v1717, %v2133
        %v2550 = vadd.f32 %v1718, %v2134
        %v2551 = vadd.f32 %v1719, %v2135
        %v2552 = vadd.f32 %v1720, %v2136
        %v2553 = vadd.f32 %v1721, %v2137
        %v2554 = vadd.f32 %v1722, %v2138
        %v2555 = vadd.f32 %v1723, %v2139
        %v2556 = vadd.f32 %v1724, %v2140
        %v2557 = vadd.f32 %v1725, %v2141
        %v2558 = vadd.f32 %v1726, %v2142
        %v2559 = vadd.f32 %v1727, %v2143
        %v2560 = vadd.f32 %v1728, %v2144
        %v2561 = vadd.f32 %v1729, %v2145
        %v2562 = vadd.f32 %v1730, %v2146
        %v2563 = vadd.f32 %v1731, %v2147
        %v2564 = vadd.f32 %v1732, %v2148
        %v2565 = vadd.f32 %v1733, %v2149
        %v2566 = vadd.f32 %v1734, %v2150
        %v2567 = vadd.f32 %v1735, %v2151
        %v2568 = vadd.f32 %v1736, %v2152
        %v2569 = vadd.f32 %v1737, %v2153
        %v2570 = vadd.f32 %v1738, %v2154
        %v2571 = vadd.f32 %v1739, %v2155
        %v2572 = vadd.f32 %v1740, %v2156
        %v2573 = vadd.f32 %v1741, %v2157
        %v2574 = vadd.f32 %v1742, %v2158
        %v2575 = vadd.f32 %v1743, %v2159
        %v2576 = vadd.f32 %v1744, %v2160
        %v2577 = vadd.f32 %v1745, %v2161
        %v2578 = vadd.f32 %v1746, %v2162
        %v2579 = vadd.f32 %v1747, %v2163
        %v2580 = vadd.f32 %v1748, %v2164
        %v2581 = vadd.f32 %v1749, %v2165
        %v2582 = vadd.f32 %v1750, %v2166
        %v2583 = vadd.f32 %v1751, %v2167
        %v2584 = vadd.f32 %v1752, %v2168
        %v2585 = vadd.f32 %v1753, %v2169
        %v2586 = vadd.f32 %v1754, %v2170
        %v2587 = vadd.f32 %v1755, %v2171
        %v2588 = vadd.f32 %v1756, %v2172
        %v2589 = vadd.f32 %v1757, %v2173
        %v2590 = vadd.f32 %v1758, %v2174
        %v2591 = vadd.f32 %v1759, %v2175
        %v2592 = vadd.f32 %v1760, %v2176
        %v2593 = vadd.f32 %v1761, %v2177
        %v2594 = vadd.f32 %v1762, %v2178
        %v2595 = vadd.f32 %v1763, %v2179
        %v2596 = vadd.f32 %v1764, %v2180
        %v2597 = vadd.f32 %v1765, %v2181
        %v2598 = vadd.f32 %v1766, %v2182
        %v2599 = vadd.f32 %v1767, %v2183
        %v2600 = vadd.f32 %v1768, %v2184
        %v2601 = vadd.f32 %v1769, %v2185
        %v2602 = vadd.f32 %v1770, %v2186
        %v2603 = vadd.f32 %v1771, %v2187
        %v2604 = vadd.f32 %v1772, %v2188
        %v2605 = vadd.f32 %v1773, %v2189
        %v2606 = vadd.f32 %v1774, %v2190
        %v2607 = vadd.f32 %v1775, %v2191
        %v2608 = vadd.f32 %v1776, %v2192
        %v2609 = vadd.f32 %v1777, %v2193
        %v2610 = vadd.f32 %v1778, %v2194
        %v2611 = vadd.f32 %v1779, %v2195
        %v2612 = vadd.f32 %v1780, %v2196
        %v2613 = vadd.f32 %v1781, %v2197
        %v2614 = vadd.f32 %v1782, %v2198
        %v2615 = vadd.f32 %v1783, %v2199
        %v2616 = vadd.f32 %v1784, %v2200
        %v2617 = vadd.f32 %v1785, %v2201
        %v2618 = vadd.f32 %v1786, %v2202
        %v2619 = vadd.f32 %v1787, %v2203
        %v2620 = vadd.f32 %v1788, %v2204
        %v2621 = vadd.f32 %v1789, %v2205
        %v2622 = vadd.f32 %v1790, %v2206
        %v2623 = vadd.f32 %v1791, %v2207
        %v2624 = vadd.f32 %v1792, %v2208
        %v2625 = vadd.f32 %v1793, %v2209
        %v2626 = vadd.f32 %v1794, %v2210
        %v2627 = vadd.f32 %v1795, %v2211
        %v2628 = vadd.f32 %v1796, %v2212
        %v2629 = vadd.f32 %v1797, %v2213
        %v2630 = vadd.f32 %v1798, %v2214
        %v2631 = vadd.f32 %v1799, %v2215
        %v2632 = vadd.f32 %v1800, %v2216
        %v2633 = vadd.f32 %v1801, %v2217
        %v2634 = vadd.f32 %v1802, %v2218
        %v2635 = vadd.f32 %v1803, %v2219
        %v2636 = vadd.f32 %v1804, %v2220
        %v2637 = vadd.f32 %v1805, %v2221
        %v2638 = vadd.f32 %v1806, %v2222
        %v2639 = vadd.f32 %v1807, %v2223
        %v2640 = vadd.f32 %v1808, %v2224
        %v2641 = vadd.f32 %v1809, %v2225
        %v2642 = vadd.f32 %v1810, %v2226
        %v2643 = vadd.f32 %v1811, %v2227
        %v2644 = vadd.f32 %v1812, %v2228
        %v2645 = vadd.f32 %v1813, %v2229
        %v2646 = vadd.f32 %v1814, %v2230
        %v2647 = vadd.f32 %v1815, %v2231
        %v2648 = vadd.f32 %v1816, %v2232
        %v2649 = vadd.f32 %v1817, %v2233
        %v2650 = vadd.f32 %v1818, %v2234
        %v2651 = vadd.f32 %v1819, %v2235
        %v2652 = vadd.f32 %v1820, %v2236
        %v2653 = vadd.f32 %v1821, %v2237
        %v2654 = vadd.f32 %v1822, %v2238
        %v2655 = vadd.f32 %v1823, %v2239
        %v2656 = vadd.f32 %v1824, %v2240
        %v2657 = vadd.f32 %v1825, %v2241
        %v2658 = vadd.f32 %v1826, %v2242
        %v2659 = vadd.f32 %v1827, %v2243
        %v2660 = vadd.f32 %v1828, %v2244
        %v2661 = vadd.f32 %v1829, %v2245
        %v2662 = vadd.f32 %v1830, %v2246
        %v2663 = vadd.f32 %v1831, %v2247
        %v2664 = vadd.f32 %v1832, %v2248
        %v2665 = vadd.f32 %v1833, %v2249
        %v2666 = vadd.f32 %v1834, %v2250
        %v2667 = vadd.f32 %v1835, %v2251
        %v2668 = vadd.f32 %v1836, %v2252
        %v2669 = vadd.f32 %v1837, %v2253
        %v2670 = vadd.f32 %v1838, %v2254
        %v2671 = vadd.f32 %v1839, %v2255
        %v2672 = vadd.f32 %v1840, %v2256
        %v2673 = vadd.f32 %v1841, %v2257
        %v2674 = vadd.f32 %v1842, %v2258
        %v2675 = vadd.f32 %v1843, %v2259
        %v2676 = vadd.f32 %v1844, %v2260
        %v2677 = vadd.f32 %v1845, %v2261
        %v2678 = vadd.f32 %v1846, %v2262
        %v2679 = vadd.f32 %v1847, %v2263
        %v2680 = vadd.f32 %v1848, %v2264
        %v2681 = vadd.f32 %v1849, %v2265
        %v2682 = vadd.f32 %v1850, %v2266
        %v2683 = vadd.f32 %v1851, %v2267
        %v2684 = vadd.f32 %v1852, %v2268
        %v2685 = vadd.f32 %v1853, %v2269
        %v2686 = vadd.f32 %v1854, %v2270
        %v2687 = vadd.f32 %v1855, %v2271
        %v2688 = vadd.f32 %v1856, %v2272
        %v2689 = vadd.f32 %v1857, %v2273
        %v2690 = vadd.f32 %v1858, %v2274
        %v2691 = vadd.f32 %v1859, %v2275
        %v2692 = vadd.f32 %v1860, %v2276
        %v2693 = vadd.f32 %v1861, %v2277
        %v2694 = vadd.f32 %v1862, %v2278
        %v2695 = vadd.f32 %v1863, %v2279
        %v2696 = vadd.f32 %v1864, %v2280
        %v2697 = vadd.f32 %v1865, %v2281
        %v2698 = vadd.f32 %v1866, %v2282
        %v2699 = vadd.f32 %v1867, %v2283
        %v2700 = vadd.f32 %v1868, %v2284
        %v2701 = vadd.f32 %v1869, %v2285
        %v2702 = vadd.f32 %v1870, %v2286
        %v2703 = vadd.f32 %v1871, %v2287
        %v2704 = vadd.f32 %v1872, %v2288
        %v2705 = vadd.f32 %v1873, %v2289
        %v2706 = vadd.f32 %v1874, %v2290
        %v2707 = vadd.f32 %v1875, %v2291
        %v2708 = vadd.f32 %v1876, %v2292
        %v2709 = vadd.f32 %v1877, %v2293
        %v2710 = vadd.f32 %v1878, %v2294
        %v2711 = vadd.f32 %v1879, %v2295
        %v2712 = vadd.f32 %v1880, %v2296
        %v2713 = vadd.f32 %v1881, %v2297
        %v2714 = vadd.f32 %v1882, %v2298
        %v2715 = vadd.f32 %v1883, %v2299
        %v2716 = vadd.f32 %v1884, %v2300
        %v2717 = vadd.f32 %v1885, %v2301
        %v2718 = vadd.f32 %v1886, %v2302
        %v2719 = vadd.f32 %v1887, %v2303
        %v2720 = vadd.f32 %v1888, %v2304
        %v2721 = vadd.f32 %v1889, %v2305
        %v2722 = vadd.f32 %v1890, %v2306
        %v2723 = vadd.f32 %v1891, %v2307
        %v2724 = vadd.f32 %v1892, %v2308
        %v2725 = vadd.f32 %v1893, %v2309
        %v2726 = vadd.f32 %v1894, %v2310
        %v2727 = vadd.f32 %v1895, %v2311
        %v2728 = vadd.f32 %v1896, %v2312
        %v2729 = vadd.f32 %v1897, %v2313
        %v2730 = vadd.f32 %v1898, %v2314
        %v2731 = vadd.f32 %v1899, %v2315
        %v2732 = vadd.f32 %v1900, %v2316
        %v2733 = vadd.f32 %v1901, %v2317
        %v2734 = vadd.f32 %v1902, %v2318
        %v2735 = vadd.f32 %v1903, %v2319
        %v2736 = vadd.f32 %v1904, %v2320
        %v2737 = vadd.f32 %v1905, %v2321
        %v2738 = vadd.f32 %v1906, %v2322
        %v2739 = vadd.f32 %v1907, %v2323
        %v2740 = vadd.f32 %v1908, %v2324
        %v2741 = vadd.f32 %v1909, %v2325
        %v2742 = vadd.f32 %v1910, %v2326
        %v2743 = vadd.f32 %v1911, %v2327
        %v2744 = vadd.f32 %v1912, %v2328
        %v2745 = vadd.f32 %v1913, %v2329
        %v2746 = vadd.f32 %v1914, %v2330
        %v2747 = vadd.f32 %v1915, %v2331
        %v2748 = vadd.f32 %v1916, %v2332
        %v2749 = vadd.f32 %v1917, %v2333
        %v2750 = vadd.f32 %v1918, %v2334
        %v2751 = vadd.f32 %v1919, %v2335
        %v2752 = vadd.f32 %v1920, %v2336
        %v2753 = vadd.f32 %v1921, %v2337
        %v2754 = vadd.f32 %v1922, %v2338
        %v2755 = vadd.f32 %v1923, %v2339
        %v2756 = vadd.f32 %v1924, %v2340
        %v2757 = vadd.f32 %v1925, %v2341
        %v2758 = vadd.f32 %v1926, %v2342
        %v2759 = vadd.f32 %v1927, %v2343
        %v2760 = vadd.f32 %v1928, %v2344
        %v2761 = vadd.f32 %v1929, %v2345
        %v2762 = vadd.f32 %v1930, %v2346
        %v2763 = vadd.f32 %v1931, %v2347
        %v2764 = vadd.f32 %v1932, %v2348
        %v2765 = vadd.f32 %v1933, %v2349
        %v2766 = vadd.f32 %v1934, %v2350
        %v2767 = vadd.f32 %v1935, %v2351
        %v2768 = vadd.f32 %v1936, %v2352
        %v2769 = vadd.f32 %v1937, %v2353
        %v2770 = vadd.f32 %v1938, %v2354
        %v2771 = vadd.f32 %v1939, %v2355
        %v2772 = vadd.f32 %v1940, %v2356
        %v2773 = vadd.f32 %v1941, %v2357
        %v2774 = vadd.f32 %v1942, %v2358
        %v2775 = vadd.f32 %v1943, %v2359
        %v2776 = vadd.f32 %v1944, %v2360
        %v2777 = vadd.f32 %v1945, %v2361
        %v2778 = vadd.f32 %v1946, %v2362
        %v2779 = vadd.f32 %v1947, %v2363
        %v2780 = vadd.f32 %v1948, %v2364
        %v2781 = vadd.f32 %v1949, %v2365
        %v2782 = vadd.f32 %v1950, %v2366
        %v2783 = vadd.f32 %v1951, %v2367
        %v2784 = vadd.f32 %v1952, %v2368
        %v2785 = vadd.f32 %v1953, %v2369
        %v2786 = vadd.f32 %v1954, %v2370
        %v2787 = vadd.f32 %v1955, %v2371
        %v2788 = vadd.f32 %v1956, %v2372
        %v2789 = vadd.f32 %v1957, %v2373
        %v2790 = vadd.f32 %v1958, %v2374
        %v2791 = vadd.f32 %v1959, %v2375
        %v2792 = vadd.f32 %v1960, %v2376
        %v2793 = vmax.f32 %v2377, 0.0
        %v2794 = vmax.f32 %v2378, 0.0
        %v2795 = vmax.f32 %v2379, 0.0
        %v2796 = vmax.f32 %v2380, 0.0
        %v2797 = vmax.f32 %v2381, 0.0
        %v2798 = vmax.f32 %v2382, 0.0
        %v2799 = vmax.f32 %v2383, 0.0
        %v2800 = vmax.f32 %v2384, 0.0
        %v2801 = vmax.f32 %v2385, 0.0
        %v2802 = vmax.f32 %v2386, 0.0
        %v2803 = vmax.f32 %v2387, 0.0
        %v2804 = vmax.f32 %v2388, 0.0
        %v2805 = vmax.f32 %v2389, 0.0
        %v2806 = vmax.f32 %v2390, 0.0
        %v2807 = vmax.f32 %v2391, 0.0
        %v2808 = vmax.f32 %v2392, 0.0
        %v2809 = vmax.f32 %v2393, 0.0
        %v2810 = vmax.f32 %v2394, 0.0
        %v2811 = vmax.f32 %v2395, 0.0
        %v2812 = vmax.f32 %v2396, 0.0
        %v2813 = vmax.f32 %v2397, 0.0
        %v2814 = vmax.f32 %v2398, 0.0
        %v2815 = vmax.f32 %v2399, 0.0
        %v2816 = vmax.f32 %v2400, 0.0
        %v2817 = vmax.f32 %v2401, 0.0
        %v2818 = vmax.f32 %v2402, 0.0
        %v2819 = vmax.f32 %v2403, 0.0
        %v2820 = vmax.f32 %v2404, 0.0
        %v2821 = vmax.f32 %v2405, 0.0
        %v2822 = vmax.f32 %v2406, 0.0
        %v2823 = vmax.f32 %v2407, 0.0
        %v2824 = vmax.f32 %v2408, 0.0
        %v2825 = vmax.f32 %v2409, 0.0
        %v2826 = vmax.f32 %v2410, 0.0
        %v2827 = vmax.f32 %v2411, 0.0
        %v2828 = vmax.f32 %v2412, 0.0
        %v2829 = vmax.f32 %v2413, 0.0
        %v2830 = vmax.f32 %v2414, 0.0
        %v2831 = vmax.f32 %v2415, 0.0
        %v2832 = vmax.f32 %v2416, 0.0
        %v2833 = vmax.f32 %v2417, 0.0
        %v2834 = vmax.f32 %v2418, 0.0
        %v2835 = vmax.f32 %v2419, 0.0
        %v2836 = vmax.f32 %v2420, 0.0
        %v2837 = vmax.f32 %v2421, 0.0
        %v2838 = vmax.f32 %v2422, 0.0
        %v2839 = vmax.f32 %v2423, 0.0
        %v2840 = vmax.f32 %v2424, 0.0
        %v2841 = vmax.f32 %v2425, 0.0
        %v2842 = vmax.f32 %v2426, 0.0
        %v2843 = vmax.f32 %v2427, 0.0
        %v2844 = vmax.f32 %v2428, 0.0
        %v2845 = vmax.f32 %v2429, 0.0
        %v2846 = vmax.f32 %v2430, 0.0
        %v2847 = vmax.f32 %v2431, 0.0
        %v2848 = vmax.f32 %v2432, 0.0
        %v2849 = vmax.f32 %v2433, 0.0
        %v2850 = vmax.f32 %v2434, 0.0
        %v2851 = vmax.f32 %v2435, 0.0
        %v2852 = vmax.f32 %v2436, 0.0
        %v2853 = vmax.f32 %v2437, 0.0
        %v2854 = vmax.f32 %v2438, 0.0
        %v2855 = vmax.f32 %v2439, 0.0
        %v2856 = vmax.f32 %v2440, 0.0
        %v2857 = vmax.f32 %v2441, 0.0
        %v2858 = vmax.f32 %v2442, 0.0
        %v2859 = vmax.f32 %v2443, 0.0
        %v2860 = vmax.f32 %v2444, 0.0
        %v2861 = vmax.f32 %v2445, 0.0
        %v2862 = vmax.f32 %v2446, 0.0
        %v2863 = vmax.f32 %v2447, 0.0
        %v2864 = vmax.f32 %v2448, 0.0
        %v2865 = vmax.f32 %v2449, 0.0
        %v2866 = vmax.f32 %v2450, 0.0
        %v2867 = vmax.f32 %v2451, 0.0
        %v2868 = vmax.f32 %v2452, 0.0
        %v2869 = vmax.f32 %v2453, 0.0
        %v2870 = vmax.f32 %v2454, 0.0
        %v2871 = vmax.f32 %v2455, 0.0
        %v2872 = vmax.f32 %v2456, 0.0
        %v2873 = vmax.f32 %v2457, 0.0
        %v2874 = vmax.f32 %v2458, 0.0
        %v2875 = vmax.f32 %v2459, 0.0
        %v2876 = vmax.f32 %v2460, 0.0
        %v2877 = vmax.f32 %v2461, 0.0
        %v2878 = vmax.f32 %v2462, 0.0
        %v2879 = vmax.f32 %v2463, 0.0
        %v2880 = vmax.f32 %v2464, 0.0
        %v2881 = vmax.f32 %v2465, 0.0
        %v2882 = vmax.f32 %v2466, 0.0
        %v2883 = vmax.f32 %v2467, 0.0
        %v2884 = vmax.f32 %v2468, 0.0
        %v2885 = vmax.f32 %v2469, 0.0
        %v2886 = vmax.f32 %v2470, 0.0
        %v2887 = vmax.f32 %v2471, 0.0
        %v2888 = vmax.f32 %v2472, 0.0
        %v2889 = vmax.f32 %v2473, 0.0
        %v2890 = vmax.f32 %v2474, 0.0
        %v2891 = vmax.f32 %v2475, 0.0
        %v2892 = vmax.f32 %v2476, 0.0
        %v2893 = vmax.f32 %v2477, 0.0
        %v2894 = vmax.f32 %v2478, 0.0
        %v2895 = vmax.f32 %v2479, 0.0
        %v2896 = vmax.f32 %v2480, 0.0
        %v2897 = vmax.f32 %v2481, 0.0
        %v2898 = vmax.f32 %v2482, 0.0
        %v2899 = vmax.f32 %v2483, 0.0
        %v2900 = vmax.f32 %v2484, 0.0
        %v2901 = vmax.f32 %v2485, 0.0
        %v2902 = vmax.f32 %v2486, 0.0
        %v2903 = vmax.f32 %v2487, 0.0
        %v2904 = vmax.f32 %v2488, 0.0
        %v2905 = vmax.f32 %v2489, 0.0
        %v2906 = vmax.f32 %v2490, 0.0
        %v2907 = vmax.f32 %v2491, 0.0
        %v2908 = vmax.f32 %v2492, 0.0
        %v2909 = vmax.f32 %v2493, 0.0
        %v2910 = vmax.f32 %v2494, 0.0
        %v2911 = vmax.f32 %v2495, 0.0
        %v2912 = vmax.f32 %v2496, 0.0
        %v2913 = vmax.f32 %v2497, 0.0
        %v2914 = vmax.f32 %v2498, 0.0
        %v2915 = vmax.f32 %v2499, 0.0
        %v2916 = vmax.f32 %v2500, 0.0
        %v2917 = vmax.f32 %v2501, 0.0
        %v2918 = vmax.f32 %v2502, 0.0
        %v2919 = vmax.f32 %v2503, 0.0
        %v2920 = vmax.f32 %v2504, 0.0
        %v2921 = vmax.f32 %v2505, 0.0
        %v2922 = vmax.f32 %v2506, 0.0
        %v2923 = vmax.f32 %v2507, 0.0
        %v2924 = vmax.f32 %v2508, 0.0
        %v2925 = vmax.f32 %v2509, 0.0
        %v2926 = vmax.f32 %v2510, 0.0
        %v2927 = vmax.f32 %v2511, 0.0
        %v2928 = vmax.f32 %v2512, 0.0
        %v2929 = vmax.f32 %v2513, 0.0
        %v2930 = vmax.f32 %v2514, 0.0
        %v2931 = vmax.f32 %v2515, 0.0
        %v2932 = vmax.f32 %v2516, 0.0
        %v2933 = vmax.f32 %v2517, 0.0
        %v2934 = vmax.f32 %v2518, 0.0
        %v2935 = vmax.f32 %v2519, 0.0
        %v2936 = vmax.f32 %v2520, 0.0
        %v2937 = vmax.f32 %v2521, 0.0
        %v2938 = vmax.f32 %v2522, 0.0
        %v2939 = vmax.f32 %v2523, 0.0
        %v2940 = vmax.f32 %v2524, 0.0
        %v2941 = vmax.f32 %v2525, 0.0
        %v2942 = vmax.f32 %v2526, 0.0
        %v2943 = vmax.f32 %v2527, 0.0
        %v2944 = vmax.f32 %v2528, 0.0
        %v2945 = vmax.f32 %v2529, 0.0
        %v2946 = vmax.f32 %v2530, 0.0
        %v2947 = vmax.f32 %v2531, 0.0
        %v2948 = vmax.f32 %v2532, 0.0
        %v2949 = vmax.f32 %v2533, 0.0
        %v2950 = vmax.f32 %v2534, 0.0
        %v2951 = vmax.f32 %v2535, 0.0
        %v2952 = vmax.f32 %v2536, 0.0
        %v2953 = vmax.f32 %v2537, 0.0
        %v2954 = vmax.f32 %v2538, 0.0
        %v2955 = vmax.f32 %v2539, 0.0
        %v2956 = vmax.f32 %v2540, 0.0
        %v2957 = vmax.f32 %v2541, 0.0
        %v2958 = vmax.f32 %v2542, 0.0
        %v2959 = vmax.f32 %v2543, 0.0
        %v2960 = vmax.f32 %v2544, 0.0
        %v2961 = vmax.f32 %v2545, 0.0
        %v2962 = vmax.f32 %v2546, 0.0
        %v2963 = vmax.f32 %v2547, 0.0
        %v2964 = vmax.f32 %v2548, 0.0
        %v2965 = vmax.f32 %v2549, 0.0
        %v2966 = vmax.f32 %v2550, 0.0
        %v2967 = vmax.f32 %v2551, 0.0
        %v2968 = vmax.f32 %v2552, 0.0
        %v2969 = vmax.f32 %v2553, 0.0
        %v2970 = vmax.f32 %v2554, 0.0
        %v2971 = vmax.f32 %v2555, 0.0
        %v2972 = vmax.f32 %v2556, 0.0
        %v2973 = vmax.f32 %v2557, 0.0
        %v2974 = vmax.f32 %v2558, 0.0
        %v2975 = vmax.f32 %v2559, 0.0
        %v2976 = vmax.f32 %v2560, 0.0
        %v2977 = vmax.f32 %v2561, 0.0
        %v2978 = vmax.f32 %v2562, 0.0
        %v2979 = vmax.f32 %v2563, 0.0
        %v2980 = vmax.f32 %v2564, 0.0
        %v2981 = vmax.f32 %v2565, 0.0
        %v2982 = vmax.f32 %v2566, 0.0
        %v2983 = vmax.f32 %v2567, 0.0
        %v2984 = vmax.f32 %v2568, 0.0
        %v2985 = vmax.f32 %v2569, 0.0
        %v2986 = vmax.f32 %v2570, 0.0
        %v2987 = vmax.f32 %v2571, 0.0
        %v2988 = vmax.f32 %v2572, 0.0
        %v2989 = vmax.f32 %v2573, 0.0
        %v2990 = vmax.f32 %v2574, 0.0
        %v2991 = vmax.f32 %v2575, 0.0
        %v2992 = vmax.f32 %v2576, 0.0
        %v2993 = vmax.f32 %v2577, 0.0
        %v2994 = vmax.f32 %v2578, 0.0
        %v2995 = vmax.f32 %v2579, 0.0
        %v2996 = vmax.f32 %v2580, 0.0
        %v2997 = vmax.f32 %v2581, 0.0
        %v2998 = vmax.f32 %v2582, 0.0
        %v2999 = vmax.f32 %v2583, 0.0
        %v3000 = vmax.f32 %v2584, 0.0
        %v3001 = vmax.f32 %v2585, 0.0
        %v3002 = vmax.f32 %v2586, 0.0
        %v3003 = vmax.f32 %v2587, 0.0
        %v3004 = vmax.f32 %v2588, 0.0
        %v3005 = vmax.f32 %v2589, 0.0
        %v3006 = vmax.f32 %v2590, 0.0
        %v3007 = vmax.f32 %v2591, 0.0
        %v3008 = vmax.f32 %v2592, 0.0
        %v3009 = vmax.f32 %v2593, 0.0
        %v3010 = vmax.f32 %v2594, 0.0
        %v3011 = vmax.f32 %v2595, 0.0
        %v3012 = vmax.f32 %v2596, 0.0
        %v3013 = vmax.f32 %v2597, 0.0
        %v3014 = vmax.f32 %v2598, 0.0
        %v3015 = vmax.f32 %v2599, 0.0
        %v3016 = vmax.f32 %v2600, 0.0
        %v3017 = vmax.f32 %v2601, 0.0
        %v3018 = vmax.f32 %v2602, 0.0
        %v3019 = vmax.f32 %v2603, 0.0
        %v3020 = vmax.f32 %v2604, 0.0
        %v3021 = vmax.f32 %v2605, 0.0
        %v3022 = vmax.f32 %v2606, 0.0
        %v3023 = vmax.f32 %v2607, 0.0
        %v3024 = vmax.f32 %v2608, 0.0
        %v3025 = vmax.f32 %v2609, 0.0
        %v3026 = vmax.f32 %v2610, 0.0
        %v3027 = vmax.f32 %v2611, 0.0
        %v3028 = vmax.f32 %v2612, 0.0
        %v3029 = vmax.f32 %v2613, 0.0
        %v3030 = vmax.f32 %v2614, 0.0
        %v3031 = vmax.f32 %v2615, 0.0
        %v3032 = vmax.f32 %v2616, 0.0
        %v3033 = vmax.f32 %v2617, 0.0
        %v3034 = vmax.f32 %v2618, 0.0
        %v3035 = vmax.f32 %v2619, 0.0
        %v3036 = vmax.f32 %v2620, 0.0
        %v3037 = vmax.f32 %v2621, 0.0
        %v3038 = vmax.f32 %v2622, 0.0
        %v3039 = vmax.f32 %v2623, 0.0
        %v3040 = vmax.f32 %v2624, 0.0
        %v3041 = vmax.f32 %v2625, 0.0
        %v3042 = vmax.f32 %v2626, 0.0
        %v3043 = vmax.f32 %v2627, 0.0
        %v3044 = vmax.f32 %v2628, 0.0
        %v3045 = vmax.f32 %v2629, 0.0
        %v3046 = vmax.f32 %v2630, 0.0
        %v3047 = vmax.f32 %v2631, 0.0
        %v3048 = vmax.f32 %v2632, 0.0
        %v3049 = vmax.f32 %v2633, 0.0
        %v3050 = vmax.f32 %v2634, 0.0
        %v3051 = vmax.f32 %v2635, 0.0
        %v3052 = vmax.f32 %v2636, 0.0
        %v3053 = vmax.f32 %v2637, 0.0
        %v3054 = vmax.f32 %v2638, 0.0
        %v3055 = vmax.f32 %v2639, 0.0
        %v3056 = vmax.f32 %v2640, 0.0
        %v3057 = vmax.f32 %v2641, 0.0
        %v3058 = vmax.f32 %v2642, 0.0
        %v3059 = vmax.f32 %v2643, 0.0
        %v3060 = vmax.f32 %v2644, 0.0
        %v3061 = vmax.f32 %v2645, 0.0
        %v3062 = vmax.f32 %v2646, 0.0
        %v3063 = vmax.f32 %v2647, 0.0
        %v3064 = vmax.f32 %v2648, 0.0
        %v3065 = vmax.f32 %v2649, 0.0
        %v3066 = vmax.f32 %v2650, 0.0
        %v3067 = vmax.f32 %v2651, 0.0
        %v3068 = vmax.f32 %v2652, 0.0
        %v3069 = vmax.f32 %v2653, 0.0
        %v3070 = vmax.f32 %v2654, 0.0
        %v3071 = vmax.f32 %v2655, 0.0
        %v3072 = vmax.f32 %v2656, 0.0
        %v3073 = vmax.f32 %v2657, 0.0
        %v3074 = vmax.f32 %v2658, 0.0
        %v3075 = vmax.f32 %v2659, 0.0
        %v3076 = vmax.f32 %v2660, 0.0
        %v3077 = vmax.f32 %v2661, 0.0
        %v3078 = vmax.f32 %v2662, 0.0
        %v3079 = vmax.f32 %v2663, 0.0
        %v3080 = vmax.f32 %v2664, 0.0
        %v3081 = vmax.f32 %v2665, 0.0
        %v3082 = vmax.f32 %v2666, 0.0
        %v3083 = vmax.f32 %v2667, 0.0
        %v3084 = vmax.f32 %v2668, 0.0
        %v3085 = vmax.f32 %v2669, 0.0
        %v3086 = vmax.f32 %v2670, 0.0
        %v3087 = vmax.f32 %v2671, 0.0
        %v3088 = vmax.f32 %v2672, 0.0
        %v3089 = vmax.f32 %v2673, 0.0
        %v3090 = vmax.f32 %v2674, 0.0
        %v3091 = vmax.f32 %v2675, 0.0
        %v3092 = vmax.f32 %v2676, 0.0
        %v3093 = vmax.f32 %v2677, 0.0
        %v3094 = vmax.f32 %v2678, 0.0
        %v3095 = vmax.f32 %v2679, 0.0
        %v3096 = vmax.f32 %v2680, 0.0
        %v3097 = vmax.f32 %v2681, 0.0
        %v3098 = vmax.f32 %v2682, 0.0
        %v3099 = vmax.f32 %v2683, 0.0
        %v3100 = vmax.f32 %v2684, 0.0
        %v3101 = vmax.f32 %v2685, 0.0
        %v3102 = vmax.f32 %v2686, 0.0
        %v3103 = vmax.f32 %v2687, 0.0
        %v3104 = vmax.f32 %v2688, 0.0
        %v3105 = vmax.f32 %v2689, 0.0
        %v3106 = vmax.f32 %v2690, 0.0
        %v3107 = vmax.f32 %v2691, 0.0
        %v3108 = vmax.f32 %v2692, 0.0
        %v3109 = vmax.f32 %v2693, 0.0
        %v3110 = vmax.f32 %v2694, 0.0
        %v3111 = vmax.f32 %v2695, 0.0
        %v3112 = vmax.f32 %v2696, 0.0
        %v3113 = vmax.f32 %v2697, 0.0
        %v3114 = vmax.f32 %v2698, 0.0
        %v3115 = vmax.f32 %v2699, 0.0
        %v3116 = vmax.f32 %v2700, 0.0
        %v3117 = vmax.f32 %v2701, 0.0
        %v3118 = vmax.f32 %v2702, 0.0
        %v3119 = vmax.f32 %v2703, 0.0
        %v3120 = vmax.f32 %v2704, 0.0
        %v3121 = vmax.f32 %v2705, 0.0
        %v3122 = vmax.f32 %v2706, 0.0
        %v3123 = vmax.f32 %v2707, 0.0
        %v3124 = vmax.f32 %v2708, 0.0
        %v3125 = vmax.f32 %v2709, 0.0
        %v3126 = vmax.f32 %v2710, 0.0
        %v3127 = vmax.f32 %v2711, 0.0
        %v3128 = vmax.f32 %v2712, 0.0
        %v3129 = vmax.f32 %v2713, 0.0
        %v3130 = vmax.f32 %v2714, 0.0
        %v3131 = vmax.f32 %v2715, 0.0
        %v3132 = vmax.f32 %v2716, 0.0
        %v3133 = vmax.f32 %v2717, 0.0
        %v3134 = vmax.f32 %v2718, 0.0
        %v3135 = vmax.f32 %v2719, 0.0
        %v3136 = vmax.f32 %v2720, 0.0
        %v3137 = vmax.f32 %v2721, 0.0
        %v3138 = vmax.f32 %v2722, 0.0
        %v3139 = vmax.f32 %v2723, 0.0
        %v3140 = vmax.f32 %v2724, 0.0
        %v3141 = vmax.f32 %v2725, 0.0
        %v3142 = vmax.f32 %v2726, 0.0
        %v3143 = vmax.f32 %v2727, 0.0
        %v3144 = vmax.f32 %v2728, 0.0
        %v3145 = vmax.f32 %v2729, 0.0
        %v3146 = vmax.f32 %v2730, 0.0
        %v3147 = vmax.f32 %v2731, 0.0
        %v3148 = vmax.f32 %v2732, 0.0
        %v3149 = vmax.f32 %v2733, 0.0
        %v3150 = vmax.f32 %v2734, 0.0
        %v3151 = vmax.f32 %v2735, 0.0
        %v3152 = vmax.f32 %v2736, 0.0
        %v3153 = vmax.f32 %v2737, 0.0
        %v3154 = vmax.f32 %v2738, 0.0
        %v3155 = vmax.f32 %v2739, 0.0
        %v3156 = vmax.f32 %v2740, 0.0
        %v3157 = vmax.f32 %v2741, 0.0
        %v3158 = vmax.f32 %v2742, 0.0
        %v3159 = vmax.f32 %v2743, 0.0
        %v3160 = vmax.f32 %v2744, 0.0
        %v3161 = vmax.f32 %v2745, 0.0
        %v3162 = vmax.f32 %v2746, 0.0
        %v3163 = vmax.f32 %v2747, 0.0
        %v3164 = vmax.f32 %v2748, 0.0
        %v3165 = vmax.f32 %v2749, 0.0
        %v3166 = vmax.f32 %v2750, 0.0
        %v3167 = vmax.f32 %v2751, 0.0
        %v3168 = vmax.f32 %v2752, 0.0
        %v3169 = vmax.f32 %v2753, 0.0
        %v3170 = vmax.f32 %v2754, 0.0
        %v3171 = vmax.f32 %v2755, 0.0
        %v3172 = vmax.f32 %v2756, 0.0
        %v3173 = vmax.f32 %v2757, 0.0
        %v3174 = vmax.f32 %v2758, 0.0
        %v3175 = vmax.f32 %v2759, 0.0
        %v3176 = vmax.f32 %v2760, 0.0
        %v3177 = vmax.f32 %v2761, 0.0
        %v3178 = vmax.f32 %v2762, 0.0
        %v3179 = vmax.f32 %v2763, 0.0
        %v3180 = vmax.f32 %v2764, 0.0
        %v3181 = vmax.f32 %v2765, 0.0
        %v3182 = vmax.f32 %v2766, 0.0
        %v3183 = vmax.f32 %v2767, 0.0
        %v3184 = vmax.f32 %v2768, 0.0
        %v3185 = vmax.f32 %v2769, 0.0
        %v3186 = vmax.f32 %v2770, 0.0
        %v3187 = vmax.f32 %v2771, 0.0
        %v3188 = vmax.f32 %v2772, 0.0
        %v3189 = vmax.f32 %v2773, 0.0
        %v3190 = vmax.f32 %v2774, 0.0
        %v3191 = vmax.f32 %v2775, 0.0
        %v3192 = vmax.f32 %v2776, 0.0
        %v3193 = vmax.f32 %v2777, 0.0
        %v3194 = vmax.f32 %v2778, 0.0
        %v3195 = vmax.f32 %v2779, 0.0
        %v3196 = vmax.f32 %v2780, 0.0
        %v3197 = vmax.f32 %v2781, 0.0
        %v3198 = vmax.f32 %v2782, 0.0
        %v3199 = vmax.f32 %v2783, 0.0
        %v3200 = vmax.f32 %v2784, 0.0
        %v3201 = vmax.f32 %v2785, 0.0
        %v3202 = vmax.f32 %v2786, 0.0
        %v3203 = vmax.f32 %v2787, 0.0
        %v3204 = vmax.f32 %v2788, 0.0
        %v3205 = vmax.f32 %v2789, 0.0
        %v3206 = vmax.f32 %v2790, 0.0
        %v3207 = vmax.f32 %v2791, 0.0
        %v3208 = vmax.f32 %v2792, 0.0
        %v3209 = vpack.c.bf16 %v2806, %v2793
        %v3210 = vpack.c.bf16 %v2807, %v2794
        %v3211 = vpack.c.bf16 %v2808, %v2795
        %v3212 = vpack.c.bf16 %v2809, %v2796
        %v3213 = vpack.c.bf16 %v2810, %v2797
        %v3214 = vpack.c.bf16 %v2811, %v2798
        %v3215 = vpack.c.bf16 %v2812, %v2799
        %v3216 = vpack.c.bf16 %v2813, %v2800
        %v3217 = vpack.c.bf16 %v2814, %v2801
        %v3218 = vpack.c.bf16 %v2815, %v2802
        %v3219 = vpack.c.bf16 %v2816, %v2803
        %v3220 = vpack.c.bf16 %v2817, %v2804
        %v3221 = vpack.c.bf16 %v2818, %v2805
        %v3222 = vpack.c.bf16 %v2832, %v2819
        %v3223 = vpack.c.bf16 %v2833, %v2820
        %v3224 = vpack.c.bf16 %v2834, %v2821
        %v3225 = vpack.c.bf16 %v2835, %v2822
        %v3226 = vpack.c.bf16 %v2836, %v2823
        %v3227 = vpack.c.bf16 %v2837, %v2824
        %v3228 = vpack.c.bf16 %v2838, %v2825
        %v3229 = vpack.c.bf16 %v2839, %v2826
        %v3230 = vpack.c.bf16 %v2840, %v2827
        %v3231 = vpack.c.bf16 %v2841, %v2828
        %v3232 = vpack.c.bf16 %v2842, %v2829
        %v3233 = vpack.c.bf16 %v2843, %v2830
        %v3234 = vpack.c.bf16 %v2844, %v2831
        %v3235 = vpack.c.bf16 %v2858, %v2845
        %v3236 = vpack.c.bf16 %v2859, %v2846
        %v3237 = vpack.c.bf16 %v2860, %v2847
        %v3238 = vpack.c.bf16 %v2861, %v2848
        %v3239 = vpack.c.bf16 %v2862, %v2849
        %v3240 = vpack.c.bf16 %v2863, %v2850
        %v3241 = vpack.c.bf16 %v2864, %v2851
        %v3242 = vpack.c.bf16 %v2865, %v2852
        %v3243 = vpack.c.bf16 %v2866, %v2853
        %v3244 = vpack.c.bf16 %v2867, %v2854
        %v3245 = vpack.c.bf16 %v2868, %v2855
        %v3246 = vpack.c.bf16 %v2869, %v2856
        %v3247 = vpack.c.bf16 %v2870, %v2857
        %v3248 = vpack.c.bf16 %v2884, %v2871
        %v3249 = vpack.c.bf16 %v2885, %v2872
        %v3250 = vpack.c.bf16 %v2886, %v2873
        %v3251 = vpack.c.bf16 %v2887, %v2874
        %v3252 = vpack.c.bf16 %v2888, %v2875
        %v3253 = vpack.c.bf16 %v2889, %v2876
        %v3254 = vpack.c.bf16 %v2890, %v2877
        %v3255 = vpack.c.bf16 %v2891, %v2878
        %v3256 = vpack.c.bf16 %v2892, %v2879
        %v3257 = vpack.c.bf16 %v2893, %v2880
        %v3258 = vpack.c.bf16 %v2894, %v2881
        %v3259 = vpack.c.bf16 %v2895, %v2882
        %v3260 = vpack.c.bf16 %v2896, %v2883
        %v3261 = vpack.c.bf16 %v2910, %v2897
        %v3262 = vpack.c.bf16 %v2911, %v2898
        %v3263 = vpack.c.bf16 %v2912, %v2899
        %v3264 = vpack.c.bf16 %v2913, %v2900
        %v3265 = vpack.c.bf16 %v2914, %v2901
        %v3266 = vpack.c.bf16 %v2915, %v2902
        %v3267 = vpack.c.bf16 %v2916, %v2903
        %v3268 = vpack.c.bf16 %v2917, %v2904
        %v3269 = vpack.c.bf16 %v2918, %v2905
        %v3270 = vpack.c.bf16 %v2919, %v2906
        %v3271 = vpack.c.bf16 %v2920, %v2907
        %v3272 = vpack.c.bf16 %v2921, %v2908
        %v3273 = vpack.c.bf16 %v2922, %v2909
        %v3274 = vpack.c.bf16 %v2936, %v2923
        %v3275 = vpack.c.bf16 %v2937, %v2924
        %v3276 = vpack.c.bf16 %v2938, %v2925
        %v3277 = vpack.c.bf16 %v2939, %v2926
        %v3278 = vpack.c.bf16 %v2940, %v2927
        %v3279 = vpack.c.bf16 %v2941, %v2928
        %v3280 = vpack.c.bf16 %v2942, %v2929
        %v3281 = vpack.c.bf16 %v2943, %v2930
        %v3282 = vpack.c.bf16 %v2944, %v2931
        %v3283 = vpack.c.bf16 %v2945, %v2932
        %v3284 = vpack.c.bf16 %v2946, %v2933
        %v3285 = vpack.c.bf16 %v2947, %v2934
        %v3286 = vpack.c.bf16 %v2948, %v2935
        %v3287 = vpack.c.bf16 %v2962, %v2949
        %v3288 = vpack.c.bf16 %v2963, %v2950
        %v3289 = vpack.c.bf16 %v2964, %v2951
        %v3290 = vpack.c.bf16 %v2965, %v2952
        %v3291 = vpack.c.bf16 %v2966, %v2953
        %v3292 = vpack.c.bf16 %v2967, %v2954
        %v3293 = vpack.c.bf16 %v2968, %v2955
        %v3294 = vpack.c.bf16 %v2969, %v2956
        %v3295 = vpack.c.bf16 %v2970, %v2957
        %v3296 = vpack.c.bf16 %v2971, %v2958
        %v3297 = vpack.c.bf16 %v2972, %v2959
        %v3298 = vpack.c.bf16 %v2973, %v2960
        %v3299 = vpack.c.bf16 %v2974, %v2961
        %v3300 = vpack.c.bf16 %v2988, %v2975
        %v3301 = vpack.c.bf16 %v2989, %v2976
        %v3302 = vpack.c.bf16 %v2990, %v2977
        %v3303 = vpack.c.bf16 %v2991, %v2978
        %v3304 = vpack.c.bf16 %v2992, %v2979
        %v3305 = vpack.c.bf16 %v2993, %v2980
        %v3306 = vpack.c.bf16 %v2994, %v2981
        %v3307 = vpack.c.bf16 %v2995, %v2982
        %v3308 = vpack.c.bf16 %v2996, %v2983
        %v3309 = vpack.c.bf16 %v2997, %v2984
        %v3310 = vpack.c.bf16 %v2998, %v2985
        %v3311 = vpack.c.bf16 %v2999, %v2986
        %v3312 = vpack.c.bf16 %v3000, %v2987
        %v3313 = vpack.c.bf16 %v3014, %v3001
        %v3314 = vpack.c.bf16 %v3015, %v3002
        %v3315 = vpack.c.bf16 %v3016, %v3003
        %v3316 = vpack.c.bf16 %v3017, %v3004
        %v3317 = vpack.c.bf16 %v3018, %v3005
        %v3318 = vpack.c.bf16 %v3019, %v3006
        %v3319 = vpack.c.bf16 %v3020, %v3007
        %v3320 = vpack.c.bf16 %v3021, %v3008
        %v3321 = vpack.c.bf16 %v3022, %v3009
        %v3322 = vpack.c.bf16 %v3023, %v3010
        %v3323 = vpack.c.bf16 %v3024, %v3011
        %v3324 = vpack.c.bf16 %v3025, %v3012
        %v3325 = vpack.c.bf16 %v3026, %v3013
        %v3326 = vpack.c.bf16 %v3040, %v3027
        %v3327 = vpack.c.bf16 %v3041, %v3028
        %v3328 = vpack.c.bf16 %v3042, %v3029
        %v3329 = vpack.c.bf16 %v3043, %v3030
        %v3330 = vpack.c.bf16 %v3044, %v3031
        %v3331 = vpack.c.bf16 %v3045, %v3032
        %v3332 = vpack.c.bf16 %v3046, %v3033
        %v3333 = vpack.c.bf16 %v3047, %v3034
        %v3334 = vpack.c.bf16 %v3048, %v3035
        %v3335 = vpack.c.bf16 %v3049, %v3036
        %v3336 = vpack.c.bf16 %v3050, %v3037
        %v3337 = vpack.c.bf16 %v3051, %v3038
        %v3338 = vpack.c.bf16 %v3052, %v3039
        %v3339 = vpack.c.bf16 %v3066, %v3053
        %v3340 = vpack.c.bf16 %v3067, %v3054
        %v3341 = vpack.c.bf16 %v3068, %v3055
        %v3342 = vpack.c.bf16 %v3069, %v3056
        %v3343 = vpack.c.bf16 %v3070, %v3057
        %v3344 = vpack.c.bf16 %v3071, %v3058
        %v3345 = vpack.c.bf16 %v3072, %v3059
        %v3346 = vpack.c.bf16 %v3073, %v3060
        %v3347 = vpack.c.bf16 %v3074, %v3061
        %v3348 = vpack.c.bf16 %v3075, %v3062
        %v3349 = vpack.c.bf16 %v3076, %v3063
        %v3350 = vpack.c.bf16 %v3077, %v3064
        %v3351 = vpack.c.bf16 %v3078, %v3065
        %v3352 = vpack.c.bf16 %v3092, %v3079
        %v3353 = vpack.c.bf16 %v3093, %v3080
        %v3354 = vpack.c.bf16 %v3094, %v3081
        %v3355 = vpack.c.bf16 %v3095, %v3082
        %v3356 = vpack.c.bf16 %v3096, %v3083
        %v3357 = vpack.c.bf16 %v3097, %v3084
        %v3358 = vpack.c.bf16 %v3098, %v3085
        %v3359 = vpack.c.bf16 %v3099, %v3086
        %v3360 = vpack.c.bf16 %v3100, %v3087
        %v3361 = vpack.c.bf16 %v3101, %v3088
        %v3362 = vpack.c.bf16 %v3102, %v3089
        %v3363 = vpack.c.bf16 %v3103, %v3090
        %v3364 = vpack.c.bf16 %v3104, %v3091
        %v3365 = vpack.c.bf16 %v3118, %v3105
        %v3366 = vpack.c.bf16 %v3119, %v3106
        %v3367 = vpack.c.bf16 %v3120, %v3107
        %v3368 = vpack.c.bf16 %v3121, %v3108
        %v3369 = vpack.c.bf16 %v3122, %v3109
        %v3370 = vpack.c.bf16 %v3123, %v3110
        %v3371 = vpack.c.bf16 %v3124, %v3111
        %v3372 = vpack.c.bf16 %v3125, %v3112
        %v3373 = vpack.c.bf16 %v3126, %v3113
        %v3374 = vpack.c.bf16 %v3127, %v3114
        %v3375 = vpack.c.bf16 %v3128, %v3115
        %v3376 = vpack.c.bf16 %v3129, %v3116
        %v3377 = vpack.c.bf16 %v3130, %v3117
        %v3378 = vpack.c.bf16 %v3144, %v3131
        %v3379 = vpack.c.bf16 %v3145, %v3132
        %v3380 = vpack.c.bf16 %v3146, %v3133
        %v3381 = vpack.c.bf16 %v3147, %v3134
        %v3382 = vpack.c.bf16 %v3148, %v3135
        %v3383 = vpack.c.bf16 %v3149, %v3136
        %v3384 = vpack.c.bf16 %v3150, %v3137
        %v3385 = vpack.c.bf16 %v3151, %v3138
        %v3386 = vpack.c.bf16 %v3152, %v3139
        %v3387 = vpack.c.bf16 %v3153, %v3140
        %v3388 = vpack.c.bf16 %v3154, %v3141
        %v3389 = vpack.c.bf16 %v3155, %v3142
        %v3390 = vpack.c.bf16 %v3156, %v3143
        %v3391 = vpack.c.bf16 %v3170, %v3157
        %v3392 = vpack.c.bf16 %v3171, %v3158
        %v3393 = vpack.c.bf16 %v3172, %v3159
        %v3394 = vpack.c.bf16 %v3173, %v3160
        %v3395 = vpack.c.bf16 %v3174, %v3161
        %v3396 = vpack.c.bf16 %v3175, %v3162
        %v3397 = vpack.c.bf16 %v3176, %v3163
        %v3398 = vpack.c.bf16 %v3177, %v3164
        %v3399 = vpack.c.bf16 %v3178, %v3165
        %v3400 = vpack.c.bf16 %v3179, %v3166
        %v3401 = vpack.c.bf16 %v3180, %v3167
        %v3402 = vpack.c.bf16 %v3181, %v3168
        %v3403 = vpack.c.bf16 %v3182, %v3169
        %v3404 = vpack.c.bf16 %v3196, %v3183
        %v3405 = vpack.c.bf16 %v3197, %v3184
        %v3406 = vpack.c.bf16 %v3198, %v3185
        %v3407 = vpack.c.bf16 %v3199, %v3186
        %v3408 = vpack.c.bf16 %v3200, %v3187
        %v3409 = vpack.c.bf16 %v3201, %v3188
        %v3410 = vpack.c.bf16 %v3202, %v3189
        %v3411 = vpack.c.bf16 %v3203, %v3190
        %v3412 = vpack.c.bf16 %v3204, %v3191
        %v3413 = vpack.c.bf16 %v3205, %v3192
        %v3414 = vpack.c.bf16 %v3206, %v3193
        %v3415 = vpack.c.bf16 %v3207, %v3194
        %v3416 = vpack.c.bf16 %v3208, %v3195
        %v3417 = vld [vmem:[%s2] sm:$0xff]
        %v3418 = vld [vmem:[%s2 + $0x8] sm:$0xff]
        %v3419 = vld [vmem:[%s2 + $0x10] sm:$0xff]
        %v3420 = vld [vmem:[%s2 + $0x18] sm:$0xff]
        %v3421 = vld [vmem:[%s2 + $0x20] sm:$0xff]
        %v3422 = vld [vmem:[%s2 + $0x28] sm:$0xff]
        %v3423 = vld [vmem:[%s2 + $0x30] sm:$0xff]
        %v3424 = vld [vmem:[%s2 + $0x38] sm:$0xff]
        %v3425 = vld [vmem:[%s2 + $0x40] sm:$0xff]
        %v3426 = vld [vmem:[%s2 + $0x48] sm:$0xff]
        %v3427 = vld [vmem:[%s2 + $0x50] sm:$0xff]
        %v3428 = vld [vmem:[%s2 + $0x58] sm:$0xff]
        %v3429 = vld [vmem:[%s2 + $0x60] sm:$0xff]
        %v3430 = vld [vmem:[%s2 + $0x68] sm:$0xff]
        %v3431 = vld [vmem:[%s2 + $0x70] sm:$0xff]
        %v3432 = vld [vmem:[%s2 + $0x78] sm:$0xff]
        %v3433 = vpack.c.bf16 %v3419, %v3417
        %v3434 = vpack.c.bf16 %v3420, %v3418
        %v3435 = vpack.c.bf16 %v3423, %v3421
        %v3436 = vpack.c.bf16 %v3424, %v3422
        %v3437 = vpack.c.bf16 %v3427, %v3425
        %v3438 = vpack.c.bf16 %v3428, %v3426
        %v3439 = vpack.c.bf16 %v3431, %v3429
        %v3440 = vpack.c.bf16 %v3432, %v3430
        %3441 = vmatprep.subr.bf16.mxu0 %v3301
        %3442 = vmatpush1.bf16.msra.mxu0 %v3300
        %3443 = vmatprep.subr.bf16.mxu0 %v3288
        %3444 = vmatpush1.bf16.msra.mxu0 %v3287
        %3445 = vmatprep.subr.bf16.mxu0 %v3275
        %3446 = vmatpush1.bf16.msra.mxu0 %v3274
        %3447 = vmatprep.subr.bf16.mxu0 %v3262
        %3448 = vmatpush1.bf16.msra.mxu0 %v3261
        %3449 = vmatprep.subr.bf16.mxu0 %v3249
        %3450 = vmatpush1.bf16.msra.mxu0 %v3248
        %3451 = vmatprep.subr.bf16.mxu0 %v3236
        %3452 = vmatpush1.bf16.msra.mxu0 %v3235
        %3453 = vmatprep.subr.bf16.mxu0 %v3223
        %3454 = vmatpush1.bf16.msra.mxu0 %v3222
        %3455 = vmatprep.subr.bf16.mxu0 %v3210
        %3456 = vmatpush1.bf16.msra.mxu0 %v3209
        %3457 = vmatprep.subr.bf16.mxu0 %v3405
        %3458 = vmatpush2.bf16.msra.mxu0 %v3404
        %3459 = vmatprep.subr.bf16.mxu0 %v3392
        %3460 = vmatpush2.bf16.msra.mxu0 %v3391
        %3461 = vmatprep.subr.bf16.mxu0 %v3379
        %3462 = vmatpush2.bf16.msra.mxu0 %v3378
        %3463 = vmatprep.subr.bf16.mxu0 %v3366
        %3464 = vmatpush2.bf16.msra.mxu0 %v3365
        %3465 = vmatprep.subr.bf16.mxu0 %v3353
        %3466 = vmatpush2.bf16.msra.mxu0 %v3352
        %3467 = vmatprep.subr.bf16.mxu0 %v3340
        %3468 = vmatpush2.bf16.msra.mxu0 %v3339
        %3469 = vmatprep.subr.bf16.mxu0 %v3327
        %3470 = vmatpush2.bf16.msra.mxu0 %v3326
        %3471 = vmatprep.subr.bf16.mxu0 %v3314
        %3472 = vmatpush2.bf16.msra.mxu0 %v3313
        %3473 = vmatprep.mubr.bf16.mxu0 %v3434
        %3474 = vmatmul.mubr.bf16.gmra.mxu0 %v3433
        %v3475 = vpop.f32.mrf.mxu0
        %v3476 = vadd.f32 0.0, %v3475
        %v3477 = vpop.f32.mrf.mxu0
        %v3478 = vadd.f32 0.0, %v3477
        %v3479 = vpop.f32.mrf.mxu0
        %v3480 = vadd.f32 0.0, %v3479
        %v3481 = vpop.f32.mrf.mxu0
        %v3482 = vadd.f32 0.0, %v3481
        %3483 = vmatprep.mubr.bf16.mxu0 %v3436
        %3484 = vmatmul.mubr.bf16.gmra.mxu0 %v3435
        %v3485 = vpop.f32.mrf.mxu0
        %v3486 = vadd.f32 0.0, %v3485
        %v3487 = vpop.f32.mrf.mxu0
        %v3488 = vadd.f32 0.0, %v3487
        %v3489 = vpop.f32.mrf.mxu0
        %v3490 = vadd.f32 0.0, %v3489
        %v3491 = vpop.f32.mrf.mxu0
        %v3492 = vadd.f32 0.0, %v3491
        %3493 = vmatprep.mubr.bf16.mxu0 %v3438
        %3494 = vmatmul.mubr.bf16.gmra.mxu0 %v3437
        %v3495 = vpop.f32.mrf.mxu0
        %v3496 = vadd.f32 0.0, %v3495
        %v3497 = vpop.f32.mrf.mxu0
        %v3498 = vadd.f32 0.0, %v3497
        %v3499 = vpop.f32.mrf.mxu0
        %v3500 = vadd.f32 0.0, %v3499
        %v3501 = vpop.f32.mrf.mxu0
        %v3502 = vadd.f32 0.0, %v3501
        %3503 = vmatprep.mubr.bf16.mxu0 %v3440
        %3504 = vmatmul.mubr.bf16.gmra.mxu0 %v3439
        %v3505 = vpop.f32.mrf.mxu0
        %v3506 = vadd.f32 0.0, %v3505
        %v3507 = vpop.f32.mrf.mxu0
        %v3508 = vadd.f32 0.0, %v3507
        %v3509 = vpop.f32.mrf.mxu0
        %v3510 = vadd.f32 0.0, %v3509
        %v3511 = vpop.f32.mrf.mxu0
        %v3512 = vadd.f32 0.0, %v3511
        %3513 = vdwg.mxu0
        %3514 = vmatprep.subr.bf16.mxu0 %v3303
        %3515 = vmatpush1.bf16.msra.mxu0 %v3302
        %3516 = vmatprep.subr.bf16.mxu0 %v3290
        %3517 = vmatpush1.bf16.msra.mxu0 %v3289
        %3518 = vmatprep.subr.bf16.mxu0 %v3277
        %3519 = vmatpush1.bf16.msra.mxu0 %v3276
        %3520 = vmatprep.subr.bf16.mxu0 %v3264
        %3521 = vmatpush1.bf16.msra.mxu0 %v3263
        %3522 = vmatprep.subr.bf16.mxu0 %v3251
        %3523 = vmatpush1.bf16.msra.mxu0 %v3250
        %3524 = vmatprep.subr.bf16.mxu0 %v3238
        %3525 = vmatpush1.bf16.msra.mxu0 %v3237
        %3526 = vmatprep.subr.bf16.mxu0 %v3225
        %3527 = vmatpush1.bf16.msra.mxu0 %v3224
        %3528 = vmatprep.subr.bf16.mxu0 %v3212
        %3529 = vmatpush1.bf16.msra.mxu0 %v3211
        %3530 = vmatprep.subr.bf16.mxu0 %v3407
        %3531 = vmatpush2.bf16.msra.mxu0 %v3406
        %3532 = vmatprep.subr.bf16.mxu0 %v3394
        %3533 = vmatpush2.bf16.msra.mxu0 %v3393
        %3534 = vmatprep.subr.bf16.mxu0 %v3381
        %3535 = vmatpush2.bf16.msra.mxu0 %v3380
        %3536 = vmatprep.subr.bf16.mxu0 %v3368
        %3537 = vmatpush2.bf16.msra.mxu0 %v3367
        %3538 = vmatprep.subr.bf16.mxu0 %v3355
        %3539 = vmatpush2.bf16.msra.mxu0 %v3354
        %3540 = vmatprep.subr.bf16.mxu0 %v3342
        %3541 = vmatpush2.bf16.msra.mxu0 %v3341
        %3542 = vmatprep.subr.bf16.mxu0 %v3329
        %3543 = vmatpush2.bf16.msra.mxu0 %v3328
        %3544 = vmatprep.subr.bf16.mxu0 %v3316
        %3545 = vmatpush2.bf16.msra.mxu0 %v3315
        %3546 = vmatprep.mubr.bf16.mxu0 %v3434
        %3547 = vmatmul.mubr.bf16.gmra.mxu0 %v3433
        %v3548 = vpop.f32.mrf.mxu0
        %v3549 = vadd.f32 0.0, %v3548
        %v3550 = vpop.f32.mrf.mxu0
        %v3551 = vadd.f32 0.0, %v3550
        %v3552 = vpop.f32.mrf.mxu0
        %v3553 = vadd.f32 0.0, %v3552
        %v3554 = vpop.f32.mrf.mxu0
        %v3555 = vadd.f32 0.0, %v3554
        %3556 = vmatprep.mubr.bf16.mxu0 %v3436
        %3557 = vmatmul.mubr.bf16.gmra.mxu0 %v3435
        %v3558 = vpop.f32.mrf.mxu0
        %v3559 = vadd.f32 0.0, %v3558
        %v3560 = vpop.f32.mrf.mxu0
        %v3561 = vadd.f32 0.0, %v3560
        %v3562 = vpop.f32.mrf.mxu0
        %v3563 = vadd.f32 0.0, %v3562
        %v3564 = vpop.f32.mrf.mxu0
        %v3565 = vadd.f32 0.0, %v3564
        %3566 = vmatprep.mubr.bf16.mxu0 %v3438
        %3567 = vmatmul.mubr.bf16.gmra.mxu0 %v3437
        %v3568 = vpop.f32.mrf.mxu0
        %v3569 = vadd.f32 0.0, %v3568
        %v3570 = vpop.f32.mrf.mxu0
        %v3571 = vadd.f32 0.0, %v3570
        %v3572 = vpop.f32.mrf.mxu0
        %v3573 = vadd.f32 0.0, %v3572
        %v3574 = vpop.f32.mrf.mxu0
        %v3575 = vadd.f32 0.0, %v3574
        %3576 = vmatprep.mubr.bf16.mxu0 %v3440
        %3577 = vmatmul.mubr.bf16.gmra.mxu0 %v3439
        %v3578 = vpop.f32.mrf.mxu0
        %v3579 = vadd.f32 0.0, %v3578
        %v3580 = vpop.f32.mrf.mxu0
        %v3581 = vadd.f32 0.0, %v3580
        %v3582 = vpop.f32.mrf.mxu0
        %v3583 = vadd.f32 0.0, %v3582
        %v3584 = vpop.f32.mrf.mxu0
        %v3585 = vadd.f32 0.0, %v3584
        %3586 = vdwg.mxu0
        %3587 = vmatprep.subr.bf16.mxu0 %v3305
        %3588 = vmatpush1.bf16.msra.mxu0 %v3304
        %3589 = vmatprep.subr.bf16.mxu0 %v3292
        %3590 = vmatpush1.bf16.msra.mxu0 %v3291
        %3591 = vmatprep.subr.bf16.mxu0 %v3279
        %3592 = vmatpush1.bf16.msra.mxu0 %v3278
        %3593 = vmatprep.subr.bf16.mxu0 %v3266
        %3594 = vmatpush1.bf16.msra.mxu0 %v3265
        %3595 = vmatprep.subr.bf16.mxu0 %v3253
        %3596 = vmatpush1.bf16.msra.mxu0 %v3252
        %3597 = vmatprep.subr.bf16.mxu0 %v3240
        %3598 = vmatpush1.bf16.msra.mxu0 %v3239
        %3599 = vmatprep.subr.bf16.mxu0 %v3227
        %3600 = vmatpush1.bf16.msra.mxu0 %v3226
        %3601 = vmatprep.subr.bf16.mxu0 %v3214
        %3602 = vmatpush1.bf16.msra.mxu0 %v3213
        %3603 = vmatprep.subr.bf16.mxu0 %v3409
        %3604 = vmatpush2.bf16.msra.mxu0 %v3408
        %3605 = vmatprep.subr.bf16.mxu0 %v3396
        %3606 = vmatpush2.bf16.msra.mxu0 %v3395
        %3607 = vmatprep.subr.bf16.mxu0 %v3383
        %3608 = vmatpush2.bf16.msra.mxu0 %v3382
        %3609 = vmatprep.subr.bf16.mxu0 %v3370
        %3610 = vmatpush2.bf16.msra.mxu0 %v3369
        %3611 = vmatprep.subr.bf16.mxu0 %v3357
        %3612 = vmatpush2.bf16.msra.mxu0 %v3356
        %3613 = vmatprep.subr.bf16.mxu0 %v3344
        %3614 = vmatpush2.bf16.msra.mxu0 %v3343
        %3615 = vmatprep.subr.bf16.mxu0 %v3331
        %3616 = vmatpush2.bf16.msra.mxu0 %v3330
        %3617 = vmatprep.subr.bf16.mxu0 %v3318
        %3618 = vmatpush2.bf16.msra.mxu0 %v3317
        %3619 = vmatprep.mubr.bf16.mxu0 %v3434
        %3620 = vmatmul.mubr.bf16.gmra.mxu0 %v3433
        %v3621 = vpop.f32.mrf.mxu0
        %v3622 = vadd.f32 0.0, %v3621
        %v3623 = vpop.f32.mrf.mxu0
        %v3624 = vadd.f32 0.0, %v3623
        %v3625 = vpop.f32.mrf.mxu0
        %v3626 = vadd.f32 0.0, %v3625
        %v3627 = vpop.f32.mrf.mxu0
        %v3628 = vadd.f32 0.0, %v3627
        %3629 = vmatprep.mubr.bf16.mxu0 %v3436
        %3630 = vmatmul.mubr.bf16.gmra.mxu0 %v3435
        %v3631 = vpop.f32.mrf.mxu0
        %v3632 = vadd.f32 0.0, %v3631
        %v3633 = vpop.f32.mrf.mxu0
        %v3634 = vadd.f32 0.0, %v3633
        %v3635 = vpop.f32.mrf.mxu0
        %v3636 = vadd.f32 0.0, %v3635
        %v3637 = vpop.f32.mrf.mxu0
        %v3638 = vadd.f32 0.0, %v3637
        %3639 = vmatprep.mubr.bf16.mxu0 %v3438
        %3640 = vmatmul.mubr.bf16.gmra.mxu0 %v3437
        %v3641 = vpop.f32.mrf.mxu0
        %v3642 = vadd.f32 0.0, %v3641
        %v3643 = vpop.f32.mrf.mxu0
        %v3644 = vadd.f32 0.0, %v3643
        %v3645 = vpop.f32.mrf.mxu0
        %v3646 = vadd.f32 0.0, %v3645
        %v3647 = vpop.f32.mrf.mxu0
        %v3648 = vadd.f32 0.0, %v3647
        %3649 = vmatprep.mubr.bf16.mxu0 %v3440
        %3650 = vmatmul.mubr.bf16.gmra.mxu0 %v3439
        %v3651 = vpop.f32.mrf.mxu0
        %v3652 = vadd.f32 0.0, %v3651
        %v3653 = vpop.f32.mrf.mxu0
        %v3654 = vadd.f32 0.0, %v3653
        %v3655 = vpop.f32.mrf.mxu0
        %v3656 = vadd.f32 0.0, %v3655
        %v3657 = vpop.f32.mrf.mxu0
        %v3658 = vadd.f32 0.0, %v3657
        %3659 = vdwg.mxu0
        %3660 = vmatprep.subr.bf16.mxu0 %v3307
        %3661 = vmatpush1.bf16.msra.mxu0 %v3306
        %3662 = vmatprep.subr.bf16.mxu0 %v3294
        %3663 = vmatpush1.bf16.msra.mxu0 %v3293
        %3664 = vmatprep.subr.bf16.mxu0 %v3281
        %3665 = vmatpush1.bf16.msra.mxu0 %v3280
        %3666 = vmatprep.subr.bf16.mxu0 %v3268
        %3667 = vmatpush1.bf16.msra.mxu0 %v3267
        %3668 = vmatprep.subr.bf16.mxu0 %v3255
        %3669 = vmatpush1.bf16.msra.mxu0 %v3254
        %3670 = vmatprep.subr.bf16.mxu0 %v3242
        %3671 = vmatpush1.bf16.msra.mxu0 %v3241
        %3672 = vmatprep.subr.bf16.mxu0 %v3229
        %3673 = vmatpush1.bf16.msra.mxu0 %v3228
        %3674 = vmatprep.subr.bf16.mxu0 %v3216
        %3675 = vmatpush1.bf16.msra.mxu0 %v3215
        %3676 = vmatprep.subr.bf16.mxu0 %v3411
        %3677 = vmatpush2.bf16.msra.mxu0 %v3410
        %3678 = vmatprep.subr.bf16.mxu0 %v3398
        %3679 = vmatpush2.bf16.msra.mxu0 %v3397
        %3680 = vmatprep.subr.bf16.mxu0 %v3385
        %3681 = vmatpush2.bf16.msra.mxu0 %v3384
        %3682 = vmatprep.subr.bf16.mxu0 %v3372
        %3683 = vmatpush2.bf16.msra.mxu0 %v3371
        %3684 = vmatprep.subr.bf16.mxu0 %v3359
        %3685 = vmatpush2.bf16.msra.mxu0 %v3358
        %3686 = vmatprep.subr.bf16.mxu0 %v3346
        %3687 = vmatpush2.bf16.msra.mxu0 %v3345
        %3688 = vmatprep.subr.bf16.mxu0 %v3333
        %3689 = vmatpush2.bf16.msra.mxu0 %v3332
        %3690 = vmatprep.subr.bf16.mxu0 %v3320
        %3691 = vmatpush2.bf16.msra.mxu0 %v3319
        %3692 = vmatprep.mubr.bf16.mxu0 %v3434
        %3693 = vmatmul.mubr.bf16.gmra.mxu0 %v3433
        %v3694 = vpop.f32.mrf.mxu0
        %v3695 = vadd.f32 0.0, %v3694
        %v3696 = vpop.f32.mrf.mxu0
        %v3697 = vadd.f32 0.0, %v3696
        %v3698 = vpop.f32.mrf.mxu0
        %v3699 = vadd.f32 0.0, %v3698
        %v3700 = vpop.f32.mrf.mxu0
        %v3701 = vadd.f32 0.0, %v3700
        %3702 = vmatprep.mubr.bf16.mxu0 %v3436
        %3703 = vmatmul.mubr.bf16.gmra.mxu0 %v3435
        %v3704 = vpop.f32.mrf.mxu0
        %v3705 = vadd.f32 0.0, %v3704
        %v3706 = vpop.f32.mrf.mxu0
        %v3707 = vadd.f32 0.0, %v3706
        %v3708 = vpop.f32.mrf.mxu0
        %v3709 = vadd.f32 0.0, %v3708
        %v3710 = vpop.f32.mrf.mxu0
        %v3711 = vadd.f32 0.0, %v3710
        %3712 = vmatprep.mubr.bf16.mxu0 %v3438
        %3713 = vmatmul.mubr.bf16.gmra.mxu0 %v3437
        %v3714 = vpop.f32.mrf.mxu0
        %v3715 = vadd.f32 0.0, %v3714
        %v3716 = vpop.f32.mrf.mxu0
        %v3717 = vadd.f32 0.0, %v3716
        %v3718 = vpop.f32.mrf.mxu0
        %v3719 = vadd.f32 0.0, %v3718
        %v3720 = vpop.f32.mrf.mxu0
        %v3721 = vadd.f32 0.0, %v3720
        %3722 = vmatprep.mubr.bf16.mxu0 %v3440
        %3723 = vmatmul.mubr.bf16.gmra.mxu0 %v3439
        %v3724 = vpop.f32.mrf.mxu0
        %v3725 = vadd.f32 0.0, %v3724
        %v3726 = vpop.f32.mrf.mxu0
        %v3727 = vadd.f32 0.0, %v3726
        %v3728 = vpop.f32.mrf.mxu0
        %v3729 = vadd.f32 0.0, %v3728
        %v3730 = vpop.f32.mrf.mxu0
        %v3731 = vadd.f32 0.0, %v3730
        %3732 = vdwg.mxu0
        %3733 = vmatprep.subr.bf16.mxu0 %v3309
        %3734 = vmatpush1.bf16.msra.mxu0 %v3308
        %3735 = vmatprep.subr.bf16.mxu0 %v3296
        %3736 = vmatpush1.bf16.msra.mxu0 %v3295
        %3737 = vmatprep.subr.bf16.mxu0 %v3283
        %3738 = vmatpush1.bf16.msra.mxu0 %v3282
        %3739 = vmatprep.subr.bf16.mxu0 %v3270
        %3740 = vmatpush1.bf16.msra.mxu0 %v3269
        %3741 = vmatprep.subr.bf16.mxu0 %v3257
        %3742 = vmatpush1.bf16.msra.mxu0 %v3256
        %3743 = vmatprep.subr.bf16.mxu0 %v3244
        %3744 = vmatpush1.bf16.msra.mxu0 %v3243
        %3745 = vmatprep.subr.bf16.mxu0 %v3231
        %3746 = vmatpush1.bf16.msra.mxu0 %v3230
        %3747 = vmatprep.subr.bf16.mxu0 %v3218
        %3748 = vmatpush1.bf16.msra.mxu0 %v3217
        %3749 = vmatprep.subr.bf16.mxu0 %v3413
        %3750 = vmatpush2.bf16.msra.mxu0 %v3412
        %3751 = vmatprep.subr.bf16.mxu0 %v3400
        %3752 = vmatpush2.bf16.msra.mxu0 %v3399
        %3753 = vmatprep.subr.bf16.mxu0 %v3387
        %3754 = vmatpush2.bf16.msra.mxu0 %v3386
        %3755 = vmatprep.subr.bf16.mxu0 %v3374
        %3756 = vmatpush2.bf16.msra.mxu0 %v3373
        %3757 = vmatprep.subr.bf16.mxu0 %v3361
        %3758 = vmatpush2.bf16.msra.mxu0 %v3360
        %3759 = vmatprep.subr.bf16.mxu0 %v3348
        %3760 = vmatpush2.bf16.msra.mxu0 %v3347
        %3761 = vmatprep.subr.bf16.mxu0 %v3335
        %3762 = vmatpush2.bf16.msra.mxu0 %v3334
        %3763 = vmatprep.subr.bf16.mxu0 %v3322
        %3764 = vmatpush2.bf16.msra.mxu0 %v3321
        %3765 = vmatprep.mubr.bf16.mxu0 %v3434
        %3766 = vmatmul.mubr.bf16.gmra.mxu0 %v3433
        %v3767 = vpop.f32.mrf.mxu0
        %v3768 = vadd.f32 0.0, %v3767
        %v3769 = vpop.f32.mrf.mxu0
        %v3770 = vadd.f32 0.0, %v3769
        %v3771 = vpop.f32.mrf.mxu0
        %v3772 = vadd.f32 0.0, %v3771
        %v3773 = vpop.f32.mrf.mxu0
        %v3774 = vadd.f32 0.0, %v3773
        %3775 = vmatprep.mubr.bf16.mxu0 %v3436
        %3776 = vmatmul.mubr.bf16.gmra.mxu0 %v3435
        %v3777 = vpop.f32.mrf.mxu0
        %v3778 = vadd.f32 0.0, %v3777
        %v3779 = vpop.f32.mrf.mxu0
        %v3780 = vadd.f32 0.0, %v3779
        %v3781 = vpop.f32.mrf.mxu0
        %v3782 = vadd.f32 0.0, %v3781
        %v3783 = vpop.f32.mrf.mxu0
        %v3784 = vadd.f32 0.0, %v3783
        %3785 = vmatprep.mubr.bf16.mxu0 %v3438
        %3786 = vmatmul.mubr.bf16.gmra.mxu0 %v3437
        %v3787 = vpop.f32.mrf.mxu0
        %v3788 = vadd.f32 0.0, %v3787
        %v3789 = vpop.f32.mrf.mxu0
        %v3790 = vadd.f32 0.0, %v3789
        %v3791 = vpop.f32.mrf.mxu0
        %v3792 = vadd.f32 0.0, %v3791
        %v3793 = vpop.f32.mrf.mxu0
        %v3794 = vadd.f32 0.0, %v3793
        %3795 = vmatprep.mubr.bf16.mxu0 %v3440
        %3796 = vmatmul.mubr.bf16.gmra.mxu0 %v3439
        %v3797 = vpop.f32.mrf.mxu0
        %v3798 = vadd.f32 0.0, %v3797
        %v3799 = vpop.f32.mrf.mxu0
        %v3800 = vadd.f32 0.0, %v3799
        %v3801 = vpop.f32.mrf.mxu0
        %v3802 = vadd.f32 0.0, %v3801
        %v3803 = vpop.f32.mrf.mxu0
        %v3804 = vadd.f32 0.0, %v3803
        %3805 = vdwg.mxu0
        %3806 = vmatprep.subr.bf16.mxu0 %v3311
        %3807 = vmatpush1.bf16.msra.mxu0 %v3310
        %3808 = vmatprep.subr.bf16.mxu0 %v3298
        %3809 = vmatpush1.bf16.msra.mxu0 %v3297
        %3810 = vmatprep.subr.bf16.mxu0 %v3285
        %3811 = vmatpush1.bf16.msra.mxu0 %v3284
        %3812 = vmatprep.subr.bf16.mxu0 %v3272
        %3813 = vmatpush1.bf16.msra.mxu0 %v3271
        %3814 = vmatprep.subr.bf16.mxu0 %v3259
        %3815 = vmatpush1.bf16.msra.mxu0 %v3258
        %3816 = vmatprep.subr.bf16.mxu0 %v3246
        %3817 = vmatpush1.bf16.msra.mxu0 %v3245
        %3818 = vmatprep.subr.bf16.mxu0 %v3233
        %3819 = vmatpush1.bf16.msra.mxu0 %v3232
        %3820 = vmatprep.subr.bf16.mxu0 %v3220
        %3821 = vmatpush1.bf16.msra.mxu0 %v3219
        %3822 = vmatprep.subr.bf16.mxu0 %v3415
        %3823 = vmatpush2.bf16.msra.mxu0 %v3414
        %3824 = vmatprep.subr.bf16.mxu0 %v3402
        %3825 = vmatpush2.bf16.msra.mxu0 %v3401
        %3826 = vmatprep.subr.bf16.mxu0 %v3389
        %3827 = vmatpush2.bf16.msra.mxu0 %v3388
        %3828 = vmatprep.subr.bf16.mxu0 %v3376
        %3829 = vmatpush2.bf16.msra.mxu0 %v3375
        %3830 = vmatprep.subr.bf16.mxu0 %v3363
        %3831 = vmatpush2.bf16.msra.mxu0 %v3362
        %3832 = vmatprep.subr.bf16.mxu0 %v3350
        %3833 = vmatpush2.bf16.msra.mxu0 %v3349
        %3834 = vmatprep.subr.bf16.mxu0 %v3337
        %3835 = vmatpush2.bf16.msra.mxu0 %v3336
        %3836 = vmatprep.subr.bf16.mxu0 %v3324
        %3837 = vmatpush2.bf16.msra.mxu0 %v3323
        %3838 = vmatprep.mubr.bf16.mxu0 %v3434
        %3839 = vmatmul.mubr.bf16.gmra.mxu0 %v3433
        %v3840 = vpop.f32.mrf.mxu0
        %v3841 = vadd.f32 0.0, %v3840
        %v3842 = vpop.f32.mrf.mxu0
        %v3843 = vadd.f32 0.0, %v3842
        %v3844 = vpop.f32.mrf.mxu0
        %v3845 = vadd.f32 0.0, %v3844
        %v3846 = vpop.f32.mrf.mxu0
        %v3847 = vadd.f32 0.0, %v3846
        %3848 = vmatprep.mubr.bf16.mxu0 %v3436
        %3849 = vmatmul.mubr.bf16.gmra.mxu0 %v3435
        %v3850 = vpop.f32.mrf.mxu0
        %v3851 = vadd.f32 0.0, %v3850
        %v3852 = vpop.f32.mrf.mxu0
        %v3853 = vadd.f32 0.0, %v3852
        %v3854 = vpop.f32.mrf.mxu0
        %v3855 = vadd.f32 0.0, %v3854
        %v3856 = vpop.f32.mrf.mxu0
        %v3857 = vadd.f32 0.0, %v3856
        %3858 = vmatprep.mubr.bf16.mxu0 %v3438
        %3859 = vmatmul.mubr.bf16.gmra.mxu0 %v3437
        %v3860 = vpop.f32.mrf.mxu0
        %v3861 = vadd.f32 0.0, %v3860
        %v3862 = vpop.f32.mrf.mxu0
        %v3863 = vadd.f32 0.0, %v3862
        %v3864 = vpop.f32.mrf.mxu0
        %v3865 = vadd.f32 0.0, %v3864
        %v3866 = vpop.f32.mrf.mxu0
        %v3867 = vadd.f32 0.0, %v3866
        %3868 = vmatprep.mubr.bf16.mxu0 %v3440
        %3869 = vmatmul.mubr.bf16.gmra.mxu0 %v3439
        %v3870 = vpop.f32.mrf.mxu0
        %v3871 = vadd.f32 0.0, %v3870
        %v3872 = vpop.f32.mrf.mxu0
        %v3873 = vadd.f32 0.0, %v3872
        %v3874 = vpop.f32.mrf.mxu0
        %v3875 = vadd.f32 0.0, %v3874
        %v3876 = vpop.f32.mrf.mxu0
        %v3877 = vadd.f32 0.0, %v3876
        %3878 = vdwg.mxu0
        %3879 = vmatprep.subr.bf16.mxu0 0
        %3880 = vmatpush1.bf16.msra.mxu0 %v3312
        %3881 = vmatprep.subr.bf16.mxu0 0
        %3882 = vmatpush1.bf16.msra.mxu0 %v3299
        %3883 = vmatprep.subr.bf16.mxu0 0
        %3884 = vmatpush1.bf16.msra.mxu0 %v3286
        %3885 = vmatprep.subr.bf16.mxu0 0
        %3886 = vmatpush1.bf16.msra.mxu0 %v3273
        %3887 = vmatprep.subr.bf16.mxu0 0
        %3888 = vmatpush1.bf16.msra.mxu0 %v3260
        %3889 = vmatprep.subr.bf16.mxu0 0
        %3890 = vmatpush1.bf16.msra.mxu0 %v3247
        %3891 = vmatprep.subr.bf16.mxu0 0
        %3892 = vmatpush1.bf16.msra.mxu0 %v3234
        %3893 = vmatprep.subr.bf16.mxu0 0
        %3894 = vmatpush1.bf16.msra.mxu0 %v3221
        %3895 = vmatprep.subr.bf16.mxu0 0
        %3896 = vmatpush2.bf16.msra.mxu0 %v3416
        %3897 = vmatprep.subr.bf16.mxu0 0
        %3898 = vmatpush2.bf16.msra.mxu0 %v3403
        %3899 = vmatprep.subr.bf16.mxu0 0
        %3900 = vmatpush2.bf16.msra.mxu0 %v3390
        %3901 = vmatprep.subr.bf16.mxu0 0
        %3902 = vmatpush2.bf16.msra.mxu0 %v3377
        %3903 = vmatprep.subr.bf16.mxu0 0
        %3904 = vmatpush2.bf16.msra.mxu0 %v3364
        %3905 = vmatprep.subr.bf16.mxu0 0
        %3906 = vmatpush2.bf16.msra.mxu0 %v3351
        %3907 = vmatprep.subr.bf16.mxu0 0
        %3908 = vmatpush2.bf16.msra.mxu0 %v3338
        %3909 = vmatprep.subr.bf16.mxu0 0
        %3910 = vmatpush2.bf16.msra.mxu0 %v3325
        %3911 = vmatprep.mubr.bf16.mxu0 %v3434
        %3912 = vmatmul.mubr.bf16.gmra.mxu0 %v3433
        %v3913 = vpop.f32.mrf.mxu0
        %v3914 = vadd.f32 0.0, %v3913
        %v3915 = vpop.f32.mrf.mxu0
        %v3916 = vpop.f32.mrf.mxu0
        %v3917 = vadd.f32 0.0, %v3916
        %v3918 = vpop.f32.mrf.mxu0
        %3919 = vmatprep.mubr.bf16.mxu0 %v3436
        %3920 = vmatmul.mubr.bf16.gmra.mxu0 %v3435
        %v3921 = vpop.f32.mrf.mxu0
        %v3922 = vadd.f32 0.0, %v3921
        %v3923 = vpop.f32.mrf.mxu0
        %v3924 = vpop.f32.mrf.mxu0
        %v3925 = vadd.f32 0.0, %v3924
        %v3926 = vpop.f32.mrf.mxu0
        %3927 = vmatprep.mubr.bf16.mxu0 %v3438
        %3928 = vmatmul.mubr.bf16.gmra.mxu0 %v3437
        %v3929 = vpop.f32.mrf.mxu0
        %v3930 = vadd.f32 0.0, %v3929
        %v3931 = vpop.f32.mrf.mxu0
        %v3932 = vpop.f32.mrf.mxu0
        %v3933 = vadd.f32 0.0, %v3932
        %v3934 = vpop.f32.mrf.mxu0
        %3935 = vmatprep.mubr.bf16.mxu0 %v3440
        %3936 = vmatmul.mubr.bf16.gmra.mxu0 %v3439
        %v3937 = vpop.f32.mrf.mxu0
        %v3938 = vadd.f32 0.0, %v3937
        %v3939 = vpop.f32.mrf.mxu0
        %v3940 = vpop.f32.mrf.mxu0
        %v3941 = vadd.f32 0.0, %v3940
        %v3942 = vpop.f32.mrf.mxu0
        %3943 = vdwg.mxu0
        %3944 = vst [vmem:[%s1528] sm:$0xff] %v3476
        %3945 = vst [vmem:[%s1528 + $0x8] sm:$0xff] %v3478
        %3946 = vst [vmem:[%s1528 + $0x10] sm:$0xff] %v3549
        %3947 = vst [vmem:[%s1528 + $0x18] sm:$0xff] %v3551
        %3948 = vst [vmem:[%s1528 + $0x20] sm:$0xff] %v3622
        %3949 = vst [vmem:[%s1528 + $0x28] sm:$0xff] %v3624
        %3950 = vst [vmem:[%s1528 + $0x30] sm:$0xff] %v3695
        %3951 = vst [vmem:[%s1528 + $0x38] sm:$0xff] %v3697
        %3952 = vst [vmem:[%s1528 + $0x40] sm:$0xff] %v3768
        %3953 = vst [vmem:[%s1528 + $0x48] sm:$0xff] %v3770
        %3954 = vst [vmem:[%s1528 + $0x50] sm:$0xff] %v3841
        %3955 = vst [vmem:[%s1528 + $0x58] sm:$0xff] %v3843
        %3956 = vst [vmem:[%s1528 + $0x60] sm:$0xff] %v3914
        %3957 = vst [vmem:[%s1528 + $0x68] sm:$0xff] %v3480
        %3958 = vst [vmem:[%s1528 + $0x70] sm:$0xff] %v3482
        %3959 = vst [vmem:[%s1528 + $0x78] sm:$0xff] %v3553
        %3960 = vst [vmem:[%s1528 + $0x80] sm:$0xff] %v3555
        %3961 = vst [vmem:[%s1528 + $0x88] sm:$0xff] %v3626
        %3962 = vst [vmem:[%s1528 + $0x90] sm:$0xff] %v3628
        %3963 = vst [vmem:[%s1528 + $0x98] sm:$0xff] %v3699
        %3964 = vst [vmem:[%s1528 + $0xa0] sm:$0xff] %v3701
        %3965 = vst [vmem:[%s1528 + $0xa8] sm:$0xff] %v3772
        %3966 = vst [vmem:[%s1528 + $0xb0] sm:$0xff] %v3774
        %3967 = vst [vmem:[%s1528 + $0xb8] sm:$0xff] %v3845
        %3968 = vst [vmem:[%s1528 + $0xc0] sm:$0xff] %v3847
        %3969 = vst [vmem:[%s1528 + $0xc8] sm:$0xff] %v3917
        %3970 = vst [vmem:[%s1528 + $0xd0] sm:$0xff] %v3486
        %3971 = vst [vmem:[%s1528 + $0xd8] sm:$0xff] %v3488
        %3972 = vst [vmem:[%s1528 + $0xe0] sm:$0xff] %v3559
        %3973 = vst [vmem:[%s1528 + $0xe8] sm:$0xff] %v3561
        %3974 = vst [vmem:[%s1528 + $0xf0] sm:$0xff] %v3632
        %3975 = vst [vmem:[%s1528 + $0xf8] sm:$0xff] %v3634
        %3976 = vst [vmem:[%s1528 + $0x100] sm:$0xff] %v3705
        %3977 = vst [vmem:[%s1528 + $0x108] sm:$0xff] %v3707
        %3978 = vst [vmem:[%s1528 + $0x110] sm:$0xff] %v3778
        %3979 = vst [vmem:[%s1528 + $0x118] sm:$0xff] %v3780
        %3980 = vst [vmem:[%s1528 + $0x120] sm:$0xff] %v3851
        %3981 = vst [vmem:[%s1528 + $0x128] sm:$0xff] %v3853
        %3982 = vst [vmem:[%s1528 + $0x130] sm:$0xff] %v3922
        %3983 = vst [vmem:[%s1528 + $0x138] sm:$0xff] %v3490
        %3984 = vst [vmem:[%s1528 + $0x140] sm:$0xff] %v3492
        %3985 = vst [vmem:[%s1528 + $0x148] sm:$0xff] %v3563
        %3986 = vst [vmem:[%s1528 + $0x150] sm:$0xff] %v3565
        %3987 = vst [vmem:[%s1528 + $0x158] sm:$0xff] %v3636
        %3988 = vst [vmem:[%s1528 + $0x160] sm:$0xff] %v3638
        %3989 = vst [vmem:[%s1528 + $0x168] sm:$0xff] %v3709
        %3990 = vst [vmem:[%s1528 + $0x170] sm:$0xff] %v3711
        %3991 = vst [vmem:[%s1528 + $0x178] sm:$0xff] %v3782
        %3992 = vst [vmem:[%s1528 + $0x180] sm:$0xff] %v3784
        %3993 = vst [vmem:[%s1528 + $0x188] sm:$0xff] %v3855
        %3994 = vst [vmem:[%s1528 + $0x190] sm:$0xff] %v3857
        %3995 = vst [vmem:[%s1528 + $0x198] sm:$0xff] %v3925
        %3996 = vst [vmem:[%s1528 + $0x1a0] sm:$0xff] %v3496
        %3997 = vst [vmem:[%s1528 + $0x1a8] sm:$0xff] %v3498
        %3998 = vst [vmem:[%s1528 + $0x1b0] sm:$0xff] %v3569
        %3999 = vst [vmem:[%s1528 + $0x1b8] sm:$0xff] %v3571
        %4000 = vst [vmem:[%s1528 + $0x1c0] sm:$0xff] %v3642
        %4001 = vst [vmem:[%s1528 + $0x1c8] sm:$0xff] %v3644
        %4002 = vst [vmem:[%s1528 + $0x1d0] sm:$0xff] %v3715
        %4003 = vst [vmem:[%s1528 + $0x1d8] sm:$0xff] %v3717
        %4004 = vst [vmem:[%s1528 + $0x1e0] sm:$0xff] %v3788
        %4005 = vst [vmem:[%s1528 + $0x1e8] sm:$0xff] %v3790
        %4006 = vst [vmem:[%s1528 + $0x1f0] sm:$0xff] %v3861
        %4007 = vst [vmem:[%s1528 + $0x1f8] sm:$0xff] %v3863
        %4008 = vst [vmem:[%s1528 + $0x200] sm:$0xff] %v3930
        %4009 = vst [vmem:[%s1528 + $0x208] sm:$0xff] %v3500
        %4010 = vst [vmem:[%s1528 + $0x210] sm:$0xff] %v3502
        %4011 = vst [vmem:[%s1528 + $0x218] sm:$0xff] %v3573
        %4012 = vst [vmem:[%s1528 + $0x220] sm:$0xff] %v3575
        %4013 = vst [vmem:[%s1528 + $0x228] sm:$0xff] %v3646
        %4014 = vst [vmem:[%s1528 + $0x230] sm:$0xff] %v3648
        %4015 = vst [vmem:[%s1528 + $0x238] sm:$0xff] %v3719
        %4016 = vst [vmem:[%s1528 + $0x240] sm:$0xff] %v3721
        %4017 = vst [vmem:[%s1528 + $0x248] sm:$0xff] %v3792
        %4018 = vst [vmem:[%s1528 + $0x250] sm:$0xff] %v3794
        %4019 = vst [vmem:[%s1528 + $0x258] sm:$0xff] %v3865
        %4020 = vst [vmem:[%s1528 + $0x260] sm:$0xff] %v3867
        %4021 = vst [vmem:[%s1528 + $0x268] sm:$0xff] %v3933
        %4022 = vst [vmem:[%s1528 + $0x270] sm:$0xff] %v3506
        %4023 = vst [vmem:[%s1528 + $0x278] sm:$0xff] %v3508
        %4024 = vst [vmem:[%s1528 + $0x280] sm:$0xff] %v3579
        %4025 = vst [vmem:[%s1528 + $0x288] sm:$0xff] %v3581
        %4026 = vst [vmem:[%s1528 + $0x290] sm:$0xff] %v3652
        %4027 = vst [vmem:[%s1528 + $0x298] sm:$0xff] %v3654
        %4028 = vst [vmem:[%s1528 + $0x2a0] sm:$0xff] %v3725
        %4029 = vst [vmem:[%s1528 + $0x2a8] sm:$0xff] %v3727
        %4030 = vst [vmem:[%s1528 + $0x2b0] sm:$0xff] %v3798
        %4031 = vst [vmem:[%s1528 + $0x2b8] sm:$0xff] %v3800
        %4032 = vst [vmem:[%s1528 + $0x2c0] sm:$0xff] %v3871
        %4033 = vst [vmem:[%s1528 + $0x2c8] sm:$0xff] %v3873
        %4034 = vst [vmem:[%s1528 + $0x2d0] sm:$0xff] %v3938
        %4035 = vst [vmem:[%s1528 + $0x2d8] sm:$0xff] %v3510
        %4036 = vst [vmem:[%s1528 + $0x2e0] sm:$0xff] %v3512
        %4037 = vst [vmem:[%s1528 + $0x2e8] sm:$0xff] %v3583
        %4038 = vst [vmem:[%s1528 + $0x2f0] sm:$0xff] %v3585
        %4039 = vst [vmem:[%s1528 + $0x2f8] sm:$0xff] %v3656
        %4040 = vst [vmem:[%s1528 + $0x300] sm:$0xff] %v3658
        %4041 = vst [vmem:[%s1528 + $0x308] sm:$0xff] %v3729
        %4042 = vst [vmem:[%s1528 + $0x310] sm:$0xff] %v3731
        %4043 = vst [vmem:[%s1528 + $0x318] sm:$0xff] %v3802
        %4044 = vst [vmem:[%s1528 + $0x320] sm:$0xff] %v3804
        %4045 = vst [vmem:[%s1528 + $0x328] sm:$0xff] %v3875
        %4046 = vst [vmem:[%s1528 + $0x330] sm:$0xff] %v3877
        %4047 = vst [vmem:[%s1528 + $0x338] sm:$0xff] %v3941
        %s4048 = sand.u32 %s116, 1
        %s4049 = scalar_lea.sflag [#allocation5], %s4048
        %s4050 = sand.u32 %s116, 1
        %s4051 = smul.addr %s4050, 832
        %s4052 = scalar_lea.vmem [#allocation4], %s4051
        // Predicated region
        $region165: #{tpu_custom_call.1} parent=155 // pred_check
          %p4053 = pneg %p126
        $region166: #{tpu_custom_call.1} parent=155 // pred_check_branch
          %4055 = sbr.rel (%p4053) target = $region168
        $region167: #{tpu_custom_call.1} parent=155 // pred_region
          %s4056 = smul.u32 13, %s22
          %s4057 = ssub.s32 25, %s4056
          %p4058 = scmp.lt.s32.totalorder %s4057, 13
          %s4059 = scalar_select %p4058, %s4057, 13
          %s4060 = smul.u32 1024, %s4059
          %s4062 = ssub.s32 13312, %s4060
          %4063 = vsyncadd %s4049, %s4062
          %p4064 = scmp.ne.s32.totalorder 0, %s4060
          %s4065 = smul.addr %s21, 200
          %s4066 = sadd.s32 %s4056, %s4065
          %s4067 = smul.addr %s4066, 128
          %s4068 = scalar_lea.hbm %s3, %s4067
          %s4069 = smul.u32 %s4059, 8
          %s4070 = smul.u32 %s4069, 8
          %s4071 = sshll.u32 %s4052, 4
          %s4072 = int_to_ptr.vmem [resolvable:$true] %s4071
          %s4073 = sshll.u32 %s4070, 4
          %4077 = dma.vmem_to_hbm [thread:$0]  (%p4064), %s4072, %s4073, %s4068, %s4049, 1664, 3200, %s4069
        $region168: #{tpu_custom_call.1} parent=155 // pred_fallthru
          _
      $region156: #{tpu_custom_call.1} parent=5 // pred_fallthru
        _
      %p4078 = scmp.le.s32.totalorder 2, %s12
      // Predicated region
      $region169: #{tpu_custom_call.1} parent=5 // pred_check
        %p4079 = pneg %p4078
      $region170: #{tpu_custom_call.1} parent=5 // pred_check_branch
        %4081 = sbr.rel (%p4079) target = $region172
      $region171: #{tpu_custom_call.1} parent=5 // pred_region
        %s4082 = ssub.s32 %s12, 2
        // Predicated region
        $region173: #{tpu_custom_call.1} parent=171 // pred_check
          %p4083 = pneg %p132
        $region174: #{tpu_custom_call.1} parent=171 // pred_check_branch
          %4085 = sbr.rel (%p4083) target = $region176
        $region175: #{tpu_custom_call.1} parent=171 // pred_region
          %s4086 = sand.u32 %s117, 1
          %s4087 = scalar_lea.sflag [#allocation5], %s4086
          %s4088 = sand.u32 %s117, 1
          %s4089 = smul.addr %s4088, 832
          %s4090 = scalar_lea.vmem [#allocation4], %s4089
          %4091 = dma.done %s4087, 13312
        $region176: #{tpu_custom_call.1} parent=171 // pred_fallthru
          _
      $region172: #{tpu_custom_call.1} parent=5 // pred_fallthru
        _
    $region6: #{tpu_custom_call.1} parent=1 // loop_footer
      %s16 = sadd.s32 1, %s12
    $region7: #{tpu_custom_call.1} parent=1 // loop_footer_branch
      %11 = sbr.rel target = $region3
    $region8: #{tpu_custom_call.1} parent=1 // loop_exit
      _
    %4092 = vsyncpa [#allocation5], 1
    %s4093 = scalar_lea.sflag [#allocation5], 1
    %4094 = vsyncpa %s4093, 1

</llo_original>
